<compile_context>
chip_gen: v5e
topology: v5e:2x2
jax: 0.10.0
libtpu: 0.0.40
codegen_flags: <defaults>
</compile_context>

<pallas_src>
import math

import jax
import jax.numpy as jnp
from jax.experimental import pallas as pl
from jax.experimental.pallas import tpu as pltpu


# -----------------------------------------------------------------------------
# Model hyper-parameters (small synthetic "ViT" consistent with the module)
# -----------------------------------------------------------------------------
B = 2            # batch
C_IN = 3         # image channels
IMG = 16         # image height/width
PATCH = 4        # patch size
NP = (IMG // PATCH) ** 2          # num patches = 16
N = NP + 1                        # tokens incl. cls = 17
NPAD = 24                         # tokens padded to a sublane multiple of 8
D = 32           # embed / feature dim  (stand-in for feature_dim=768)
HEADS = 4
DH = D // HEADS  # head dim = 8
DEPTH = 2        # number of transformer blocks
MLP_H = 4 * D    # mlp hidden = 128
NUM_CLASSES = 10
CP = C_IN * PATCH * PATCH         # flattened patch size = 48
M = B * NPAD                      # rows carried through the blocks = 48
QKV_PAD = 128                     # fused qkv output padded to a full lane group

LN_EPS_ENC = 1e-6   # timm ViT LayerNorm eps
LN_EPS_HEAD = 1e-5  # nn.LayerNorm default eps (mlp_head)

assert MLP_H == 128 and 3 * D <= QKV_PAD, "bias/weight packing assumes 128-lane rows"


def _layernorm(x, gamma, beta, eps):
    """Row-wise layernorm over the last axis."""
    mean = jnp.mean(x, axis=-1, keepdims=True)
    xc = x - mean
    var = jnp.mean(xc * xc, axis=-1, keepdims=True)
    return xc * jax.lax.rsqrt(var + eps) * gamma + beta


# -----------------------------------------------------------------------------
# Single fused kernel: patch embed -> tokens -> DEPTH transformer blocks -> head
# -----------------------------------------------------------------------------
def encoder_kernel(patches_ref, patch_w_ref, cls_pos_ref,
                   ln_gb_ref, w_in_ref, b_in_ref, w_proj_ref, w_fc2_ref, b_out_ref,
                   final_ln_ref, head_w_ref, head_b_ref,
                   logits_ref, feat_ref):
    f32 = jnp.float32

    # ---- patch embedding directly in slab layout ----
    # patches_ref is (M, CP) with zero rows at cls/pad positions; cls_pos_ref already
    # holds pos_embed+patch_b for patch rows, cls_token+pos_embed[0] for the cls row,
    # and zeros for pad rows (all packed once at init in the wrapper).
    x = jnp.dot(patches_ref[...], patch_w_ref[...],
                preferred_element_type=f32) + cls_pos_ref[...]            # (M, D)

    # ---- block-diagonal additive key mask (mask cross-batch keys and pad keys) ----
    row_ids = jax.lax.broadcasted_iota(jnp.int32, (M, M), 0)
    col_ids = jax.lax.broadcasted_iota(jnp.int32, (M, M), 1)
    valid = jnp.zeros((M, M), jnp.bool_)
    for b in range(B):                                                    # static, tiny
        in_slab_row = (row_ids >= b * NPAD) & (row_ids < (b + 1) * NPAD)
        in_slab_col = (col_ids >= b * NPAD) & (col_ids < b * NPAD + N)
        valid = valid | (in_slab_row & in_slab_col)
    mask_add = jnp.where(valid, 0.0, -1e30).astype(f32)                   # (M, M)

    scale = 1.0 / math.sqrt(DH)

    for d in range(DEPTH):                                                # static unroll
        # ---------------- attention branch ----------------
        h = _layernorm(x, ln_gb_ref[d, 0], ln_gb_ref[d, 1], LN_EPS_ENC)   # (M, D)
        # fused QKV: one lane-dense matmul; output columns = [q(32) | k(32) | v(32) | pad]
        qkv = jnp.dot(h, w_in_ref[d, 0], preferred_element_type=f32) + b_in_ref[d, 0]

        head_outs = []
        for hh in range(HEADS):                                           # static unroll
            qh = qkv[:, hh * DH:(hh + 1) * DH]                            # (M, DH)
            kh = qkv[:, D + hh * DH:D + (hh + 1) * DH]
            vh = qkv[:, 2 * D + hh * DH:2 * D + (hh + 1) * DH]
            s = jnp.einsum('nk,mk->nm', qh * scale, kh,
                           preferred_element_type=f32) + mask_add         # (M, M)
            s = s - jnp.max(s, axis=-1, keepdims=True)
            p = jnp.exp(s)
            p = p * pl.reciprocal(jnp.sum(p, axis=-1, keepdims=True), approx=True)
            head_outs.append(jnp.dot(p, vh, preferred_element_type=f32))  # (M, DH)
        o = jnp.concatenate(head_outs, axis=-1)                           # (M, D) lane concat
        x = x + jnp.dot(o, w_proj_ref[d], preferred_element_type=f32) + b_out_ref[d, 0]

        # ---------------- MLP branch ----------------
        h2 = _layernorm(x, ln_gb_ref[d, 2], ln_gb_ref[d, 3], LN_EPS_ENC)
        m = jnp.dot(h2, w_in_ref[d, 1], preferred_element_type=f32) + b_in_ref[d, 1]
        # TODO(synk): timm ViT uses exact (erf) GELU; tanh approximation used here for
        # guaranteed Mosaic lowering of the transcendental.
        m = jax.nn.gelu(m, approximate=True)
        x = x + jnp.dot(m, w_fc2_ref[d], preferred_element_type=f32) + b_out_ref[d, 1]

    # ---- final encoder norm on cls token + mlp_head (LayerNorm + Linear) ----
    # cls token sits at row NP of each batch slab (rows 16, 40 — sublane aligned)
    cls = jnp.concatenate(
        [x[b * NPAD + NP: b * NPAD + NP + 1, :] for b in range(B)], axis=0)   # (B, D)
    feat = _layernorm(cls, final_ln_ref[0], final_ln_ref[1], LN_EPS_ENC)      # encoder.norm
    hh2 = _layernorm(feat, final_ln_ref[2], final_ln_ref[3], LN_EPS_HEAD)     # mlp_head LN
    logits = jnp.dot(hh2, head_w_ref[...], preferred_element_type=f32) + head_b_ref[...]

    feat_ref[...] = feat.astype(feat_ref.dtype)
    logits_ref[...] = logits.astype(logits_ref.dtype)


def encoder_pallas(patches, p):
    """patches: (M, CP) slab layout. p: packed params dict. Returns (logits, features)."""
    args = (patches, p["patch_w"], p["cls_pos"],
            p["ln_gb"], p["w_in"], p["b_in"], p["w_proj"], p["w_fc2"], p["b_out"],
            p["final_ln"], p["head_w"], p["head_b"])
    vmem = lambda: pl.BlockSpec(memory_space=pltpu.MemorySpace.VMEM)
    return pl.pallas_call(
        encoder_kernel,
        out_shape=(jax.ShapeDtypeStruct((B, NUM_CLASSES), jnp.float32),
                   jax.ShapeDtypeStruct((B, D), jnp.float32)),
        in_specs=[vmem() for _ in args],       # everything resident in VMEM, no grid
        out_specs=(vmem(), vmem()),
    )(*args)


# -----------------------------------------------------------------------------
# One-time parameter packing (layout plumbing, done ONCE at init — not per call)
# -----------------------------------------------------------------------------
def pack_params(params):
    blocks = params["blocks"]
    pad_w = lambda w: jnp.pad(w, ((0, 0), (0, QKV_PAD - 3 * D)))   # (D,96)->(D,128)
    pad_b = lambda b: jnp.pad(b, ((0, 0), (0, QKV_PAD - 3 * D)))   # (1,96)->(1,128)
    packed = {
        "patch_w": params["patch_w"],                                         # (CP, D)
        "ln_gb": jnp.stack([jnp.stack([bk["ln1_g"], bk["ln1_b"],
                                       bk["ln2_g"], bk["ln2_b"]])
                            for bk in blocks]),                               # (DEPTH,4,1,D)
        "w_in": jnp.stack([jnp.stack([pad_w(bk["qkv_w"]), bk["fc1_w"]])
                           for bk in blocks]),                                # (DEPTH,2,D,128)
        "b_in": jnp.stack([jnp.stack([pad_b(bk["qkv_b"]), bk["fc1_b"]])
                           for bk in blocks]),                                # (DEPTH,2,1,128)
        "w_proj": jnp.stack([bk["proj_w"] for bk in blocks]),                 # (DEPTH,D,D)
        "w_fc2": jnp.stack([bk["fc2_w"] for bk in blocks]),                   # (DEPTH,MLP_H,D)
        "b_out": jnp.stack([jnp.stack([bk["proj_b"], bk["fc2_b"]])
                            for bk in blocks]),                               # (DEPTH,2,1,D)
        "final_ln": jnp.stack([params["norm_g"], params["norm_b"],
                               params["head_ln_g"], params["head_ln_b"]]),    # (4,1,D)
        "head_w": params["head_w"],                                           # (D, NUM_CLASSES)
        "head_b": params["head_b"],                                           # (1, NUM_CLASSES)
    }
    # per-slab additive table: [pos_embed[1..NP] + patch_b, cls_token + pos_embed[0], 0s]
    pe = params["pos_embed"][0]          # (N, D)
    cls = params["cls_token"][0]         # (1, D)
    slab = jnp.concatenate(
        [pe[1:N] + params["patch_b"], cls + pe[0:1],
         jnp.zeros((NPAD - N, D), jnp.float32)], axis=0)                      # (NPAD, D)
    packed["cls_pos"] = jnp.tile(slab, (B, 1))                                # (M, D)
    return packed


# -----------------------------------------------------------------------------
# Parameter init (deterministic, synthetic), patch extraction, full forward
# -----------------------------------------------------------------------------
def init_params(key):
    keys = jax.random.split(key, 8 + DEPTH)
    s = 0.02
    p = {
        "patch_w": s * jax.random.normal(keys[0], (CP, D), jnp.float32),
        "patch_b": jnp.zeros((1, D), jnp.float32),
        "cls_token": s * jax.random.normal(keys[1], (1, 1, D), jnp.float32),
        "pos_embed": s * jax.random.normal(keys[2], (1, N, D), jnp.float32),
        "norm_g": jnp.ones((1, D), jnp.float32),
        "norm_b": jnp.zeros((1, D), jnp.float32),
        "head_ln_g": jnp.ones((1, D), jnp.float32),
        "head_ln_b": jnp.zeros((1, D), jnp.float32),
        "head_w": s * jax.random.normal(keys[3], (D, NUM_CLASSES), jnp.float32),
        "head_b": jnp.zeros((1, NUM_CLASSES), jnp.float32),
        "blocks": [],
    }
    for i in range(DEPTH):
        bk = jax.random.split(keys[8 + i], 4)
        p["blocks"].append({
            "ln1_g": jnp.ones((1, D), jnp.float32),
            "ln1_b": jnp.zeros((1, D), jnp.float32),
            "qkv_w": s * jax.random.normal(bk[0], (D, 3 * D), jnp.float32),
            "qkv_b": jnp.zeros((1, 3 * D), jnp.float32),
            "proj_w": s * jax.random.normal(bk[1], (D, D), jnp.float32),
            "proj_b": jnp.zeros((1, D), jnp.float32),
            "ln2_g": jnp.ones((1, D), jnp.float32),
            "ln2_b": jnp.zeros((1, D), jnp.float32),
            "fc1_w": s * jax.random.normal(bk[2], (D, MLP_H), jnp.float32),
            "fc1_b": jnp.zeros((1, MLP_H), jnp.float32),
            "fc2_w": s * jax.random.normal(bk[3], (MLP_H, D), jnp.float32),
            "fc2_b": jnp.zeros((1, D), jnp.float32),
        })
    return p


def extract_patches(photo):
    """(B, C, H, W) -> (B, NP, C*PATCH*PATCH), flattened in (C, ph, pw) order
    to match PyTorch Conv2d weight[o, c, i, j] semantics."""
    b, c, h, w = photo.shape
    gh, gw = h // PATCH, w // PATCH
    x = photo.reshape(b, c, gh, PATCH, gw, PATCH)
    x = jnp.transpose(x, (0, 2, 4, 1, 3, 5))       # (B, gh, gw, C, p, p)
    return x.reshape(b, gh * gw, c * PATCH * PATCH)


def extract_patches_slab(photo):
    """(B, C, H, W) -> (M, CP) slab layout: per batch [NP patch rows | NPAD-NP zero rows]
    (zero rows land at the cls/pad token positions)."""
    x = extract_patches(photo)                                        # (B, NP, CP)
    pad = jnp.zeros((x.shape[0], NPAD - NP, CP), x.dtype)
    return jnp.concatenate([x, pad], axis=1).reshape(B * NPAD, CP)    # (M, CP)


@jax.jit
def encoder_forward(photo, packed):
    """packed = pack_params(params), computed ONCE at init (not per call)."""
    patches = extract_patches_slab(photo)
    logits, features = encoder_pallas(patches, packed)
    return logits, features


# -----------------------------------------------------------------------------
# Pure-JAX reference (mirrors the PyTorch module's math) for correctness check
# -----------------------------------------------------------------------------
def _ln_ref(x, g, b, eps):
    mean = jnp.mean(x, axis=-1, keepdims=True)
    var = jnp.mean((x - mean) ** 2, axis=-1, keepdims=True)
    return (x - mean) * jax.lax.rsqrt(var + eps) * g + b


def encoder_forward_ref(photo, params):
    patches = extract_patches(photo)                                     # (B, NP, CP)
    tok = patches @ params["patch_w"] + params["patch_b"]                # (B, NP, D)
    cls = jnp.broadcast_to(params["cls_token"], (B, 1, D))
    x = jnp.concatenate([cls, tok], axis=1) + params["pos_embed"]        # (B, N, D)
    for blk in params["blocks"]:
        h = _ln_ref(x, blk["ln1_g"], blk["ln1_b"], LN_EPS_ENC)
        qkv = h @ blk["qkv_w"] + blk["qkv_b"]
        qkv = qkv.reshape(B, N, 3, HEADS, DH).transpose(2, 0, 3, 1, 4)   # (3, B, H, N, DH)
        q, k, v = qkv[0], qkv[1], qkv[2]
        s = jnp.einsum('bhnd,bhmd->bhnm', q / math.sqrt(DH), k)
        p = jax.nn.softmax(s, axis=-1)
        o = jnp.einsum('bhnm,bhmd->bhnd', p, v).transpose(0, 2, 1, 3).reshape(B, N, D)
        x = x + o @ blk["proj_w"] + blk["proj_b"]
        h2 = _ln_ref(x, blk["ln2_g"], blk["ln2_b"], LN_EPS_ENC)
        m = jax.nn.gelu(h2 @ blk["fc1_w"] + blk["fc1_b"], approximate=True)
        x = x + m @ blk["fc2_w"] + blk["fc2_b"]
    feat = _ln_ref(x[:, 0], params["norm_g"], params["norm_b"], LN_EPS_ENC)
    hh = _ln_ref(feat, params["head_ln_g"], params["head_ln_b"], LN_EPS_HEAD)
    logits = hh @ params["head_w"] + params["head_b"]
    return logits, feat


if __name__ == "__main__":
    key = jax.random.PRNGKey(0)
    pkey, xkey = jax.random.split(key)
    params = init_params(pkey)
    # Pack once at init; the packed dict is what every forward call consumes.
    packed = jax.block_until_ready(pack_params(params))
    photo = jax.random.normal(xkey, (B, C_IN, IMG, IMG), jnp.float32)

    logits, features = encoder_forward(photo, packed)
    jax.block_until_ready((logits, features))

    assert logits.shape == (B, NUM_CLASSES)
    assert features.shape == (B, D)
    assert bool(jnp.all(jnp.isfinite(logits))) and bool(jnp.all(jnp.isfinite(features)))

    ref_logits, ref_feat = encoder_forward_ref(photo, params)
    assert bool(jnp.allclose(logits, ref_logits, rtol=1e-2, atol=1e-2)), "logits mismatch vs JAX ref"
    assert bool(jnp.allclose(features, ref_feat, rtol=1e-2, atol=1e-2)), "features mismatch vs JAX ref"

    print("KERNEL_OK")
</pallas_src>

<mosaic_0001>
module attributes {stable_mosaic.version = 11 : i64} {
  func.func @encoder_kernel(%arg0: memref<48x48xf32, #tpu.memory_space<vmem>>, %arg1: memref<48x32xf32, #tpu.memory_space<vmem>>, %arg2: memref<48x32xf32, #tpu.memory_space<vmem>>, %arg3: memref<2x4x1x32xf32, #tpu.memory_space<vmem>>, %arg4: memref<2x2x32x128xf32, #tpu.memory_space<vmem>>, %arg5: memref<2x2x1x128xf32, #tpu.memory_space<vmem>>, %arg6: memref<2x32x32xf32, #tpu.memory_space<vmem>>, %arg7: memref<2x128x32xf32, #tpu.memory_space<vmem>>, %arg8: memref<2x2x1x32xf32, #tpu.memory_space<vmem>>, %arg9: memref<4x1x32xf32, #tpu.memory_space<vmem>>, %arg10: memref<32x10xf32, #tpu.memory_space<vmem>>, %arg11: memref<1x10xf32, #tpu.memory_space<vmem>>, %arg12: memref<2x10xf32, #tpu.memory_space<vmem>>, %arg13: memref<2x32xf32, #tpu.memory_space<vmem>>) attributes {dimension_semantics = [], scalar_prefetch = 0 : i64, scratch_operands = 0 : i64, tpu.core_type = #tpu.core_type<tc>} {
    %c0 = arith.constant 0 : index
    %c0_0 = arith.constant 0 : index
    %0 = vector.load %arg0[%c0, %c0_0] : memref<48x48xf32, #tpu.memory_space<vmem>>, vector<48x48xf32>
    %c0_1 = arith.constant 0 : index
    %c0_2 = arith.constant 0 : index
    %1 = vector.load %arg1[%c0_1, %c0_2] : memref<48x32xf32, #tpu.memory_space<vmem>>, vector<48x32xf32>
    %cst = arith.constant dense<0.000000e+00> : vector<48x32xf32>
    %2 = tpu.matmul %0, %1, %cst {dimension_numbers = #tpu.dot_dimension_numbers<[1], [0], [0], [1], [0, 0, 1, 1], [], []>} : vector<48x48xf32>, vector<48x32xf32>, vector<48x32xf32> -> vector<48x32xf32>
    %c0_3 = arith.constant 0 : index
    %c0_4 = arith.constant 0 : index
    %3 = vector.load %arg2[%c0_3, %c0_4] : memref<48x32xf32, #tpu.memory_space<vmem>>, vector<48x32xf32>
    %4 = arith.addf %2, %3 : vector<48x32xf32>
    %5 = tpu.iota {dimensions = array<i32: 0>} : vector<48x48xi32>
    %6 = tpu.iota {dimensions = array<i32: 1>} : vector<48x48xi32>
    %false = arith.constant false
    %7 = vector.broadcast %false : i1 to vector<48x48xi1>
    %c0_i32 = arith.constant 0 : i32
    %8 = vector.broadcast %c0_i32 : i32 to vector<48x48xi32>
    %9 = arith.cmpi sge, %5, %8 : vector<48x48xi32>
    %c24_i32 = arith.constant 24 : i32
    %10 = vector.broadcast %c24_i32 : i32 to vector<48x48xi32>
    %11 = arith.cmpi slt, %5, %10 : vector<48x48xi32>
    %12 = arith.andi %9, %11 : vector<48x48xi1>
    %c0_i32_5 = arith.constant 0 : i32
    %13 = vector.broadcast %c0_i32_5 : i32 to vector<48x48xi32>
    %14 = arith.cmpi sge, %6, %13 : vector<48x48xi32>
    %c17_i32 = arith.constant 17 : i32
    %15 = vector.broadcast %c17_i32 : i32 to vector<48x48xi32>
    %16 = arith.cmpi slt, %6, %15 : vector<48x48xi32>
    %17 = arith.andi %14, %16 : vector<48x48xi1>
    %18 = arith.andi %12, %17 : vector<48x48xi1>
    %19 = arith.ori %7, %18 : vector<48x48xi1>
    %c24_i32_6 = arith.constant 24 : i32
    %20 = vector.broadcast %c24_i32_6 : i32 to vector<48x48xi32>
    %21 = arith.cmpi sge, %5, %20 : vector<48x48xi32>
    %c48_i32 = arith.constant 48 : i32
    %22 = vector.broadcast %c48_i32 : i32 to vector<48x48xi32>
    %23 = arith.cmpi slt, %5, %22 : vector<48x48xi32>
    %24 = arith.andi %21, %23 : vector<48x48xi1>
    %c24_i32_7 = arith.constant 24 : i32
    %25 = vector.broadcast %c24_i32_7 : i32 to vector<48x48xi32>
    %26 = arith.cmpi sge, %6, %25 : vector<48x48xi32>
    %c41_i32 = arith.constant 41 : i32
    %27 = vector.broadcast %c41_i32 : i32 to vector<48x48xi32>
    %28 = arith.cmpi slt, %6, %27 : vector<48x48xi32>
    %29 = arith.andi %26, %28 : vector<48x48xi1>
    %30 = arith.andi %24, %29 : vector<48x48xi1>
    %31 = arith.ori %19, %30 : vector<48x48xi1>
    %cst_8 = arith.constant 0.000000e+00 : f32
    %cst_9 = arith.constant -1.000000e+30 : f32
    %32 = vector.broadcast %cst_8 : f32 to vector<48x48xf32>
    %33 = vector.broadcast %cst_9 : f32 to vector<48x48xf32>
    %34 = arith.select %31, %32, %33 : vector<48x48xi1>, vector<48x48xf32>
    %c0_10 = arith.constant 0 : index
    %c0_11 = arith.constant 0 : index
    %c0_12 = arith.constant 0 : index
    %c0_13 = arith.constant 0 : index
    %35 = vector.load %arg3[%c0_10, %c0_11, %c0_12, %c0_13] : memref<2x4x1x32xf32, #tpu.memory_space<vmem>>, vector<1x1x1x32xf32>
    %36 = vector.shape_cast %35 : vector<1x1x1x32xf32> to vector<1x32xf32>
    %c0_14 = arith.constant 0 : index
    %c1 = arith.constant 1 : index
    %c0_15 = arith.constant 0 : index
    %c0_16 = arith.constant 0 : index
    %37 = vector.load %arg3[%c0_14, %c1, %c0_15, %c0_16] : memref<2x4x1x32xf32, #tpu.memory_space<vmem>>, vector<1x1x1x32xf32>
    %38 = vector.shape_cast %37 : vector<1x1x1x32xf32> to vector<1x32xf32>
    %cst_17 = arith.constant dense<0.000000e+00> : vector<48xf32>
    %39 = vector.multi_reduction <add>, %4, %cst_17 [1] : vector<48x32xf32> to vector<48xf32>
    %40 = vector.shape_cast %39 : vector<48xf32> to vector<48x1xf32>
    %cst_18 = arith.constant 3.200000e+01 : f32
    %41 = vector.broadcast %cst_18 : f32 to vector<48x1xf32>
    %42 = arith.divf %40, %41 : vector<48x1xf32>
    %43 = vector.broadcast %42 : vector<48x1xf32> to vector<48x32xf32>
    %44 = arith.subf %4, %43 : vector<48x32xf32>
    %45 = arith.mulf %44, %44 : vector<48x32xf32>
    %cst_19 = arith.constant dense<0.000000e+00> : vector<48xf32>
    %46 = vector.multi_reduction <add>, %45, %cst_19 [1] : vector<48x32xf32> to vector<48xf32>
    %47 = vector.shape_cast %46 : vector<48xf32> to vector<48x1xf32>
    %cst_20 = arith.constant 3.200000e+01 : f32
    %48 = vector.broadcast %cst_20 : f32 to vector<48x1xf32>
    %49 = arith.divf %47, %48 : vector<48x1xf32>
    %cst_21 = arith.constant 9.99999997E-7 : f32
    %50 = vector.broadcast %cst_21 : f32 to vector<48x1xf32>
    %51 = arith.addf %49, %50 : vector<48x1xf32>
    %52 = math.rsqrt %51 : vector<48x1xf32>
    %53 = vector.broadcast %52 : vector<48x1xf32> to vector<48x32xf32>
    %54 = arith.mulf %44, %53 : vector<48x32xf32>
    %55 = vector.broadcast %36 : vector<1x32xf32> to vector<48x32xf32>
    %56 = arith.mulf %54, %55 : vector<48x32xf32>
    %57 = vector.broadcast %38 : vector<1x32xf32> to vector<48x32xf32>
    %58 = arith.addf %56, %57 : vector<48x32xf32>
    %c0_22 = arith.constant 0 : index
    %c0_23 = arith.constant 0 : index
    %c0_24 = arith.constant 0 : index
    %c0_25 = arith.constant 0 : index
    %59 = vector.load %arg4[%c0_22, %c0_23, %c0_24, %c0_25] : memref<2x2x32x128xf32, #tpu.memory_space<vmem>>, vector<1x1x32x128xf32>
    %60 = vector.shape_cast %59 : vector<1x1x32x128xf32> to vector<32x128xf32>
    %cst_26 = arith.constant dense<0.000000e+00> : vector<48x128xf32>
    %61 = tpu.matmul %58, %60, %cst_26 {dimension_numbers = #tpu.dot_dimension_numbers<[1], [0], [0], [1], [0, 0, 1, 1], [], []>} : vector<48x32xf32>, vector<32x128xf32>, vector<48x128xf32> -> vector<48x128xf32>
    %c0_27 = arith.constant 0 : index
    %c0_28 = arith.constant 0 : index
    %c0_29 = arith.constant 0 : index
    %c0_30 = arith.constant 0 : index
    %62 = vector.load %arg5[%c0_27, %c0_28, %c0_29, %c0_30] : memref<2x2x1x128xf32, #tpu.memory_space<vmem>>, vector<1x1x1x128xf32>
    %63 = vector.shape_cast %62 : vector<1x1x1x128xf32> to vector<1x128xf32>
    %64 = vector.broadcast %63 : vector<1x128xf32> to vector<48x128xf32>
    %65 = arith.addf %61, %64 : vector<48x128xf32>
    %66 = vector.extract_strided_slice %65 {offsets = [0, 0], sizes = [48, 8], strides = [1, 1]} : vector<48x128xf32> to vector<48x8xf32>
    %67 = vector.extract_strided_slice %65 {offsets = [0, 32], sizes = [48, 8], strides = [1, 1]} : vector<48x128xf32> to vector<48x8xf32>
    %68 = vector.extract_strided_slice %65 {offsets = [0, 64], sizes = [48, 8], strides = [1, 1]} : vector<48x128xf32> to vector<48x8xf32>
    %cst_31 = arith.constant 0.353553385 : f32
    %69 = vector.broadcast %cst_31 : f32 to vector<48x8xf32>
    %70 = arith.mulf %66, %69 : vector<48x8xf32>
    "tpu.trace_start"() <{level = 10 : i32, message = "nk,mk->nm"}> : () -> ()
    %cst_32 = arith.constant dense<0.000000e+00> : vector<48x48xf32>
    %71 = tpu.matmul %70, %67, %cst_32 {dimension_numbers = #tpu.dot_dimension_numbers<[1], [1], [0], [0], [0, 0, 1, 0], [], []>} : vector<48x8xf32>, vector<48x8xf32>, vector<48x48xf32> -> vector<48x48xf32>
    "tpu.trace_stop"() : () -> ()
    %72 = arith.addf %71, %34 : vector<48x48xf32>
    %cst_33 = arith.constant dense<0xFF800000> : vector<48xf32>
    %73 = vector.multi_reduction <maximumf>, %72, %cst_33 [1] : vector<48x48xf32> to vector<48xf32>
    %74 = vector.shape_cast %73 : vector<48xf32> to vector<48x1xf32>
    %75 = vector.broadcast %74 : vector<48x1xf32> to vector<48x48xf32>
    %76 = arith.subf %72, %75 : vector<48x48xf32>
    %77 = math.exp %76 : vector<48x48xf32>
    %cst_34 = arith.constant dense<0.000000e+00> : vector<48xf32>
    %78 = vector.multi_reduction <add>, %77, %cst_34 [1] : vector<48x48xf32> to vector<48xf32>
    %79 = vector.shape_cast %78 : vector<48xf32> to vector<48x1xf32>
    %80 = tpu.reciprocal %79 {approx = true} : vector<48x1xf32> -> vector<48x1xf32>
    %81 = vector.broadcast %80 : vector<48x1xf32> to vector<48x48xf32>
    %82 = arith.mulf %77, %81 : vector<48x48xf32>
    %cst_35 = arith.constant dense<0.000000e+00> : vector<48x8xf32>
    %83 = tpu.matmul %82, %68, %cst_35 {dimension_numbers = #tpu.dot_dimension_numbers<[1], [0], [0], [1], [0, 0, 1, 1], [], []>} : vector<48x48xf32>, vector<48x8xf32>, vector<48x8xf32> -> vector<48x8xf32>
    %84 = vector.extract_strided_slice %65 {offsets = [0, 8], sizes = [48, 8], strides = [1, 1]} : vector<48x128xf32> to vector<48x8xf32>
    %85 = vector.extract_strided_slice %65 {offsets = [0, 40], sizes = [48, 8], strides = [1, 1]} : vector<48x128xf32> to vector<48x8xf32>
    %86 = vector.extract_strided_slice %65 {offsets = [0, 72], sizes = [48, 8], strides = [1, 1]} : vector<48x128xf32> to vector<48x8xf32>
    %cst_36 = arith.constant 0.353553385 : f32
    %87 = vector.broadcast %cst_36 : f32 to vector<48x8xf32>
    %88 = arith.mulf %84, %87 : vector<48x8xf32>
    "tpu.trace_start"() <{level = 10 : i32, message = "nk,mk->nm"}> : () -> ()
    %cst_37 = arith.constant dense<0.000000e+00> : vector<48x48xf32>
    %89 = tpu.matmul %88, %85, %cst_37 {dimension_numbers = #tpu.dot_dimension_numbers<[1], [1], [0], [0], [0, 0, 1, 0], [], []>} : vector<48x8xf32>, vector<48x8xf32>, vector<48x48xf32> -> vector<48x48xf32>
    "tpu.trace_stop"() : () -> ()
    %90 = arith.addf %89, %34 : vector<48x48xf32>
    %cst_38 = arith.constant dense<0xFF800000> : vector<48xf32>
    %91 = vector.multi_reduction <maximumf>, %90, %cst_38 [1] : vector<48x48xf32> to vector<48xf32>
    %92 = vector.shape_cast %91 : vector<48xf32> to vector<48x1xf32>
    %93 = vector.broadcast %92 : vector<48x1xf32> to vector<48x48xf32>
    %94 = arith.subf %90, %93 : vector<48x48xf32>
    %95 = math.exp %94 : vector<48x48xf32>
    %cst_39 = arith.constant dense<0.000000e+00> : vector<48xf32>
    %96 = vector.multi_reduction <add>, %95, %cst_39 [1] : vector<48x48xf32> to vector<48xf32>
    %97 = vector.shape_cast %96 : vector<48xf32> to vector<48x1xf32>
    %98 = tpu.reciprocal %97 {approx = true} : vector<48x1xf32> -> vector<48x1xf32>
    %99 = vector.broadcast %98 : vector<48x1xf32> to vector<48x48xf32>
    %100 = arith.mulf %95, %99 : vector<48x48xf32>
    %cst_40 = arith.constant dense<0.000000e+00> : vector<48x8xf32>
    %101 = tpu.matmul %100, %86, %cst_40 {dimension_numbers = #tpu.dot_dimension_numbers<[1], [0], [0], [1], [0, 0, 1, 1], [], []>} : vector<48x48xf32>, vector<48x8xf32>, vector<48x8xf32> -> vector<48x8xf32>
    %102 = vector.extract_strided_slice %65 {offsets = [0, 16], sizes = [48, 8], strides = [1, 1]} : vector<48x128xf32> to vector<48x8xf32>
    %103 = vector.extract_strided_slice %65 {offsets = [0, 48], sizes = [48, 8], strides = [1, 1]} : vector<48x128xf32> to vector<48x8xf32>
    %104 = vector.extract_strided_slice %65 {offsets = [0, 80], sizes = [48, 8], strides = [1, 1]} : vector<48x128xf32> to vector<48x8xf32>
    %cst_41 = arith.constant 0.353553385 : f32
    %105 = vector.broadcast %cst_41 : f32 to vector<48x8xf32>
    %106 = arith.mulf %102, %105 : vector<48x8xf32>
    "tpu.trace_start"() <{level = 10 : i32, message = "nk,mk->nm"}> : () -> ()
    %cst_42 = arith.constant dense<0.000000e+00> : vector<48x48xf32>
    %107 = tpu.matmul %106, %103, %cst_42 {dimension_numbers = #tpu.dot_dimension_numbers<[1], [1], [0], [0], [0, 0, 1, 0], [], []>} : vector<48x8xf32>, vector<48x8xf32>, vector<48x48xf32> -> vector<48x48xf32>
    "tpu.trace_stop"() : () -> ()
    %108 = arith.addf %107, %34 : vector<48x48xf32>
    %cst_43 = arith.constant dense<0xFF800000> : vector<48xf32>
    %109 = vector.multi_reduction <maximumf>, %108, %cst_43 [1] : vector<48x48xf32> to vector<48xf32>
    %110 = vector.shape_cast %109 : vector<48xf32> to vector<48x1xf32>
    %111 = vector.broadcast %110 : vector<48x1xf32> to vector<48x48xf32>
    %112 = arith.subf %108, %111 : vector<48x48xf32>
    %113 = math.exp %112 : vector<48x48xf32>
    %cst_44 = arith.constant dense<0.000000e+00> : vector<48xf32>
    %114 = vector.multi_reduction <add>, %113, %cst_44 [1] : vector<48x48xf32> to vector<48xf32>
    %115 = vector.shape_cast %114 : vector<48xf32> to vector<48x1xf32>
    %116 = tpu.reciprocal %115 {approx = true} : vector<48x1xf32> -> vector<48x1xf32>
    %117 = vector.broadcast %116 : vector<48x1xf32> to vector<48x48xf32>
    %118 = arith.mulf %113, %117 : vector<48x48xf32>
    %cst_45 = arith.constant dense<0.000000e+00> : vector<48x8xf32>
    %119 = tpu.matmul %118, %104, %cst_45 {dimension_numbers = #tpu.dot_dimension_numbers<[1], [0], [0], [1], [0, 0, 1, 1], [], []>} : vector<48x48xf32>, vector<48x8xf32>, vector<48x8xf32> -> vector<48x8xf32>
    %120 = vector.extract_strided_slice %65 {offsets = [0, 24], sizes = [48, 8], strides = [1, 1]} : vector<48x128xf32> to vector<48x8xf32>
    %121 = vector.extract_strided_slice %65 {offsets = [0, 56], sizes = [48, 8], strides = [1, 1]} : vector<48x128xf32> to vector<48x8xf32>
    %122 = vector.extract_strided_slice %65 {offsets = [0, 88], sizes = [48, 8], strides = [1, 1]} : vector<48x128xf32> to vector<48x8xf32>
    %cst_46 = arith.constant 0.353553385 : f32
    %123 = vector.broadcast %cst_46 : f32 to vector<48x8xf32>
    %124 = arith.mulf %120, %123 : vector<48x8xf32>
    "tpu.trace_start"() <{level = 10 : i32, message = "nk,mk->nm"}> : () -> ()
    %cst_47 = arith.constant dense<0.000000e+00> : vector<48x48xf32>
    %125 = tpu.matmul %124, %121, %cst_47 {dimension_numbers = #tpu.dot_dimension_numbers<[1], [1], [0], [0], [0, 0, 1, 0], [], []>} : vector<48x8xf32>, vector<48x8xf32>, vector<48x48xf32> -> vector<48x48xf32>
    "tpu.trace_stop"() : () -> ()
    %126 = arith.addf %125, %34 : vector<48x48xf32>
    %cst_48 = arith.constant dense<0xFF800000> : vector<48xf32>
    %127 = vector.multi_reduction <maximumf>, %126, %cst_48 [1] : vector<48x48xf32> to vector<48xf32>
    %128 = vector.shape_cast %127 : vector<48xf32> to vector<48x1xf32>
    %129 = vector.broadcast %128 : vector<48x1xf32> to vector<48x48xf32>
    %130 = arith.subf %126, %129 : vector<48x48xf32>
    %131 = math.exp %130 : vector<48x48xf32>
    %cst_49 = arith.constant dense<0.000000e+00> : vector<48xf32>
    %132 = vector.multi_reduction <add>, %131, %cst_49 [1] : vector<48x48xf32> to vector<48xf32>
    %133 = vector.shape_cast %132 : vector<48xf32> to vector<48x1xf32>
    %134 = tpu.reciprocal %133 {approx = true} : vector<48x1xf32> -> vector<48x1xf32>
    %135 = vector.broadcast %134 : vector<48x1xf32> to vector<48x48xf32>
    %136 = arith.mulf %131, %135 : vector<48x48xf32>
    %cst_50 = arith.constant dense<0.000000e+00> : vector<48x8xf32>
    %137 = tpu.matmul %136, %122, %cst_50 {dimension_numbers = #tpu.dot_dimension_numbers<[1], [0], [0], [1], [0, 0, 1, 1], [], []>} : vector<48x48xf32>, vector<48x8xf32>, vector<48x8xf32> -> vector<48x8xf32>
    %138 = tpu.concatenate %83, %101, %119, %137 in 1 : vector<48x8xf32>, vector<48x8xf32>, vector<48x8xf32>, vector<48x8xf32> -> vector<48x32xf32>
    %c0_51 = arith.constant 0 : index
    %c0_52 = arith.constant 0 : index
    %c0_53 = arith.constant 0 : index
    %139 = vector.load %arg6[%c0_51, %c0_52, %c0_53] : memref<2x32x32xf32, #tpu.memory_space<vmem>>, vector<1x32x32xf32>
    %140 = vector.shape_cast %139 : vector<1x32x32xf32> to vector<32x32xf32>
    %cst_54 = arith.constant dense<0.000000e+00> : vector<48x32xf32>
    %141 = tpu.matmul %138, %140, %cst_54 {dimension_numbers = #tpu.dot_dimension_numbers<[1], [0], [0], [1], [0, 0, 1, 1], [], []>} : vector<48x32xf32>, vector<32x32xf32>, vector<48x32xf32> -> vector<48x32xf32>
    %142 = arith.addf %4, %141 : vector<48x32xf32>
    %c0_55 = arith.constant 0 : index
    %c0_56 = arith.constant 0 : index
    %c0_57 = arith.constant 0 : index
    %c0_58 = arith.constant 0 : index
    %143 = vector.load %arg8[%c0_55, %c0_56, %c0_57, %c0_58] : memref<2x2x1x32xf32, #tpu.memory_space<vmem>>, vector<1x1x1x32xf32>
    %144 = vector.shape_cast %143 : vector<1x1x1x32xf32> to vector<1x32xf32>
    %145 = vector.broadcast %144 : vector<1x32xf32> to vector<48x32xf32>
    %146 = arith.addf %142, %145 : vector<48x32xf32>
    %c0_59 = arith.constant 0 : index
    %c2 = arith.constant 2 : index
    %c0_60 = arith.constant 0 : index
    %c0_61 = arith.constant 0 : index
    %147 = vector.load %arg3[%c0_59, %c2, %c0_60, %c0_61] : memref<2x4x1x32xf32, #tpu.memory_space<vmem>>, vector<1x1x1x32xf32>
    %148 = vector.shape_cast %147 : vector<1x1x1x32xf32> to vector<1x32xf32>
    %c0_62 = arith.constant 0 : index
    %c3 = arith.constant 3 : index
    %c0_63 = arith.constant 0 : index
    %c0_64 = arith.constant 0 : index
    %149 = vector.load %arg3[%c0_62, %c3, %c0_63, %c0_64] : memref<2x4x1x32xf32, #tpu.memory_space<vmem>>, vector<1x1x1x32xf32>
    %150 = vector.shape_cast %149 : vector<1x1x1x32xf32> to vector<1x32xf32>
    %cst_65 = arith.constant dense<0.000000e+00> : vector<48xf32>
    %151 = vector.multi_reduction <add>, %146, %cst_65 [1] : vector<48x32xf32> to vector<48xf32>
    %152 = vector.shape_cast %151 : vector<48xf32> to vector<48x1xf32>
    %cst_66 = arith.constant 3.200000e+01 : f32
    %153 = vector.broadcast %cst_66 : f32 to vector<48x1xf32>
    %154 = arith.divf %152, %153 : vector<48x1xf32>
    %155 = vector.broadcast %154 : vector<48x1xf32> to vector<48x32xf32>
    %156 = arith.subf %146, %155 : vector<48x32xf32>
    %157 = arith.mulf %156, %156 : vector<48x32xf32>
    %cst_67 = arith.constant dense<0.000000e+00> : vector<48xf32>
    %158 = vector.multi_reduction <add>, %157, %cst_67 [1] : vector<48x32xf32> to vector<48xf32>
    %159 = vector.shape_cast %158 : vector<48xf32> to vector<48x1xf32>
    %cst_68 = arith.constant 3.200000e+01 : f32
    %160 = vector.broadcast %cst_68 : f32 to vector<48x1xf32>
    %161 = arith.divf %159, %160 : vector<48x1xf32>
    %cst_69 = arith.constant 9.99999997E-7 : f32
    %162 = vector.broadcast %cst_69 : f32 to vector<48x1xf32>
    %163 = arith.addf %161, %162 : vector<48x1xf32>
    %164 = math.rsqrt %163 : vector<48x1xf32>
    %165 = vector.broadcast %164 : vector<48x1xf32> to vector<48x32xf32>
    %166 = arith.mulf %156, %165 : vector<48x32xf32>
    %167 = vector.broadcast %148 : vector<1x32xf32> to vector<48x32xf32>
    %168 = arith.mulf %166, %167 : vector<48x32xf32>
    %169 = vector.broadcast %150 : vector<1x32xf32> to vector<48x32xf32>
    %170 = arith.addf %168, %169 : vector<48x32xf32>
    %c0_70 = arith.constant 0 : index
    %c1_71 = arith.constant 1 : index
    %c0_72 = arith.constant 0 : index
    %c0_73 = arith.constant 0 : index
    %171 = vector.load %arg4[%c0_70, %c1_71, %c0_72, %c0_73] : memref<2x2x32x128xf32, #tpu.memory_space<vmem>>, vector<1x1x32x128xf32>
    %172 = vector.shape_cast %171 : vector<1x1x32x128xf32> to vector<32x128xf32>
    %cst_74 = arith.constant dense<0.000000e+00> : vector<48x128xf32>
    %173 = tpu.matmul %170, %172, %cst_74 {dimension_numbers = #tpu.dot_dimension_numbers<[1], [0], [0], [1], [0, 0, 1, 1], [], []>} : vector<48x32xf32>, vector<32x128xf32>, vector<48x128xf32> -> vector<48x128xf32>
    %c0_75 = arith.constant 0 : index
    %c1_76 = arith.constant 1 : index
    %c0_77 = arith.constant 0 : index
    %c0_78 = arith.constant 0 : index
    %174 = vector.load %arg5[%c0_75, %c1_76, %c0_77, %c0_78] : memref<2x2x1x128xf32, #tpu.memory_space<vmem>>, vector<1x1x1x128xf32>
    %175 = vector.shape_cast %174 : vector<1x1x1x128xf32> to vector<1x128xf32>
    %176 = vector.broadcast %175 : vector<1x128xf32> to vector<48x128xf32>
    %177 = arith.addf %173, %176 : vector<48x128xf32>
    %178 = arith.mulf %177, %177 : vector<48x128xf32>
    %179 = arith.mulf %177, %178 : vector<48x128xf32>
    %cst_79 = arith.constant 4.471500e-02 : f32
    %180 = vector.broadcast %cst_79 : f32 to vector<48x128xf32>
    %181 = arith.mulf %180, %179 : vector<48x128xf32>
    %182 = arith.addf %177, %181 : vector<48x128xf32>
    %cst_80 = arith.constant 0.797884583 : f32
    %183 = vector.broadcast %cst_80 : f32 to vector<48x128xf32>
    %184 = arith.mulf %183, %182 : vector<48x128xf32>
    %185 = math.tanh %184 : vector<48x128xf32>
    %cst_81 = arith.constant 1.000000e+00 : f32
    %186 = vector.broadcast %cst_81 : f32 to vector<48x128xf32>
    %187 = arith.addf %186, %185 : vector<48x128xf32>
    %cst_82 = arith.constant 5.000000e-01 : f32
    %188 = vector.broadcast %cst_82 : f32 to vector<48x128xf32>
    %189 = arith.mulf %188, %187 : vector<48x128xf32>
    %190 = arith.mulf %177, %189 : vector<48x128xf32>
    %c0_83 = arith.constant 0 : index
    %c0_84 = arith.constant 0 : index
    %c0_85 = arith.constant 0 : index
    %191 = vector.load %arg7[%c0_83, %c0_84, %c0_85] : memref<2x128x32xf32, #tpu.memory_space<vmem>>, vector<1x128x32xf32>
    %192 = vector.shape_cast %191 : vector<1x128x32xf32> to vector<128x32xf32>
    %cst_86 = arith.constant dense<0.000000e+00> : vector<48x32xf32>
    %193 = tpu.matmul %190, %192, %cst_86 {dimension_numbers = #tpu.dot_dimension_numbers<[1], [0], [0], [1], [0, 0, 1, 1], [], []>} : vector<48x128xf32>, vector<128x32xf32>, vector<48x32xf32> -> vector<48x32xf32>
    %194 = arith.addf %146, %193 : vector<48x32xf32>
    %c0_87 = arith.constant 0 : index
    %c1_88 = arith.constant 1 : index
    %c0_89 = arith.constant 0 : index
    %c0_90 = arith.constant 0 : index
    %195 = vector.load %arg8[%c0_87, %c1_88, %c0_89, %c0_90] : memref<2x2x1x32xf32, #tpu.memory_space<vmem>>, vector<1x1x1x32xf32>
    %196 = vector.shape_cast %195 : vector<1x1x1x32xf32> to vector<1x32xf32>
    %197 = vector.broadcast %196 : vector<1x32xf32> to vector<48x32xf32>
    %198 = arith.addf %194, %197 : vector<48x32xf32>
    %c1_91 = arith.constant 1 : index
    %c0_92 = arith.constant 0 : index
    %c0_93 = arith.constant 0 : index
    %c0_94 = arith.constant 0 : index
    %199 = vector.load %arg3[%c1_91, %c0_92, %c0_93, %c0_94] : memref<2x4x1x32xf32, #tpu.memory_space<vmem>>, vector<1x1x1x32xf32>
    %200 = vector.shape_cast %199 : vector<1x1x1x32xf32> to vector<1x32xf32>
    %c1_95 = arith.constant 1 : index
    %c1_96 = arith.constant 1 : index
    %c0_97 = arith.constant 0 : index
    %c0_98 = arith.constant 0 : index
    %201 = vector.load %arg3[%c1_95, %c1_96, %c0_97, %c0_98] : memref<2x4x1x32xf32, #tpu.memory_space<vmem>>, vector<1x1x1x32xf32>
    %202 = vector.shape_cast %201 : vector<1x1x1x32xf32> to vector<1x32xf32>
    %cst_99 = arith.constant dense<0.000000e+00> : vector<48xf32>
    %203 = vector.multi_reduction <add>, %198, %cst_99 [1] : vector<48x32xf32> to vector<48xf32>
    %204 = vector.shape_cast %203 : vector<48xf32> to vector<48x1xf32>
    %cst_100 = arith.constant 3.200000e+01 : f32
    %205 = vector.broadcast %cst_100 : f32 to vector<48x1xf32>
    %206 = arith.divf %204, %205 : vector<48x1xf32>
    %207 = vector.broadcast %206 : vector<48x1xf32> to vector<48x32xf32>
    %208 = arith.subf %198, %207 : vector<48x32xf32>
    %209 = arith.mulf %208, %208 : vector<48x32xf32>
    %cst_101 = arith.constant dense<0.000000e+00> : vector<48xf32>
    %210 = vector.multi_reduction <add>, %209, %cst_101 [1] : vector<48x32xf32> to vector<48xf32>
    %211 = vector.shape_cast %210 : vector<48xf32> to vector<48x1xf32>
    %cst_102 = arith.constant 3.200000e+01 : f32
    %212 = vector.broadcast %cst_102 : f32 to vector<48x1xf32>
    %213 = arith.divf %211, %212 : vector<48x1xf32>
    %cst_103 = arith.constant 9.99999997E-7 : f32
    %214 = vector.broadcast %cst_103 : f32 to vector<48x1xf32>
    %215 = arith.addf %213, %214 : vector<48x1xf32>
    %216 = math.rsqrt %215 : vector<48x1xf32>
    %217 = vector.broadcast %216 : vector<48x1xf32> to vector<48x32xf32>
    %218 = arith.mulf %208, %217 : vector<48x32xf32>
    %219 = vector.broadcast %200 : vector<1x32xf32> to vector<48x32xf32>
    %220 = arith.mulf %218, %219 : vector<48x32xf32>
    %221 = vector.broadcast %202 : vector<1x32xf32> to vector<48x32xf32>
    %222 = arith.addf %220, %221 : vector<48x32xf32>
    %c1_104 = arith.constant 1 : index
    %c0_105 = arith.constant 0 : index
    %c0_106 = arith.constant 0 : index
    %c0_107 = arith.constant 0 : index
    %223 = vector.load %arg4[%c1_104, %c0_105, %c0_106, %c0_107] : memref<2x2x32x128xf32, #tpu.memory_space<vmem>>, vector<1x1x32x128xf32>
    %224 = vector.shape_cast %223 : vector<1x1x32x128xf32> to vector<32x128xf32>
    %cst_108 = arith.constant dense<0.000000e+00> : vector<48x128xf32>
    %225 = tpu.matmul %222, %224, %cst_108 {dimension_numbers = #tpu.dot_dimension_numbers<[1], [0], [0], [1], [0, 0, 1, 1], [], []>} : vector<48x32xf32>, vector<32x128xf32>, vector<48x128xf32> -> vector<48x128xf32>
    %c1_109 = arith.constant 1 : index
    %c0_110 = arith.constant 0 : index
    %c0_111 = arith.constant 0 : index
    %c0_112 = arith.constant 0 : index
    %226 = vector.load %arg5[%c1_109, %c0_110, %c0_111, %c0_112] : memref<2x2x1x128xf32, #tpu.memory_space<vmem>>, vector<1x1x1x128xf32>
    %227 = vector.shape_cast %226 : vector<1x1x1x128xf32> to vector<1x128xf32>
    %228 = vector.broadcast %227 : vector<1x128xf32> to vector<48x128xf32>
    %229 = arith.addf %225, %228 : vector<48x128xf32>
    %230 = vector.extract_strided_slice %229 {offsets = [0, 0], sizes = [48, 8], strides = [1, 1]} : vector<48x128xf32> to vector<48x8xf32>
    %231 = vector.extract_strided_slice %229 {offsets = [0, 32], sizes = [48, 8], strides = [1, 1]} : vector<48x128xf32> to vector<48x8xf32>
    %232 = vector.extract_strided_slice %229 {offsets = [0, 64], sizes = [48, 8], strides = [1, 1]} : vector<48x128xf32> to vector<48x8xf32>
    %cst_113 = arith.constant 0.353553385 : f32
    %233 = vector.broadcast %cst_113 : f32 to vector<48x8xf32>
    %234 = arith.mulf %230, %233 : vector<48x8xf32>
    "tpu.trace_start"() <{level = 10 : i32, message = "nk,mk->nm"}> : () -> ()
    %cst_114 = arith.constant dense<0.000000e+00> : vector<48x48xf32>
    %235 = tpu.matmul %234, %231, %cst_114 {dimension_numbers = #tpu.dot_dimension_numbers<[1], [1], [0], [0], [0, 0, 1, 0], [], []>} : vector<48x8xf32>, vector<48x8xf32>, vector<48x48xf32> -> vector<48x48xf32>
    "tpu.trace_stop"() : () -> ()
    %236 = arith.addf %235, %34 : vector<48x48xf32>
    %cst_115 = arith.constant dense<0xFF800000> : vector<48xf32>
    %237 = vector.multi_reduction <maximumf>, %236, %cst_115 [1] : vector<48x48xf32> to vector<48xf32>
    %238 = vector.shape_cast %237 : vector<48xf32> to vector<48x1xf32>
    %239 = vector.broadcast %238 : vector<48x1xf32> to vector<48x48xf32>
    %240 = arith.subf %236, %239 : vector<48x48xf32>
    %241 = math.exp %240 : vector<48x48xf32>
    %cst_116 = arith.constant dense<0.000000e+00> : vector<48xf32>
    %242 = vector.multi_reduction <add>, %241, %cst_116 [1] : vector<48x48xf32> to vector<48xf32>
    %243 = vector.shape_cast %242 : vector<48xf32> to vector<48x1xf32>
    %244 = tpu.reciprocal %243 {approx = true} : vector<48x1xf32> -> vector<48x1xf32>
    %245 = vector.broadcast %244 : vector<48x1xf32> to vector<48x48xf32>
    %246 = arith.mulf %241, %245 : vector<48x48xf32>
    %cst_117 = arith.constant dense<0.000000e+00> : vector<48x8xf32>
    %247 = tpu.matmul %246, %232, %cst_117 {dimension_numbers = #tpu.dot_dimension_numbers<[1], [0], [0], [1], [0, 0, 1, 1], [], []>} : vector<48x48xf32>, vector<48x8xf32>, vector<48x8xf32> -> vector<48x8xf32>
    %248 = vector.extract_strided_slice %229 {offsets = [0, 8], sizes = [48, 8], strides = [1, 1]} : vector<48x128xf32> to vector<48x8xf32>
    %249 = vector.extract_strided_slice %229 {offsets = [0, 40], sizes = [48, 8], strides = [1, 1]} : vector<48x128xf32> to vector<48x8xf32>
    %250 = vector.extract_strided_slice %229 {offsets = [0, 72], sizes = [48, 8], strides = [1, 1]} : vector<48x128xf32> to vector<48x8xf32>
    %cst_118 = arith.constant 0.353553385 : f32
    %251 = vector.broadcast %cst_118 : f32 to vector<48x8xf32>
    %252 = arith.mulf %248, %251 : vector<48x8xf32>
    "tpu.trace_start"() <{level = 10 : i32, message = "nk,mk->nm"}> : () -> ()
    %cst_119 = arith.constant dense<0.000000e+00> : vector<48x48xf32>
    %253 = tpu.matmul %252, %249, %cst_119 {dimension_numbers = #tpu.dot_dimension_numbers<[1], [1], [0], [0], [0, 0, 1, 0], [], []>} : vector<48x8xf32>, vector<48x8xf32>, vector<48x48xf32> -> vector<48x48xf32>
    "tpu.trace_stop"() : () -> ()
    %254 = arith.addf %253, %34 : vector<48x48xf32>
    %cst_120 = arith.constant dense<0xFF800000> : vector<48xf32>
    %255 = vector.multi_reduction <maximumf>, %254, %cst_120 [1] : vector<48x48xf32> to vector<48xf32>
    %256 = vector.shape_cast %255 : vector<48xf32> to vector<48x1xf32>
    %257 = vector.broadcast %256 : vector<48x1xf32> to vector<48x48xf32>
    %258 = arith.subf %254, %257 : vector<48x48xf32>
    %259 = math.exp %258 : vector<48x48xf32>
    %cst_121 = arith.constant dense<0.000000e+00> : vector<48xf32>
    %260 = vector.multi_reduction <add>, %259, %cst_121 [1] : vector<48x48xf32> to vector<48xf32>
    %261 = vector.shape_cast %260 : vector<48xf32> to vector<48x1xf32>
    %262 = tpu.reciprocal %261 {approx = true} : vector<48x1xf32> -> vector<48x1xf32>
    %263 = vector.broadcast %262 : vector<48x1xf32> to vector<48x48xf32>
    %264 = arith.mulf %259, %263 : vector<48x48xf32>
    %cst_122 = arith.constant dense<0.000000e+00> : vector<48x8xf32>
    %265 = tpu.matmul %264, %250, %cst_122 {dimension_numbers = #tpu.dot_dimension_numbers<[1], [0], [0], [1], [0, 0, 1, 1], [], []>} : vector<48x48xf32>, vector<48x8xf32>, vector<48x8xf32> -> vector<48x8xf32>
    %266 = vector.extract_strided_slice %229 {offsets = [0, 16], sizes = [48, 8], strides = [1, 1]} : vector<48x128xf32> to vector<48x8xf32>
    %267 = vector.extract_strided_slice %229 {offsets = [0, 48], sizes = [48, 8], strides = [1, 1]} : vector<48x128xf32> to vector<48x8xf32>
    %268 = vector.extract_strided_slice %229 {offsets = [0, 80], sizes = [48, 8], strides = [1, 1]} : vector<48x128xf32> to vector<48x8xf32>
    %cst_123 = arith.constant 0.353553385 : f32
    %269 = vector.broadcast %cst_123 : f32 to vector<48x8xf32>
    %270 = arith.mulf %266, %269 : vector<48x8xf32>
    "tpu.trace_start"() <{level = 10 : i32, message = "nk,mk->nm"}> : () -> ()
    %cst_124 = arith.constant dense<0.000000e+00> : vector<48x48xf32>
    %271 = tpu.matmul %270, %267, %cst_124 {dimension_numbers = #tpu.dot_dimension_numbers<[1], [1], [0], [0], [0, 0, 1, 0], [], []>} : vector<48x8xf32>, vector<48x8xf32>, vector<48x48xf32> -> vector<48x48xf32>
    "tpu.trace_stop"() : () -> ()
    %272 = arith.addf %271, %34 : vector<48x48xf32>
    %cst_125 = arith.constant dense<0xFF800000> : vector<48xf32>
    %273 = vector.multi_reduction <maximumf>, %272, %cst_125 [1] : vector<48x48xf32> to vector<48xf32>
    %274 = vector.shape_cast %273 : vector<48xf32> to vector<48x1xf32>
    %275 = vector.broadcast %274 : vector<48x1xf32> to vector<48x48xf32>
    %276 = arith.subf %272, %275 : vector<48x48xf32>
    %277 = math.exp %276 : vector<48x48xf32>
    %cst_126 = arith.constant dense<0.000000e+00> : vector<48xf32>
    %278 = vector.multi_reduction <add>, %277, %cst_126 [1] : vector<48x48xf32> to vector<48xf32>
    %279 = vector.shape_cast %278 : vector<48xf32> to vector<48x1xf32>
    %280 = tpu.reciprocal %279 {approx = true} : vector<48x1xf32> -> vector<48x1xf32>
    %281 = vector.broadcast %280 : vector<48x1xf32> to vector<48x48xf32>
    %282 = arith.mulf %277, %281 : vector<48x48xf32>
    %cst_127 = arith.constant dense<0.000000e+00> : vector<48x8xf32>
    %283 = tpu.matmul %282, %268, %cst_127 {dimension_numbers = #tpu.dot_dimension_numbers<[1], [0], [0], [1], [0, 0, 1, 1], [], []>} : vector<48x48xf32>, vector<48x8xf32>, vector<48x8xf32> -> vector<48x8xf32>
    %284 = vector.extract_strided_slice %229 {offsets = [0, 24], sizes = [48, 8], strides = [1, 1]} : vector<48x128xf32> to vector<48x8xf32>
    %285 = vector.extract_strided_slice %229 {offsets = [0, 56], sizes = [48, 8], strides = [1, 1]} : vector<48x128xf32> to vector<48x8xf32>
    %286 = vector.extract_strided_slice %229 {offsets = [0, 88], sizes = [48, 8], strides = [1, 1]} : vector<48x128xf32> to vector<48x8xf32>
    %cst_128 = arith.constant 0.353553385 : f32
    %287 = vector.broadcast %cst_128 : f32 to vector<48x8xf32>
    %288 = arith.mulf %284, %287 : vector<48x8xf32>
    "tpu.trace_start"() <{level = 10 : i32, message = "nk,mk->nm"}> : () -> ()
    %cst_129 = arith.constant dense<0.000000e+00> : vector<48x48xf32>
    %289 = tpu.matmul %288, %285, %cst_129 {dimension_numbers = #tpu.dot_dimension_numbers<[1], [1], [0], [0], [0, 0, 1, 0], [], []>} : vector<48x8xf32>, vector<48x8xf32>, vector<48x48xf32> -> vector<48x48xf32>
    "tpu.trace_stop"() : () -> ()
    %290 = arith.addf %289, %34 : vector<48x48xf32>
    %cst_130 = arith.constant dense<0xFF800000> : vector<48xf32>
    %291 = vector.multi_reduction <maximumf>, %290, %cst_130 [1] : vector<48x48xf32> to vector<48xf32>
    %292 = vector.shape_cast %291 : vector<48xf32> to vector<48x1xf32>
    %293 = vector.broadcast %292 : vector<48x1xf32> to vector<48x48xf32>
    %294 = arith.subf %290, %293 : vector<48x48xf32>
    %295 = math.exp %294 : vector<48x48xf32>
    %cst_131 = arith.constant dense<0.000000e+00> : vector<48xf32>
    %296 = vector.multi_reduction <add>, %295, %cst_131 [1] : vector<48x48xf32> to vector<48xf32>
    %297 = vector.shape_cast %296 : vector<48xf32> to vector<48x1xf32>
    %298 = tpu.reciprocal %297 {approx = true} : vector<48x1xf32> -> vector<48x1xf32>
    %299 = vector.broadcast %298 : vector<48x1xf32> to vector<48x48xf32>
    %300 = arith.mulf %295, %299 : vector<48x48xf32>
    %cst_132 = arith.constant dense<0.000000e+00> : vector<48x8xf32>
    %301 = tpu.matmul %300, %286, %cst_132 {dimension_numbers = #tpu.dot_dimension_numbers<[1], [0], [0], [1], [0, 0, 1, 1], [], []>} : vector<48x48xf32>, vector<48x8xf32>, vector<48x8xf32> -> vector<48x8xf32>
    %302 = tpu.concatenate %247, %265, %283, %301 in 1 : vector<48x8xf32>, vector<48x8xf32>, vector<48x8xf32>, vector<48x8xf32> -> vector<48x32xf32>
    %c1_133 = arith.constant 1 : index
    %c0_134 = arith.constant 0 : index
    %c0_135 = arith.constant 0 : index
    %303 = vector.load %arg6[%c1_133, %c0_134, %c0_135] : memref<2x32x32xf32, #tpu.memory_space<vmem>>, vector<1x32x32xf32>
    %304 = vector.shape_cast %303 : vector<1x32x32xf32> to vector<32x32xf32>
    %cst_136 = arith.constant dense<0.000000e+00> : vector<48x32xf32>
    %305 = tpu.matmul %302, %304, %cst_136 {dimension_numbers = #tpu.dot_dimension_numbers<[1], [0], [0], [1], [0, 0, 1, 1], [], []>} : vector<48x32xf32>, vector<32x32xf32>, vector<48x32xf32> -> vector<48x32xf32>
    %306 = arith.addf %198, %305 : vector<48x32xf32>
    %c1_137 = arith.constant 1 : index
    %c0_138 = arith.constant 0 : index
    %c0_139 = arith.constant 0 : index
    %c0_140 = arith.constant 0 : index
    %307 = vector.load %arg8[%c1_137, %c0_138, %c0_139, %c0_140] : memref<2x2x1x32xf32, #tpu.memory_space<vmem>>, vector<1x1x1x32xf32>
    %308 = vector.shape_cast %307 : vector<1x1x1x32xf32> to vector<1x32xf32>
    %309 = vector.broadcast %308 : vector<1x32xf32> to vector<48x32xf32>
    %310 = arith.addf %306, %309 : vector<48x32xf32>
    %c1_141 = arith.constant 1 : index
    %c2_142 = arith.constant 2 : index
    %c0_143 = arith.constant 0 : index
    %c0_144 = arith.constant 0 : index
    %311 = vector.load %arg3[%c1_141, %c2_142, %c0_143, %c0_144] : memref<2x4x1x32xf32, #tpu.memory_space<vmem>>, vector<1x1x1x32xf32>
    %312 = vector.shape_cast %311 : vector<1x1x1x32xf32> to vector<1x32xf32>
    %c1_145 = arith.constant 1 : index
    %c3_146 = arith.constant 3 : index
    %c0_147 = arith.constant 0 : index
    %c0_148 = arith.constant 0 : index
    %313 = vector.load %arg3[%c1_145, %c3_146, %c0_147, %c0_148] : memref<2x4x1x32xf32, #tpu.memory_space<vmem>>, vector<1x1x1x32xf32>
    %314 = vector.shape_cast %313 : vector<1x1x1x32xf32> to vector<1x32xf32>
    %cst_149 = arith.constant dense<0.000000e+00> : vector<48xf32>
    %315 = vector.multi_reduction <add>, %310, %cst_149 [1] : vector<48x32xf32> to vector<48xf32>
    %316 = vector.shape_cast %315 : vector<48xf32> to vector<48x1xf32>
    %cst_150 = arith.constant 3.200000e+01 : f32
    %317 = vector.broadcast %cst_150 : f32 to vector<48x1xf32>
    %318 = arith.divf %316, %317 : vector<48x1xf32>
    %319 = vector.broadcast %318 : vector<48x1xf32> to vector<48x32xf32>
    %320 = arith.subf %310, %319 : vector<48x32xf32>
    %321 = arith.mulf %320, %320 : vector<48x32xf32>
    %cst_151 = arith.constant dense<0.000000e+00> : vector<48xf32>
    %322 = vector.multi_reduction <add>, %321, %cst_151 [1] : vector<48x32xf32> to vector<48xf32>
    %323 = vector.shape_cast %322 : vector<48xf32> to vector<48x1xf32>
    %cst_152 = arith.constant 3.200000e+01 : f32
    %324 = vector.broadcast %cst_152 : f32 to vector<48x1xf32>
    %325 = arith.divf %323, %324 : vector<48x1xf32>
    %cst_153 = arith.constant 9.99999997E-7 : f32
    %326 = vector.broadcast %cst_153 : f32 to vector<48x1xf32>
    %327 = arith.addf %325, %326 : vector<48x1xf32>
    %328 = math.rsqrt %327 : vector<48x1xf32>
    %329 = vector.broadcast %328 : vector<48x1xf32> to vector<48x32xf32>
    %330 = arith.mulf %320, %329 : vector<48x32xf32>
    %331 = vector.broadcast %312 : vector<1x32xf32> to vector<48x32xf32>
    %332 = arith.mulf %330, %331 : vector<48x32xf32>
    %333 = vector.broadcast %314 : vector<1x32xf32> to vector<48x32xf32>
    %334 = arith.addf %332, %333 : vector<48x32xf32>
    %c1_154 = arith.constant 1 : index
    %c1_155 = arith.constant 1 : index
    %c0_156 = arith.constant 0 : index
    %c0_157 = arith.constant 0 : index
    %335 = vector.load %arg4[%c1_154, %c1_155, %c0_156, %c0_157] : memref<2x2x32x128xf32, #tpu.memory_space<vmem>>, vector<1x1x32x128xf32>
    %336 = vector.shape_cast %335 : vector<1x1x32x128xf32> to vector<32x128xf32>
    %cst_158 = arith.constant dense<0.000000e+00> : vector<48x128xf32>
    %337 = tpu.matmul %334, %336, %cst_158 {dimension_numbers = #tpu.dot_dimension_numbers<[1], [0], [0], [1], [0, 0, 1, 1], [], []>} : vector<48x32xf32>, vector<32x128xf32>, vector<48x128xf32> -> vector<48x128xf32>
    %c1_159 = arith.constant 1 : index
    %c1_160 = arith.constant 1 : index
    %c0_161 = arith.constant 0 : index
    %c0_162 = arith.constant 0 : index
    %338 = vector.load %arg5[%c1_159, %c1_160, %c0_161, %c0_162] : memref<2x2x1x128xf32, #tpu.memory_space<vmem>>, vector<1x1x1x128xf32>
    %339 = vector.shape_cast %338 : vector<1x1x1x128xf32> to vector<1x128xf32>
    %340 = vector.broadcast %339 : vector<1x128xf32> to vector<48x128xf32>
    %341 = arith.addf %337, %340 : vector<48x128xf32>
    %342 = arith.mulf %341, %341 : vector<48x128xf32>
    %343 = arith.mulf %341, %342 : vector<48x128xf32>
    %cst_163 = arith.constant 4.471500e-02 : f32
    %344 = vector.broadcast %cst_163 : f32 to vector<48x128xf32>
    %345 = arith.mulf %344, %343 : vector<48x128xf32>
    %346 = arith.addf %341, %345 : vector<48x128xf32>
    %cst_164 = arith.constant 0.797884583 : f32
    %347 = vector.broadcast %cst_164 : f32 to vector<48x128xf32>
    %348 = arith.mulf %347, %346 : vector<48x128xf32>
    %349 = math.tanh %348 : vector<48x128xf32>
    %cst_165 = arith.constant 1.000000e+00 : f32
    %350 = vector.broadcast %cst_165 : f32 to vector<48x128xf32>
    %351 = arith.addf %350, %349 : vector<48x128xf32>
    %cst_166 = arith.constant 5.000000e-01 : f32
    %352 = vector.broadcast %cst_166 : f32 to vector<48x128xf32>
    %353 = arith.mulf %352, %351 : vector<48x128xf32>
    %354 = arith.mulf %341, %353 : vector<48x128xf32>
    %c1_167 = arith.constant 1 : index
    %c0_168 = arith.constant 0 : index
    %c0_169 = arith.constant 0 : index
    %355 = vector.load %arg7[%c1_167, %c0_168, %c0_169] : memref<2x128x32xf32, #tpu.memory_space<vmem>>, vector<1x128x32xf32>
    %356 = vector.shape_cast %355 : vector<1x128x32xf32> to vector<128x32xf32>
    %cst_170 = arith.constant dense<0.000000e+00> : vector<48x32xf32>
    %357 = tpu.matmul %354, %356, %cst_170 {dimension_numbers = #tpu.dot_dimension_numbers<[1], [0], [0], [1], [0, 0, 1, 1], [], []>} : vector<48x128xf32>, vector<128x32xf32>, vector<48x32xf32> -> vector<48x32xf32>
    %358 = arith.addf %310, %357 : vector<48x32xf32>
    %c1_171 = arith.constant 1 : index
    %c1_172 = arith.constant 1 : index
    %c0_173 = arith.constant 0 : index
    %c0_174 = arith.constant 0 : index
    %359 = vector.load %arg8[%c1_171, %c1_172, %c0_173, %c0_174] : memref<2x2x1x32xf32, #tpu.memory_space<vmem>>, vector<1x1x1x32xf32>
    %360 = vector.shape_cast %359 : vector<1x1x1x32xf32> to vector<1x32xf32>
    %361 = vector.broadcast %360 : vector<1x32xf32> to vector<48x32xf32>
    %362 = arith.addf %358, %361 : vector<48x32xf32>
    %363 = vector.extract_strided_slice %362 {offsets = [16, 0], sizes = [1, 32], strides = [1, 1]} : vector<48x32xf32> to vector<1x32xf32>
    %364 = vector.extract_strided_slice %362 {offsets = [40, 0], sizes = [1, 32], strides = [1, 1]} : vector<48x32xf32> to vector<1x32xf32>
    %365 = tpu.concatenate %363, %364 in 0 : vector<1x32xf32>, vector<1x32xf32> -> vector<2x32xf32>
    %c0_175 = arith.constant 0 : index
    %c0_176 = arith.constant 0 : index
    %c0_177 = arith.constant 0 : index
    %366 = vector.load %arg9[%c0_175, %c0_176, %c0_177] : memref<4x1x32xf32, #tpu.memory_space<vmem>>, vector<1x1x32xf32>
    %367 = vector.shape_cast %366 : vector<1x1x32xf32> to vector<1x32xf32>
    %c1_178 = arith.constant 1 : index
    %c0_179 = arith.constant 0 : index
    %c0_180 = arith.constant 0 : index
    %368 = vector.load %arg9[%c1_178, %c0_179, %c0_180] : memref<4x1x32xf32, #tpu.memory_space<vmem>>, vector<1x1x32xf32>
    %369 = vector.shape_cast %368 : vector<1x1x32xf32> to vector<1x32xf32>
    %cst_181 = arith.constant dense<0.000000e+00> : vector<2xf32>
    %370 = vector.multi_reduction <add>, %365, %cst_181 [1] : vector<2x32xf32> to vector<2xf32>
    %371 = vector.shape_cast %370 : vector<2xf32> to vector<2x1xf32>
    %cst_182 = arith.constant 3.200000e+01 : f32
    %372 = vector.broadcast %cst_182 : f32 to vector<2x1xf32>
    %373 = arith.divf %371, %372 : vector<2x1xf32>
    %374 = vector.broadcast %373 : vector<2x1xf32> to vector<2x32xf32>
    %375 = arith.subf %365, %374 : vector<2x32xf32>
    %376 = arith.mulf %375, %375 : vector<2x32xf32>
    %cst_183 = arith.constant dense<0.000000e+00> : vector<2xf32>
    %377 = vector.multi_reduction <add>, %376, %cst_183 [1] : vector<2x32xf32> to vector<2xf32>
    %378 = vector.shape_cast %377 : vector<2xf32> to vector<2x1xf32>
    %cst_184 = arith.constant 3.200000e+01 : f32
    %379 = vector.broadcast %cst_184 : f32 to vector<2x1xf32>
    %380 = arith.divf %378, %379 : vector<2x1xf32>
    %cst_185 = arith.constant 9.99999997E-7 : f32
    %381 = vector.broadcast %cst_185 : f32 to vector<2x1xf32>
    %382 = arith.addf %380, %381 : vector<2x1xf32>
    %383 = math.rsqrt %382 : vector<2x1xf32>
    %384 = vector.broadcast %383 : vector<2x1xf32> to vector<2x32xf32>
    %385 = arith.mulf %375, %384 : vector<2x32xf32>
    %386 = vector.broadcast %367 : vector<1x32xf32> to vector<2x32xf32>
    %387 = arith.mulf %385, %386 : vector<2x32xf32>
    %388 = vector.broadcast %369 : vector<1x32xf32> to vector<2x32xf32>
    %389 = arith.addf %387, %388 : vector<2x32xf32>
    %c2_186 = arith.constant 2 : index
    %c0_187 = arith.constant 0 : index
    %c0_188 = arith.constant 0 : index
    %390 = vector.load %arg9[%c2_186, %c0_187, %c0_188] : memref<4x1x32xf32, #tpu.memory_space<vmem>>, vector<1x1x32xf32>
    %391 = vector.shape_cast %390 : vector<1x1x32xf32> to vector<1x32xf32>
    %c3_189 = arith.constant 3 : index
    %c0_190 = arith.constant 0 : index
    %c0_191 = arith.constant 0 : index
    %392 = vector.load %arg9[%c3_189, %c0_190, %c0_191] : memref<4x1x32xf32, #tpu.memory_space<vmem>>, vector<1x1x32xf32>
    %393 = vector.shape_cast %392 : vector<1x1x32xf32> to vector<1x32xf32>
    %cst_192 = arith.constant dense<0.000000e+00> : vector<2xf32>
    %394 = vector.multi_reduction <add>, %389, %cst_192 [1] : vector<2x32xf32> to vector<2xf32>
    %395 = vector.shape_cast %394 : vector<2xf32> to vector<2x1xf32>
    %cst_193 = arith.constant 3.200000e+01 : f32
    %396 = vector.broadcast %cst_193 : f32 to vector<2x1xf32>
    %397 = arith.divf %395, %396 : vector<2x1xf32>
    %398 = vector.broadcast %397 : vector<2x1xf32> to vector<2x32xf32>
    %399 = arith.subf %389, %398 : vector<2x32xf32>
    %400 = arith.mulf %399, %399 : vector<2x32xf32>
    %cst_194 = arith.constant dense<0.000000e+00> : vector<2xf32>
    %401 = vector.multi_reduction <add>, %400, %cst_194 [1] : vector<2x32xf32> to vector<2xf32>
    %402 = vector.shape_cast %401 : vector<2xf32> to vector<2x1xf32>
    %cst_195 = arith.constant 3.200000e+01 : f32
    %403 = vector.broadcast %cst_195 : f32 to vector<2x1xf32>
    %404 = arith.divf %402, %403 : vector<2x1xf32>
    %cst_196 = arith.constant 9.99999974E-6 : f32
    %405 = vector.broadcast %cst_196 : f32 to vector<2x1xf32>
    %406 = arith.addf %404, %405 : vector<2x1xf32>
    %407 = math.rsqrt %406 : vector<2x1xf32>
    %408 = vector.broadcast %407 : vector<2x1xf32> to vector<2x32xf32>
    %409 = arith.mulf %399, %408 : vector<2x32xf32>
    %410 = vector.broadcast %391 : vector<1x32xf32> to vector<2x32xf32>
    %411 = arith.mulf %409, %410 : vector<2x32xf32>
    %412 = vector.broadcast %393 : vector<1x32xf32> to vector<2x32xf32>
    %413 = arith.addf %411, %412 : vector<2x32xf32>
    %c0_197 = arith.constant 0 : index
    %c0_198 = arith.constant 0 : index
    %414 = vector.load %arg10[%c0_197, %c0_198] : memref<32x10xf32, #tpu.memory_space<vmem>>, vector<32x10xf32>
    %cst_199 = arith.constant dense<0.000000e+00> : vector<2x10xf32>
    %415 = tpu.matmul %413, %414, %cst_199 {dimension_numbers = #tpu.dot_dimension_numbers<[1], [0], [0], [1], [0, 0, 1, 1], [], []>} : vector<2x32xf32>, vector<32x10xf32>, vector<2x10xf32> -> vector<2x10xf32>
    %c0_200 = arith.constant 0 : index
    %c0_201 = arith.constant 0 : index
    %416 = vector.load %arg11[%c0_200, %c0_201] : memref<1x10xf32, #tpu.memory_space<vmem>>, vector<1x10xf32>
    %417 = vector.broadcast %416 : vector<1x10xf32> to vector<2x10xf32>
    %418 = arith.addf %415, %417 : vector<2x10xf32>
    %c0_202 = arith.constant 0 : index
    %c0_203 = arith.constant 0 : index
    %419 = vector.load %arg13[%c0_202, %c0_203] : memref<2x32xf32, #tpu.memory_space<vmem>>, vector<2x32xf32>
    tpu.vector_store %arg13[%c0_202, %c0_203], %389 {strides = array<i32>} : memref<2x32xf32, #tpu.memory_space<vmem>>, vector<2x32xf32>,
    %c0_204 = arith.constant 0 : index
    %c0_205 = arith.constant 0 : index
    %420 = vector.load %arg12[%c0_204, %c0_205] : memref<2x10xf32, #tpu.memory_space<vmem>>, vector<2x10xf32>
    tpu.vector_store %arg12[%c0_204, %c0_205], %418 {strides = array<i32>} : memref<2x10xf32, #tpu.memory_space<vmem>>, vector<2x10xf32>,
    return
  }
}

</mosaic_0001>

<llo_original>
// kernel: encoder_forward.1
$region0: #{encoder_forward.1}
  #allocation0 [shape = 'u32[]', space=smem, size = 0x4, offset = 0x4, fixed_abs, tag = 'smem constant byte address 0x4 - core index']
  #allocation1 [shape = 'u32[72,128]{1,0:T(1,128)}', space=vmem, size = 0x9000, scoped, tag = 'internal scratch']
  %s0 = inlined_call_operand.vmem [shape: f32[48,48], index: 0, kind: input, shape index: {}]
  %s1 = inlined_call_operand.vmem [shape: f32[48,32], index: 1, kind: input, shape index: {}]
  %s2 = inlined_call_operand.vmem [shape: f32[48,32], index: 2, kind: input, shape index: {}]
  %s3 = inlined_call_operand.vmem [shape: f32[2,4,1,32], index: 3, kind: input, shape index: {}]
  %s4 = inlined_call_operand.vmem [shape: f32[2,2,32,128], index: 4, kind: input, shape index: {}]
  %s5 = inlined_call_operand.vmem [shape: f32[2,2,1,128], index: 5, kind: input, shape index: {}]
  %s6 = inlined_call_operand.vmem [shape: f32[2,32,32], index: 6, kind: input, shape index: {}]
  %s7 = inlined_call_operand.vmem [shape: f32[2,128,32], index: 7, kind: input, shape index: {}]
  %s8 = inlined_call_operand.vmem [shape: f32[2,2,1,32], index: 8, kind: input, shape index: {}]
  %s9 = inlined_call_operand.vmem [shape: f32[4,1,32], index: 9, kind: input, shape index: {}]
  %s10 = inlined_call_operand.vmem [shape: f32[32,10], index: 10, kind: input, shape index: {}]
  %s11 = inlined_call_operand.vmem [shape: f32[1,10], index: 11, kind: input, shape index: {}]
  %s12 = inlined_call_operand.hbm [shape: f32[2,10], index: 12, kind: output, shape index: {0}]
  %s13 = inlined_call_operand.hbm [shape: f32[2,32], index: 13, kind: output, shape index: {1}]
  %14 = xla_tuple %s12, %s13
  %s15 = sld [smem:[#allocation0]]
  $region66: #{encoder_forward.1} parent=0
    _
  %s17 = ssub.s32 1, %s15
  %s18 = scalar_select 0, %s17, %s15
  $region1: #{encoder_forward.1} parent=0
    #allocation2 [shape = 'u8[1024]{0}', space=vmem, size = 0x400, scoped, tag = 'output window, operand 0, single buffered']
    #allocation3 [shape = 's32[1]{0}', space=sflag, size = 0x4, scoped, tag = 'scoped memory for encoder_forward.1']
    #allocation4 [shape = 'u8[1024]{0}', space=vmem, size = 0x400, scoped, tag = 'output window, operand 1, single buffered']
    #allocation5 [shape = 's32[1]{0}', space=sflag, size = 0x4, scoped, tag = 'scoped memory for encoder_forward.1']
    %19 = vsyncpa [#allocation3], 0
    %20 = vsyncpa [#allocation5], 0
    // Predicated region
    $region2: #{encoder_forward.1} parent=1 // pred_check
      _
    $region3: #{encoder_forward.1} parent=1 // pred_check_branch
      %22 = sbr.rel (0) target = $region5
    $region4: #{encoder_forward.1} parent=1 // pred_region
      _
    $region5: #{encoder_forward.1} parent=1 // pred_fallthru
      _
    // Predicated region
    $region6: #{encoder_forward.1} parent=1 // pred_check
      _
    $region7: #{encoder_forward.1} parent=1 // pred_check_branch
      %24 = sbr.rel (0) target = $region9
    $region8: #{encoder_forward.1} parent=1 // pred_region
      _
    $region9: #{encoder_forward.1} parent=1 // pred_fallthru
      _
    // Predicated region
    $region10: #{encoder_forward.1} parent=1 // pred_check
      _
    $region11: #{encoder_forward.1} parent=1 // pred_check_branch
      %26 = sbr.rel (0) target = $region13
    $region12: #{encoder_forward.1} parent=1 // pred_region
      _
    $region13: #{encoder_forward.1} parent=1 // pred_fallthru
      _
    // Predicated region
    $region14: #{encoder_forward.1} parent=1 // pred_check
      _
    $region15: #{encoder_forward.1} parent=1 // pred_check_branch
      %28 = sbr.rel (0) target = $region17
    $region16: #{encoder_forward.1} parent=1 // pred_region
      _
    $region17: #{encoder_forward.1} parent=1 // pred_fallthru
      _
    // Predicated region
    $region18: #{encoder_forward.1} parent=1 // pred_check
      _
    $region19: #{encoder_forward.1} parent=1 // pred_check_branch
      %30 = sbr.rel (0) target = $region21
    $region20: #{encoder_forward.1} parent=1 // pred_region
      _
    $region21: #{encoder_forward.1} parent=1 // pred_fallthru
      _
    // Predicated region
    $region22: #{encoder_forward.1} parent=1 // pred_check
      _
    $region23: #{encoder_forward.1} parent=1 // pred_check_branch
      %32 = sbr.rel (0) target = $region25
    $region24: #{encoder_forward.1} parent=1 // pred_region
      _
    $region25: #{encoder_forward.1} parent=1 // pred_fallthru
      _
    // Predicated region
    $region26: #{encoder_forward.1} parent=1 // pred_check
      _
    $region27: #{encoder_forward.1} parent=1 // pred_check_branch
      %34 = sbr.rel (0) target = $region29
    $region28: #{encoder_forward.1} parent=1 // pred_region
      _
    $region29: #{encoder_forward.1} parent=1 // pred_fallthru
      _
    // Predicated region
    $region30: #{encoder_forward.1} parent=1 // pred_check
      _
    $region31: #{encoder_forward.1} parent=1 // pred_check_branch
      %36 = sbr.rel (0) target = $region33
    $region32: #{encoder_forward.1} parent=1 // pred_region
      _
    $region33: #{encoder_forward.1} parent=1 // pred_fallthru
      _
    // Predicated region
    $region34: #{encoder_forward.1} parent=1 // pred_check
      _
    $region35: #{encoder_forward.1} parent=1 // pred_check_branch
      %38 = sbr.rel (0) target = $region37
    $region36: #{encoder_forward.1} parent=1 // pred_region
      _
    $region37: #{encoder_forward.1} parent=1 // pred_fallthru
      _
    // Predicated region
    $region38: #{encoder_forward.1} parent=1 // pred_check
      _
    $region39: #{encoder_forward.1} parent=1 // pred_check_branch
      %40 = sbr.rel (0) target = $region41
    $region40: #{encoder_forward.1} parent=1 // pred_region
      _
    $region41: #{encoder_forward.1} parent=1 // pred_fallthru
      _
    // Predicated region
    $region42: #{encoder_forward.1} parent=1 // pred_check
      _
    $region43: #{encoder_forward.1} parent=1 // pred_check_branch
      %42 = sbr.rel (0) target = $region45
    $region44: #{encoder_forward.1} parent=1 // pred_region
      _
    $region45: #{encoder_forward.1} parent=1 // pred_fallthru
      _
    // Predicated region
    $region46: #{encoder_forward.1} parent=1 // pred_check
      _
    $region47: #{encoder_forward.1} parent=1 // pred_check_branch
      %44 = sbr.rel (0) target = $region49
    $region48: #{encoder_forward.1} parent=1 // pred_region
      _
    $region49: #{encoder_forward.1} parent=1 // pred_fallthru
      _
    %v45 = vld [vmem:[%s0] sm:$0xff]
    %v46 = vld [vmem:[%s0 + $0x8] sm:$0xff]
    %v47 = vld [vmem:[%s0 + $0x10] sm:$0xff]
    %v48 = vld [vmem:[%s0 + $0x18] sm:$0xff]
    %v49 = vld [vmem:[%s0 + $0x20] sm:$0xff]
    %v50 = vld [vmem:[%s0 + $0x28] sm:$0xff]
    %v51 = vld [vmem:[%s1] sm:$0xff]
    %v52 = vld [vmem:[%s1 + $0x8] sm:$0xff]
    %v53 = vld [vmem:[%s1 + $0x10] sm:$0xff]
    %v54 = vld [vmem:[%s1 + $0x18] sm:$0xff]
    %v55 = vld [vmem:[%s1 + $0x20] sm:$0xff]
    %v56 = vld [vmem:[%s1 + $0x28] sm:$0xff]
    %v57 = vld [vmem:[%s2] sm:$0xff]
    %v58 = vld [vmem:[%s2 + $0x8] sm:$0xff]
    %v59 = vld [vmem:[%s2 + $0x10] sm:$0xff]
    %v60 = vld [vmem:[%s2 + $0x18] sm:$0xff]
    %v61 = vld [vmem:[%s2 + $0x20] sm:$0xff]
    %v62 = vld [vmem:[%s2 + $0x28] sm:$0xff]
    %vm63 = vcmask 392192
    %v65 = vsel %vm63, %v45, 0
    %v68 = vsel %vm63, %v46, 0
    %v71 = vsel %vm63, %v47, 0
    %v74 = vsel %vm63, %v48, 0
    %v77 = vsel %vm63, %v49, 0
    %v80 = vsel %vm63, %v50, 0
    %82 = vmatpush.msra.mxu0 0.0
    %83 = vmatpush.msra.mxu0 0.0
    %84 = vmatpush.msra.mxu0 0.0
    %85 = vmatpush.msra.mxu0 0.0
    %86 = vmatpush.msra.mxu0 0.0
    %87 = vmatpush.msra.mxu0 0.0
    %88 = vmatpush.msra.mxu0 0.0
    %89 = vmatpush.msra.mxu0 0.0
    %90 = vmatpush.msra.mxu0 0.0
    %91 = vmatpush.msra.mxu0 0.0
    %92 = vmatpush.msra.mxu0 %v56
    %93 = vmatpush.msra.mxu0 %v55
    %94 = vmatpush.msra.mxu0 %v54
    %95 = vmatpush.msra.mxu0 %v53
    %96 = vmatpush.msra.mxu0 %v52
    %97 = vmatpush.msra.mxu0 %v51
    %98 = vmatmul.f32.gmra.mxu0 %v65
    %v99 = vpop.f32.mrf.mxu0
    %v100 = vadd.f32 %v57, %v99
    %101 = vmatmul.f32.gmra.mxu0 %v68
    %v102 = vpop.f32.mrf.mxu0
    %v103 = vadd.f32 %v58, %v102
    %104 = vmatmul.f32.gmra.mxu0 %v71
    %v105 = vpop.f32.mrf.mxu0
    %v106 = vadd.f32 %v59, %v105
    %107 = vmatmul.f32.gmra.mxu0 %v74
    %v108 = vpop.f32.mrf.mxu0
    %v109 = vadd.f32 %v60, %v108
    %110 = vmatmul.f32.gmra.mxu0 %v77
    %v111 = vpop.f32.mrf.mxu0
    %v112 = vadd.f32 %v61, %v111
    %113 = vmatmul.f32.gmra.mxu0 %v80
    %v114 = vpop.f32.mrf.mxu0
    %v115 = vadd.f32 %v62, %v114
    %116 = vdwg.mxu0
    %v117 = vlaneseq
    %v118 = vshrl.u32 %v117, 7
    %v119 = vadd.s32 %v118, 8
    %v120 = vadd.s32 %v118, 16
    %v121 = vadd.s32 %v118, 24
    %v122 = vadd.s32 %v118, 32
    %v123 = vadd.s32 %v118, 40
    %v124 = vlaneseq
    %v125 = vand.u32 %v124, 127
    %vm126 = vcmp.ge.s32.totalorder %v118, 0
    %vm127 = vcmp.ge.s32.totalorder %v119, 0
    %vm128 = vcmp.ge.s32.totalorder %v120, 0
    %vm129 = vcmp.ge.s32.totalorder %v121, 0
    %vm130 = vcmp.ge.s32.totalorder %v122, 0
    %vm131 = vcmp.ge.s32.totalorder %v123, 0
    %vm132 = vcmp.lt.s32.totalorder %v118, 24
    %vm133 = vcmp.lt.s32.totalorder %v119, 24
    %vm134 = vcmp.lt.s32.totalorder %v120, 24
    %vm135 = vcmp.lt.s32.totalorder %v121, 24
    %vm136 = vcmp.lt.s32.totalorder %v122, 24
    %vm137 = vcmp.lt.s32.totalorder %v123, 24
    %vm138 = vmand %vm126, %vm132
    %vm139 = vmand %vm127, %vm133
    %vm140 = vmand %vm128, %vm134
    %vm141 = vmand %vm129, %vm135
    %vm142 = vmand %vm130, %vm136
    %vm143 = vmand %vm131, %vm137
    %vm144 = vcmp.ge.s32.totalorder %v125, 0
    %vm145 = vcmp.lt.s32.totalorder %v125, 17
    %vm146 = vmand %vm144, %vm145
    %vm147 = vmand %vm138, %vm146
    %vm148 = vmand %vm139, %vm146
    %vm149 = vmand %vm140, %vm146
    %vm150 = vmand %vm141, %vm146
    %vm151 = vmand %vm142, %vm146
    %vm152 = vmand %vm143, %vm146
    %vm153 = vcmp.ge.s32.totalorder %v118, 24
    %vm154 = vcmp.ge.s32.totalorder %v119, 24
    %vm155 = vcmp.ge.s32.totalorder %v120, 24
    %vm156 = vcmp.ge.s32.totalorder %v121, 24
    %vm157 = vcmp.ge.s32.totalorder %v122, 24
    %vm158 = vcmp.ge.s32.totalorder %v123, 24
    %vm159 = vcmp.lt.s32.totalorder %v118, 48
    %vm160 = vcmp.lt.s32.totalorder %v119, 48
    %vm161 = vcmp.lt.s32.totalorder %v120, 48
    %vm162 = vcmp.lt.s32.totalorder %v121, 48
    %vm163 = vcmp.lt.s32.totalorder %v122, 48
    %vm164 = vcmp.lt.s32.totalorder %v123, 48
    %vm165 = vmand %vm153, %vm159
    %vm166 = vmand %vm154, %vm160
    %vm167 = vmand %vm155, %vm161
    %vm168 = vmand %vm156, %vm162
    %vm169 = vmand %vm157, %vm163
    %vm170 = vmand %vm158, %vm164
    %vm171 = vcmp.ge.s32.totalorder %v125, 24
    %vm172 = vcmp.lt.s32.totalorder %v125, 41
    %vm173 = vmand %vm171, %vm172
    %vm174 = vmand %vm165, %vm173
    %vm175 = vmand %vm166, %vm173
    %vm176 = vmand %vm167, %vm173
    %vm177 = vmand %vm168, %vm173
    %vm178 = vmand %vm169, %vm173
    %vm179 = vmand %vm170, %vm173
    %vm180 = vmor %vm147, %vm174
    %vm181 = vmor %vm148, %vm175
    %vm182 = vmor %vm149, %vm176
    %vm183 = vmor %vm150, %vm177
    %vm184 = vmor %vm151, %vm178
    %vm185 = vmor %vm152, %vm179
    %v186 = vsel %vm180, 0.0, -1e+30
    %v187 = vsel %vm181, 0.0, -1e+30
    %v188 = vsel %vm182, 0.0, -1e+30
    %v189 = vsel %vm183, 0.0, -1e+30
    %v190 = vsel %vm184, 0.0, -1e+30
    %v191 = vsel %vm185, 0.0, -1e+30
    %v192 = vld [vmem:[%s3] sm:$0x1]
    %s193 = scalar_lea.vmem %s3, 1
    %v194 = vld [vmem:[%s193] sm:$0x1]
    %vm195 = vcmask 261120
    %v196 = vsel %vm195, %v100, 0.0
    %197 = vadd.xlane.f32.xlu0 %v196
    %v198 = vpop.xlane.xlu0 %197
    %v199 = vsel %vm195, %v103, 0.0
    %200 = vadd.xlane.f32.xlu0 %v199
    %v201 = vpop.xlane.xlu0 %200
    %v202 = vsel %vm195, %v106, 0.0
    %203 = vadd.xlane.f32.xlu0 %v202
    %v204 = vpop.xlane.xlu0 %203
    %v205 = vsel %vm195, %v109, 0.0
    %206 = vadd.xlane.f32.xlu0 %v205
    %v207 = vpop.xlane.xlu0 %206
    %v208 = vsel %vm195, %v112, 0.0
    %209 = vadd.xlane.f32.xlu0 %v208
    %v210 = vpop.xlane.xlu0 %209
    %v211 = vsel %vm195, %v115, 0.0
    %212 = vadd.xlane.f32.xlu0 %v211
    %v213 = vpop.xlane.xlu0 %212
    %v214 = vrcp.pop 32.0
    %v215 = vmul.f32 32.0, %v214
    %v216 = vsub.f32 1.0, %v215
    %v217 = vmul.f32 %v214, %v216
    %v218 = vadd.f32 %v214, %v217
    %vm219 = vweird.f32 %v214
    %v220 = vsel %vm219, %v214, %v218
    %v221 = vmul.f32 %v198, %v220
    %v222 = vmul.f32 %v201, %v220
    %v223 = vmul.f32 %v204, %v220
    %v224 = vmul.f32 %v207, %v220
    %v225 = vmul.f32 %v210, %v220
    %v226 = vmul.f32 %v213, %v220
    %v227 = vsub.f32 %v100, %v221
    %v228 = vsub.f32 %v103, %v222
    %v229 = vsub.f32 %v106, %v223
    %v230 = vsub.f32 %v109, %v224
    %v231 = vsub.f32 %v112, %v225
    %v232 = vsub.f32 %v115, %v226
    %v233 = vmul.f32 %v227, %v227
    %v234 = vmul.f32 %v228, %v228
    %v235 = vmul.f32 %v229, %v229
    %v236 = vmul.f32 %v230, %v230
    %v237 = vmul.f32 %v231, %v231
    %v238 = vmul.f32 %v232, %v232
    %v239 = vsel %vm195, %v233, 0.0
    %240 = vadd.xlane.f32.xlu0 %v239
    %v241 = vpop.xlane.xlu0 %240
    %v242 = vsel %vm195, %v234, 0.0
    %243 = vadd.xlane.f32.xlu0 %v242
    %v244 = vpop.xlane.xlu0 %243
    %v245 = vsel %vm195, %v235, 0.0
    %246 = vadd.xlane.f32.xlu0 %v245
    %v247 = vpop.xlane.xlu0 %246
    %v248 = vsel %vm195, %v236, 0.0
    %249 = vadd.xlane.f32.xlu0 %v248
    %v250 = vpop.xlane.xlu0 %249
    %v251 = vsel %vm195, %v237, 0.0
    %252 = vadd.xlane.f32.xlu0 %v251
    %v253 = vpop.xlane.xlu0 %252
    %v254 = vsel %vm195, %v238, 0.0
    %255 = vadd.xlane.f32.xlu0 %v254
    %v256 = vpop.xlane.xlu0 %255
    %v257 = vmul.f32 %v241, %v220
    %v258 = vmul.f32 %v244, %v220
    %v259 = vmul.f32 %v247, %v220
    %v260 = vmul.f32 %v250, %v220
    %v261 = vmul.f32 %v253, %v220
    %v262 = vmul.f32 %v256, %v220
    %v263 = vadd.f32 %v257, 1e-06
    %v264 = vadd.f32 %v258, 1e-06
    %v265 = vadd.f32 %v259, 1e-06
    %v266 = vadd.f32 %v260, 1e-06
    %v267 = vadd.f32 %v261, 1e-06
    %v268 = vadd.f32 %v262, 1e-06
    %v269 = vrsqrt.pop %v263
    %v270 = vmul.f32 %v269, %v263
    %v271 = vmul.f32 %v270, %v269
    %v272 = vmul.f32 0.5, %v271
    %v273 = vsub.f32 1.5, %v272
    %v274 = vmul.f32 %v269, %v273
    %vm275 = vweird.f32 %v263
    %vm276 = vweird.f32 %v269
    %vm277 = vmor %vm275, %vm276
    %v278 = vsel %vm277, %v269, %v274
    %v279 = vrsqrt.pop %v264
    %v280 = vmul.f32 %v279, %v264
    %v281 = vmul.f32 %v280, %v279
    %v282 = vmul.f32 0.5, %v281
    %v283 = vsub.f32 1.5, %v282
    %v284 = vmul.f32 %v279, %v283
    %vm285 = vweird.f32 %v264
    %vm286 = vweird.f32 %v279
    %vm287 = vmor %vm285, %vm286
    %v288 = vsel %vm287, %v279, %v284
    %v289 = vrsqrt.pop %v265
    %v290 = vmul.f32 %v289, %v265
    %v291 = vmul.f32 %v290, %v289
    %v292 = vmul.f32 0.5, %v291
    %v293 = vsub.f32 1.5, %v292
    %v294 = vmul.f32 %v289, %v293
    %vm295 = vweird.f32 %v265
    %vm296 = vweird.f32 %v289
    %vm297 = vmor %vm295, %vm296
    %v298 = vsel %vm297, %v289, %v294
    %v299 = vrsqrt.pop %v266
    %v300 = vmul.f32 %v299, %v266
    %v301 = vmul.f32 %v300, %v299
    %v302 = vmul.f32 0.5, %v301
    %v303 = vsub.f32 1.5, %v302
    %v304 = vmul.f32 %v299, %v303
    %vm305 = vweird.f32 %v266
    %vm306 = vweird.f32 %v299
    %vm307 = vmor %vm305, %vm306
    %v308 = vsel %vm307, %v299, %v304
    %v309 = vrsqrt.pop %v267
    %v310 = vmul.f32 %v309, %v267
    %v311 = vmul.f32 %v310, %v309
    %v312 = vmul.f32 0.5, %v311
    %v313 = vsub.f32 1.5, %v312
    %v314 = vmul.f32 %v309, %v313
    %vm315 = vweird.f32 %v267
    %vm316 = vweird.f32 %v309
    %vm317 = vmor %vm315, %vm316
    %v318 = vsel %vm317, %v309, %v314
    %v319 = vrsqrt.pop %v268
    %v320 = vmul.f32 %v319, %v268
    %v321 = vmul.f32 %v320, %v319
    %v322 = vmul.f32 0.5, %v321
    %v323 = vsub.f32 1.5, %v322
    %v324 = vmul.f32 %v319, %v323
    %vm325 = vweird.f32 %v268
    %vm326 = vweird.f32 %v319
    %vm327 = vmor %vm325, %vm326
    %v328 = vsel %vm327, %v319, %v324
    %v329 = vmul.f32 %v227, %v278
    %v330 = vmul.f32 %v228, %v288
    %v331 = vmul.f32 %v229, %v298
    %v332 = vmul.f32 %v230, %v308
    %v333 = vmul.f32 %v231, %v318
    %v334 = vmul.f32 %v232, %v328
    %v336 = vperm.slane %v192, 0
    %v338 = vmul.f32 %v329, %v336
    %v339 = vmul.f32 %v330, %v336
    %v340 = vmul.f32 %v331, %v336
    %v341 = vmul.f32 %v332, %v336
    %v342 = vmul.f32 %v333, %v336
    %v343 = vmul.f32 %v334, %v336
    %v345 = vperm.slane %v194, 0
    %v347 = vadd.f32 %v338, %v345
    %v348 = vadd.f32 %v339, %v345
    %v349 = vadd.f32 %v340, %v345
    %v350 = vadd.f32 %v341, %v345
    %v351 = vadd.f32 %v342, %v345
    %v352 = vadd.f32 %v343, %v345
    %v353 = vld [vmem:[%s4] sm:$0xff]
    %v354 = vld [vmem:[%s4 + $0x8] sm:$0xff]
    %v355 = vld [vmem:[%s4 + $0x10] sm:$0xff]
    %v356 = vld [vmem:[%s4 + $0x18] sm:$0xff]
    %v357 = vld [vmem:[%s5] sm:$0x1]
    %v359 = vperm.slane %v357, 0
    %v362 = vsel %vm195, %v347, 0
    %v365 = vsel %vm195, %v348, 0
    %v368 = vsel %vm195, %v349, 0
    %v371 = vsel %vm195, %v350, 0
    %v374 = vsel %vm195, %v351, 0
    %v377 = vsel %vm195, %v352, 0
    %379 = vmatpush.msra.mxu0 0.0
    %380 = vmatpush.msra.mxu0 0.0
    %381 = vmatpush.msra.mxu0 0.0
    %382 = vmatpush.msra.mxu0 0.0
    %383 = vmatpush.msra.mxu0 0.0
    %384 = vmatpush.msra.mxu0 0.0
    %385 = vmatpush.msra.mxu0 0.0
    %386 = vmatpush.msra.mxu0 0.0
    %387 = vmatpush.msra.mxu0 0.0
    %388 = vmatpush.msra.mxu0 0.0
    %389 = vmatpush.msra.mxu0 0.0
    %390 = vmatpush.msra.mxu0 0.0
    %391 = vmatpush.msra.mxu0 %v356
    %392 = vmatpush.msra.mxu0 %v355
    %393 = vmatpush.msra.mxu0 %v354
    %394 = vmatpush.msra.mxu0 %v353
    %395 = vmatmul.f32.gmra.mxu0 %v362
    %v396 = vpop.f32.mrf.mxu0
    %v397 = vadd.f32 %v359, %v396
    %398 = vmatmul.f32.gmra.mxu0 %v365
    %v399 = vpop.f32.mrf.mxu0
    %v400 = vadd.f32 %v359, %v399
    %401 = vmatmul.f32.gmra.mxu0 %v368
    %v402 = vpop.f32.mrf.mxu0
    %v403 = vadd.f32 %v359, %v402
    %404 = vmatmul.f32.gmra.mxu0 %v371
    %v405 = vpop.f32.mrf.mxu0
    %v406 = vadd.f32 %v359, %v405
    %407 = vmatmul.f32.gmra.mxu0 %v374
    %v408 = vpop.f32.mrf.mxu0
    %v409 = vadd.f32 %v359, %v408
    %410 = vmatmul.f32.gmra.mxu0 %v377
    %v411 = vpop.f32.mrf.mxu0
    %v412 = vadd.f32 %v359, %v411
    %413 = vdwg.mxu0
    %v414 = vmul.f32 %v397, 0.35355338
    %v415 = vmul.f32 %v400, 0.35355338
    %v416 = vmul.f32 %v403, 0.35355338
    %v417 = vmul.f32 %v406, 0.35355338
    %v418 = vmul.f32 %v409, 0.35355338
    %v419 = vmul.f32 %v412, 0.35355338
    %426 = vrot.lane.b32.xlu0 %v397, 96
    %v427 = vpop.permute.xlu0 %426
    %428 = vrot.lane.b32.xlu0 %v400, 96
    %v429 = vpop.permute.xlu0 %428
    %430 = vrot.lane.b32.xlu0 %v403, 96
    %v431 = vpop.permute.xlu0 %430
    %432 = vrot.lane.b32.xlu0 %v406, 96
    %v433 = vpop.permute.xlu0 %432
    %434 = vrot.lane.b32.xlu0 %v409, 96
    %v435 = vpop.permute.xlu0 %434
    %436 = vrot.lane.b32.xlu0 %v412, 96
    %v437 = vpop.permute.xlu0 %436
    %vm438 = vcmask 64512
    %v440 = vsel %vm438, %v414, 0
    %v443 = vsel %vm438, %v415, 0
    %v446 = vsel %vm438, %v416, 0
    %v449 = vsel %vm438, %v417, 0
    %v452 = vsel %vm438, %v418, 0
    %v455 = vsel %vm438, %v419, 0
    %v457 = vsel %vm438, %v427, 0
    %v459 = vsel %vm438, %v429, 0
    %v461 = vsel %vm438, %v431, 0
    %v463 = vsel %vm438, %v433, 0
    %v465 = vsel %vm438, %v435, 0
    %v467 = vsel %vm438, %v437, 0
    %469 = vmatpush.xpose.msra.mxu0 0.0
    %470 = vmatpush.xpose.msra.mxu0 0.0
    %471 = vmatpush.xpose.msra.mxu0 0.0
    %472 = vmatpush.xpose.msra.mxu0 0.0
    %473 = vmatpush.xpose.msra.mxu0 0.0
    %474 = vmatpush.xpose.msra.mxu0 0.0
    %475 = vmatpush.xpose.msra.mxu0 0.0
    %476 = vmatpush.xpose.msra.mxu0 0.0
    %477 = vmatpush.xpose.msra.mxu0 0.0
    %478 = vmatpush.xpose.msra.mxu0 0.0
    %479 = vmatpush.xpose.msra.mxu0 %v467
    %480 = vmatpush.xpose.msra.mxu0 %v465
    %481 = vmatpush.xpose.msra.mxu0 %v463
    %482 = vmatpush.xpose.msra.mxu0 %v461
    %483 = vmatpush.xpose.msra.mxu0 %v459
    %484 = vmatpush.xpose.msra.mxu0 %v457
    %485 = vmatmul.f32.gmra.mxu0 %v440
    %v486 = vpop.f32.mrf.mxu0
    %v487 = vadd.f32 %v186, %v486
    %488 = vmatmul.f32.gmra.mxu0 %v443
    %v489 = vpop.f32.mrf.mxu0
    %v490 = vadd.f32 %v187, %v489
    %491 = vmatmul.f32.gmra.mxu0 %v446
    %v492 = vpop.f32.mrf.mxu0
    %v493 = vadd.f32 %v188, %v492
    %494 = vmatmul.f32.gmra.mxu0 %v449
    %v495 = vpop.f32.mrf.mxu0
    %v496 = vadd.f32 %v189, %v495
    %497 = vmatmul.f32.gmra.mxu0 %v452
    %v498 = vpop.f32.mrf.mxu0
    %v499 = vadd.f32 %v190, %v498
    %500 = vmatmul.f32.gmra.mxu0 %v455
    %v501 = vpop.f32.mrf.mxu0
    %v502 = vadd.f32 %v191, %v501
    %503 = vdwg.mxu0
    %v504 = vsel %vm63, %v487, -inf
    %505 = vmax.xlane.f32.xlu0 %v504
    %v506 = vpop.xlane.xlu0 %505
    %v507 = vsel %vm63, %v490, -inf
    %508 = vmax.xlane.f32.xlu0 %v507
    %v509 = vpop.xlane.xlu0 %508
    %v510 = vsel %vm63, %v493, -inf
    %511 = vmax.xlane.f32.xlu0 %v510
    %v512 = vpop.xlane.xlu0 %511
    %v513 = vsel %vm63, %v496, -inf
    %514 = vmax.xlane.f32.xlu0 %v513
    %v515 = vpop.xlane.xlu0 %514
    %v516 = vsel %vm63, %v499, -inf
    %517 = vmax.xlane.f32.xlu0 %v516
    %v518 = vpop.xlane.xlu0 %517
    %v519 = vsel %vm63, %v502, -inf
    %520 = vmax.xlane.f32.xlu0 %v519
    %v521 = vpop.xlane.xlu0 %520
    %v522 = vsub.f32 %v487, %v506
    %v523 = vsub.f32 %v490, %v509
    %v524 = vsub.f32 %v493, %v512
    %v525 = vsub.f32 %v496, %v515
    %v526 = vsub.f32 %v499, %v518
    %v527 = vsub.f32 %v502, %v521
    %v528 = vmul.f32 %v522, 1.442695
    %v529 = vpow.pop %v528
    %v530 = vmul.f32 %v523, 1.442695
    %v531 = vpow.pop %v530
    %v532 = vmul.f32 %v524, 1.442695
    %v533 = vpow.pop %v532
    %v534 = vmul.f32 %v525, 1.442695
    %v535 = vpow.pop %v534
    %v536 = vmul.f32 %v526, 1.442695
    %v537 = vpow.pop %v536
    %v538 = vmul.f32 %v527, 1.442695
    %v539 = vpow.pop %v538
    %v540 = vsel %vm63, %v529, 0.0
    %541 = vadd.xlane.f32.xlu0 %v540
    %v542 = vpop.xlane.xlu0 %541
    %v543 = vsel %vm63, %v531, 0.0
    %544 = vadd.xlane.f32.xlu0 %v543
    %v545 = vpop.xlane.xlu0 %544
    %v546 = vsel %vm63, %v533, 0.0
    %547 = vadd.xlane.f32.xlu0 %v546
    %v548 = vpop.xlane.xlu0 %547
    %v549 = vsel %vm63, %v535, 0.0
    %550 = vadd.xlane.f32.xlu0 %v549
    %v551 = vpop.xlane.xlu0 %550
    %v552 = vsel %vm63, %v537, 0.0
    %553 = vadd.xlane.f32.xlu0 %v552
    %v554 = vpop.xlane.xlu0 %553
    %v555 = vsel %vm63, %v539, 0.0
    %556 = vadd.xlane.f32.xlu0 %v555
    %v557 = vpop.xlane.xlu0 %556
    %v558 = vrcp.pop %v542
    %v559 = vrcp.pop %v545
    %v560 = vrcp.pop %v548
    %v561 = vrcp.pop %v551
    %v562 = vrcp.pop %v554
    %v563 = vrcp.pop %v557
    %v564 = vmul.f32 %v529, %v558
    %v565 = vmul.f32 %v531, %v559
    %v566 = vmul.f32 %v533, %v560
    %v567 = vmul.f32 %v535, %v561
    %v568 = vmul.f32 %v537, %v562
    %v569 = vmul.f32 %v539, %v563
    %570 = vrot.lane.b32.xlu0 %v397, 64
    %v571 = vpop.permute.xlu0 %570
    %572 = vrot.lane.b32.xlu0 %v400, 64
    %v573 = vpop.permute.xlu0 %572
    %574 = vrot.lane.b32.xlu0 %v403, 64
    %v575 = vpop.permute.xlu0 %574
    %576 = vrot.lane.b32.xlu0 %v406, 64
    %v577 = vpop.permute.xlu0 %576
    %578 = vrot.lane.b32.xlu0 %v409, 64
    %v579 = vpop.permute.xlu0 %578
    %580 = vrot.lane.b32.xlu0 %v412, 64
    %v581 = vpop.permute.xlu0 %580
    %v589 = vsel %vm63, %v564, 0
    %v592 = vsel %vm63, %v565, 0
    %v595 = vsel %vm63, %v566, 0
    %v598 = vsel %vm63, %v567, 0
    %v601 = vsel %vm63, %v568, 0
    %v604 = vsel %vm63, %v569, 0
    %606 = vmatpush.msra.mxu0 0.0
    %607 = vmatpush.msra.mxu0 0.0
    %608 = vmatpush.msra.mxu0 0.0
    %609 = vmatpush.msra.mxu0 0.0
    %610 = vmatpush.msra.mxu0 0.0
    %611 = vmatpush.msra.mxu0 0.0
    %612 = vmatpush.msra.mxu0 0.0
    %613 = vmatpush.msra.mxu0 0.0
    %614 = vmatpush.msra.mxu0 0.0
    %615 = vmatpush.msra.mxu0 0.0
    %616 = vmatpush.msra.mxu0 %v581
    %617 = vmatpush.msra.mxu0 %v579
    %618 = vmatpush.msra.mxu0 %v577
    %619 = vmatpush.msra.mxu0 %v575
    %620 = vmatpush.msra.mxu0 %v573
    %621 = vmatpush.msra.mxu0 %v571
    %622 = vmatmul.f32.gmra.mxu0 %v589
    %v623 = vpop.f32.mrf.mxu0
    %v624 = vadd.f32 0.0, %v623
    %625 = vmatmul.f32.gmra.mxu0 %v592
    %v626 = vpop.f32.mrf.mxu0
    %v627 = vadd.f32 0.0, %v626
    %628 = vmatmul.f32.gmra.mxu0 %v595
    %v629 = vpop.f32.mrf.mxu0
    %v630 = vadd.f32 0.0, %v629
    %631 = vmatmul.f32.gmra.mxu0 %v598
    %v632 = vpop.f32.mrf.mxu0
    %v633 = vadd.f32 0.0, %v632
    %634 = vmatmul.f32.gmra.mxu0 %v601
    %v635 = vpop.f32.mrf.mxu0
    %v636 = vadd.f32 0.0, %v635
    %637 = vmatmul.f32.gmra.mxu0 %v604
    %v638 = vpop.f32.mrf.mxu0
    %v639 = vadd.f32 0.0, %v638
    %640 = vdwg.mxu0
    %641 = vrot.lane.b32.xlu0 %v414, 120
    %v642 = vpop.permute.xlu0 %641
    %643 = vrot.lane.b32.xlu0 %v415, 120
    %v644 = vpop.permute.xlu0 %643
    %645 = vrot.lane.b32.xlu0 %v416, 120
    %v646 = vpop.permute.xlu0 %645
    %647 = vrot.lane.b32.xlu0 %v417, 120
    %v648 = vpop.permute.xlu0 %647
    %649 = vrot.lane.b32.xlu0 %v418, 120
    %v650 = vpop.permute.xlu0 %649
    %651 = vrot.lane.b32.xlu0 %v419, 120
    %v652 = vpop.permute.xlu0 %651
    %653 = vrot.lane.b32.xlu0 %v397, 88
    %v654 = vpop.permute.xlu0 %653
    %655 = vrot.lane.b32.xlu0 %v400, 88
    %v656 = vpop.permute.xlu0 %655
    %657 = vrot.lane.b32.xlu0 %v403, 88
    %v658 = vpop.permute.xlu0 %657
    %659 = vrot.lane.b32.xlu0 %v406, 88
    %v660 = vpop.permute.xlu0 %659
    %661 = vrot.lane.b32.xlu0 %v409, 88
    %v662 = vpop.permute.xlu0 %661
    %663 = vrot.lane.b32.xlu0 %v412, 88
    %v664 = vpop.permute.xlu0 %663
    %v665 = vsel %vm438, %v642, 0
    %v667 = vsel %vm438, %v644, 0
    %v669 = vsel %vm438, %v646, 0
    %v671 = vsel %vm438, %v648, 0
    %v673 = vsel %vm438, %v650, 0
    %v675 = vsel %vm438, %v652, 0
    %v677 = vsel %vm438, %v654, 0
    %v679 = vsel %vm438, %v656, 0
    %v681 = vsel %vm438, %v658, 0
    %v683 = vsel %vm438, %v660, 0
    %v685 = vsel %vm438, %v662, 0
    %v687 = vsel %vm438, %v664, 0
    %689 = vmatpush.xpose.msra.mxu0 0.0
    %690 = vmatpush.xpose.msra.mxu0 0.0
    %691 = vmatpush.xpose.msra.mxu0 0.0
    %692 = vmatpush.xpose.msra.mxu0 0.0
    %693 = vmatpush.xpose.msra.mxu0 0.0
    %694 = vmatpush.xpose.msra.mxu0 0.0
    %695 = vmatpush.xpose.msra.mxu0 0.0
    %696 = vmatpush.xpose.msra.mxu0 0.0
    %697 = vmatpush.xpose.msra.mxu0 0.0
    %698 = vmatpush.xpose.msra.mxu0 0.0
    %699 = vmatpush.xpose.msra.mxu0 %v687
    %700 = vmatpush.xpose.msra.mxu0 %v685
    %701 = vmatpush.xpose.msra.mxu0 %v683
    %702 = vmatpush.xpose.msra.mxu0 %v681
    %703 = vmatpush.xpose.msra.mxu0 %v679
    %704 = vmatpush.xpose.msra.mxu0 %v677
    %705 = vmatmul.f32.gmra.mxu0 %v665
    %v706 = vpop.f32.mrf.mxu0
    %v707 = vadd.f32 %v186, %v706
    %708 = vmatmul.f32.gmra.mxu0 %v667
    %v709 = vpop.f32.mrf.mxu0
    %v710 = vadd.f32 %v187, %v709
    %711 = vmatmul.f32.gmra.mxu0 %v669
    %v712 = vpop.f32.mrf.mxu0
    %v713 = vadd.f32 %v188, %v712
    %714 = vmatmul.f32.gmra.mxu0 %v671
    %v715 = vpop.f32.mrf.mxu0
    %v716 = vadd.f32 %v189, %v715
    %717 = vmatmul.f32.gmra.mxu0 %v673
    %v718 = vpop.f32.mrf.mxu0
    %v719 = vadd.f32 %v190, %v718
    %720 = vmatmul.f32.gmra.mxu0 %v675
    %v721 = vpop.f32.mrf.mxu0
    %v722 = vadd.f32 %v191, %v721
    %723 = vdwg.mxu0
    %v724 = vsel %vm63, %v707, -inf
    %725 = vmax.xlane.f32.xlu0 %v724
    %v726 = vpop.xlane.xlu0 %725
    %v727 = vsel %vm63, %v710, -inf
    %728 = vmax.xlane.f32.xlu0 %v727
    %v729 = vpop.xlane.xlu0 %728
    %v730 = vsel %vm63, %v713, -inf
    %731 = vmax.xlane.f32.xlu0 %v730
    %v732 = vpop.xlane.xlu0 %731
    %v733 = vsel %vm63, %v716, -inf
    %734 = vmax.xlane.f32.xlu0 %v733
    %v735 = vpop.xlane.xlu0 %734
    %v736 = vsel %vm63, %v719, -inf
    %737 = vmax.xlane.f32.xlu0 %v736
    %v738 = vpop.xlane.xlu0 %737
    %v739 = vsel %vm63, %v722, -inf
    %740 = vmax.xlane.f32.xlu0 %v739
    %v741 = vpop.xlane.xlu0 %740
    %v742 = vsub.f32 %v707, %v726
    %v743 = vsub.f32 %v710, %v729
    %v744 = vsub.f32 %v713, %v732
    %v745 = vsub.f32 %v716, %v735
    %v746 = vsub.f32 %v719, %v738
    %v747 = vsub.f32 %v722, %v741
    %v748 = vmul.f32 %v742, 1.442695
    %v749 = vpow.pop %v748
    %v750 = vmul.f32 %v743, 1.442695
    %v751 = vpow.pop %v750
    %v752 = vmul.f32 %v744, 1.442695
    %v753 = vpow.pop %v752
    %v754 = vmul.f32 %v745, 1.442695
    %v755 = vpow.pop %v754
    %v756 = vmul.f32 %v746, 1.442695
    %v757 = vpow.pop %v756
    %v758 = vmul.f32 %v747, 1.442695
    %v759 = vpow.pop %v758
    %v760 = vsel %vm63, %v749, 0.0
    %761 = vadd.xlane.f32.xlu0 %v760
    %v762 = vpop.xlane.xlu0 %761
    %v763 = vsel %vm63, %v751, 0.0
    %764 = vadd.xlane.f32.xlu0 %v763
    %v765 = vpop.xlane.xlu0 %764
    %v766 = vsel %vm63, %v753, 0.0
    %767 = vadd.xlane.f32.xlu0 %v766
    %v768 = vpop.xlane.xlu0 %767
    %v769 = vsel %vm63, %v755, 0.0
    %770 = vadd.xlane.f32.xlu0 %v769
    %v771 = vpop.xlane.xlu0 %770
    %v772 = vsel %vm63, %v757, 0.0
    %773 = vadd.xlane.f32.xlu0 %v772
    %v774 = vpop.xlane.xlu0 %773
    %v775 = vsel %vm63, %v759, 0.0
    %776 = vadd.xlane.f32.xlu0 %v775
    %v777 = vpop.xlane.xlu0 %776
    %v778 = vrcp.pop %v762
    %v779 = vrcp.pop %v765
    %v780 = vrcp.pop %v768
    %v781 = vrcp.pop %v771
    %v782 = vrcp.pop %v774
    %v783 = vrcp.pop %v777
    %v784 = vmul.f32 %v749, %v778
    %v785 = vmul.f32 %v751, %v779
    %v786 = vmul.f32 %v753, %v780
    %v787 = vmul.f32 %v755, %v781
    %v788 = vmul.f32 %v757, %v782
    %v789 = vmul.f32 %v759, %v783
    %790 = vrot.lane.b32.xlu0 %v397, 56
    %v791 = vpop.permute.xlu0 %790
    %792 = vrot.lane.b32.xlu0 %v400, 56
    %v793 = vpop.permute.xlu0 %792
    %794 = vrot.lane.b32.xlu0 %v403, 56
    %v795 = vpop.permute.xlu0 %794
    %796 = vrot.lane.b32.xlu0 %v406, 56
    %v797 = vpop.permute.xlu0 %796
    %798 = vrot.lane.b32.xlu0 %v409, 56
    %v799 = vpop.permute.xlu0 %798
    %800 = vrot.lane.b32.xlu0 %v412, 56
    %v801 = vpop.permute.xlu0 %800
    %v809 = vsel %vm63, %v784, 0
    %v812 = vsel %vm63, %v785, 0
    %v815 = vsel %vm63, %v786, 0
    %v818 = vsel %vm63, %v787, 0
    %v821 = vsel %vm63, %v788, 0
    %v824 = vsel %vm63, %v789, 0
    %826 = vmatpush.msra.mxu0 0.0
    %827 = vmatpush.msra.mxu0 0.0
    %828 = vmatpush.msra.mxu0 0.0
    %829 = vmatpush.msra.mxu0 0.0
    %830 = vmatpush.msra.mxu0 0.0
    %831 = vmatpush.msra.mxu0 0.0
    %832 = vmatpush.msra.mxu0 0.0
    %833 = vmatpush.msra.mxu0 0.0
    %834 = vmatpush.msra.mxu0 0.0
    %835 = vmatpush.msra.mxu0 0.0
    %836 = vmatpush.msra.mxu0 %v801
    %837 = vmatpush.msra.mxu0 %v799
    %838 = vmatpush.msra.mxu0 %v797
    %839 = vmatpush.msra.mxu0 %v795
    %840 = vmatpush.msra.mxu0 %v793
    %841 = vmatpush.msra.mxu0 %v791
    %842 = vmatmul.f32.gmra.mxu0 %v809
    %v843 = vpop.f32.mrf.mxu0
    %v844 = vadd.f32 0.0, %v843
    %845 = vmatmul.f32.gmra.mxu0 %v812
    %v846 = vpop.f32.mrf.mxu0
    %v847 = vadd.f32 0.0, %v846
    %848 = vmatmul.f32.gmra.mxu0 %v815
    %v849 = vpop.f32.mrf.mxu0
    %v850 = vadd.f32 0.0, %v849
    %851 = vmatmul.f32.gmra.mxu0 %v818
    %v852 = vpop.f32.mrf.mxu0
    %v853 = vadd.f32 0.0, %v852
    %854 = vmatmul.f32.gmra.mxu0 %v821
    %v855 = vpop.f32.mrf.mxu0
    %v856 = vadd.f32 0.0, %v855
    %857 = vmatmul.f32.gmra.mxu0 %v824
    %v858 = vpop.f32.mrf.mxu0
    %v859 = vadd.f32 0.0, %v858
    %860 = vdwg.mxu0
    %861 = vrot.lane.b32.xlu0 %v414, 112
    %v862 = vpop.permute.xlu0 %861
    %863 = vrot.lane.b32.xlu0 %v415, 112
    %v864 = vpop.permute.xlu0 %863
    %865 = vrot.lane.b32.xlu0 %v416, 112
    %v866 = vpop.permute.xlu0 %865
    %867 = vrot.lane.b32.xlu0 %v417, 112
    %v868 = vpop.permute.xlu0 %867
    %869 = vrot.lane.b32.xlu0 %v418, 112
    %v870 = vpop.permute.xlu0 %869
    %871 = vrot.lane.b32.xlu0 %v419, 112
    %v872 = vpop.permute.xlu0 %871
    %873 = vrot.lane.b32.xlu0 %v397, 80
    %v874 = vpop.permute.xlu0 %873
    %875 = vrot.lane.b32.xlu0 %v400, 80
    %v876 = vpop.permute.xlu0 %875
    %877 = vrot.lane.b32.xlu0 %v403, 80
    %v878 = vpop.permute.xlu0 %877
    %879 = vrot.lane.b32.xlu0 %v406, 80
    %v880 = vpop.permute.xlu0 %879
    %881 = vrot.lane.b32.xlu0 %v409, 80
    %v882 = vpop.permute.xlu0 %881
    %883 = vrot.lane.b32.xlu0 %v412, 80
    %v884 = vpop.permute.xlu0 %883
    %v885 = vsel %vm438, %v862, 0
    %v887 = vsel %vm438, %v864, 0
    %v889 = vsel %vm438, %v866, 0
    %v891 = vsel %vm438, %v868, 0
    %v893 = vsel %vm438, %v870, 0
    %v895 = vsel %vm438, %v872, 0
    %v897 = vsel %vm438, %v874, 0
    %v899 = vsel %vm438, %v876, 0
    %v901 = vsel %vm438, %v878, 0
    %v903 = vsel %vm438, %v880, 0
    %v905 = vsel %vm438, %v882, 0
    %v907 = vsel %vm438, %v884, 0
    %909 = vmatpush.xpose.msra.mxu0 0.0
    %910 = vmatpush.xpose.msra.mxu0 0.0
    %911 = vmatpush.xpose.msra.mxu0 0.0
    %912 = vmatpush.xpose.msra.mxu0 0.0
    %913 = vmatpush.xpose.msra.mxu0 0.0
    %914 = vmatpush.xpose.msra.mxu0 0.0
    %915 = vmatpush.xpose.msra.mxu0 0.0
    %916 = vmatpush.xpose.msra.mxu0 0.0
    %917 = vmatpush.xpose.msra.mxu0 0.0
    %918 = vmatpush.xpose.msra.mxu0 0.0
    %919 = vmatpush.xpose.msra.mxu0 %v907
    %920 = vmatpush.xpose.msra.mxu0 %v905
    %921 = vmatpush.xpose.msra.mxu0 %v903
    %922 = vmatpush.xpose.msra.mxu0 %v901
    %923 = vmatpush.xpose.msra.mxu0 %v899
    %924 = vmatpush.xpose.msra.mxu0 %v897
    %925 = vmatmul.f32.gmra.mxu0 %v885
    %v926 = vpop.f32.mrf.mxu0
    %v927 = vadd.f32 %v186, %v926
    %928 = vmatmul.f32.gmra.mxu0 %v887
    %v929 = vpop.f32.mrf.mxu0
    %v930 = vadd.f32 %v187, %v929
    %931 = vmatmul.f32.gmra.mxu0 %v889
    %v932 = vpop.f32.mrf.mxu0
    %v933 = vadd.f32 %v188, %v932
    %934 = vmatmul.f32.gmra.mxu0 %v891
    %v935 = vpop.f32.mrf.mxu0
    %v936 = vadd.f32 %v189, %v935
    %937 = vmatmul.f32.gmra.mxu0 %v893
    %v938 = vpop.f32.mrf.mxu0
    %v939 = vadd.f32 %v190, %v938
    %940 = vmatmul.f32.gmra.mxu0 %v895
    %v941 = vpop.f32.mrf.mxu0
    %v942 = vadd.f32 %v191, %v941
    %943 = vdwg.mxu0
    %v944 = vsel %vm63, %v927, -inf
    %945 = vmax.xlane.f32.xlu0 %v944
    %v946 = vpop.xlane.xlu0 %945
    %v947 = vsel %vm63, %v930, -inf
    %948 = vmax.xlane.f32.xlu0 %v947
    %v949 = vpop.xlane.xlu0 %948
    %v950 = vsel %vm63, %v933, -inf
    %951 = vmax.xlane.f32.xlu0 %v950
    %v952 = vpop.xlane.xlu0 %951
    %v953 = vsel %vm63, %v936, -inf
    %954 = vmax.xlane.f32.xlu0 %v953
    %v955 = vpop.xlane.xlu0 %954
    %v956 = vsel %vm63, %v939, -inf
    %957 = vmax.xlane.f32.xlu0 %v956
    %v958 = vpop.xlane.xlu0 %957
    %v959 = vsel %vm63, %v942, -inf
    %960 = vmax.xlane.f32.xlu0 %v959
    %v961 = vpop.xlane.xlu0 %960
    %v962 = vsub.f32 %v927, %v946
    %v963 = vsub.f32 %v930, %v949
    %v964 = vsub.f32 %v933, %v952
    %v965 = vsub.f32 %v936, %v955
    %v966 = vsub.f32 %v939, %v958
    %v967 = vsub.f32 %v942, %v961
    %v968 = vmul.f32 %v962, 1.442695
    %v969 = vpow.pop %v968
    %v970 = vmul.f32 %v963, 1.442695
    %v971 = vpow.pop %v970
    %v972 = vmul.f32 %v964, 1.442695
    %v973 = vpow.pop %v972
    %v974 = vmul.f32 %v965, 1.442695
    %v975 = vpow.pop %v974
    %v976 = vmul.f32 %v966, 1.442695
    %v977 = vpow.pop %v976
    %v978 = vmul.f32 %v967, 1.442695
    %v979 = vpow.pop %v978
    %v980 = vsel %vm63, %v969, 0.0
    %981 = vadd.xlane.f32.xlu0 %v980
    %v982 = vpop.xlane.xlu0 %981
    %v983 = vsel %vm63, %v971, 0.0
    %984 = vadd.xlane.f32.xlu0 %v983
    %v985 = vpop.xlane.xlu0 %984
    %v986 = vsel %vm63, %v973, 0.0
    %987 = vadd.xlane.f32.xlu0 %v986
    %v988 = vpop.xlane.xlu0 %987
    %v989 = vsel %vm63, %v975, 0.0
    %990 = vadd.xlane.f32.xlu0 %v989
    %v991 = vpop.xlane.xlu0 %990
    %v992 = vsel %vm63, %v977, 0.0
    %993 = vadd.xlane.f32.xlu0 %v992
    %v994 = vpop.xlane.xlu0 %993
    %v995 = vsel %vm63, %v979, 0.0
    %996 = vadd.xlane.f32.xlu0 %v995
    %v997 = vpop.xlane.xlu0 %996
    %v998 = vrcp.pop %v982
    %v999 = vrcp.pop %v985
    %v1000 = vrcp.pop %v988
    %v1001 = vrcp.pop %v991
    %v1002 = vrcp.pop %v994
    %v1003 = vrcp.pop %v997
    %v1004 = vmul.f32 %v969, %v998
    %v1005 = vmul.f32 %v971, %v999
    %v1006 = vmul.f32 %v973, %v1000
    %v1007 = vmul.f32 %v975, %v1001
    %v1008 = vmul.f32 %v977, %v1002
    %v1009 = vmul.f32 %v979, %v1003
    %1010 = vrot.lane.b32.xlu0 %v397, 48
    %v1011 = vpop.permute.xlu0 %1010
    %1012 = vrot.lane.b32.xlu0 %v400, 48
    %v1013 = vpop.permute.xlu0 %1012
    %1014 = vrot.lane.b32.xlu0 %v403, 48
    %v1015 = vpop.permute.xlu0 %1014
    %1016 = vrot.lane.b32.xlu0 %v406, 48
    %v1017 = vpop.permute.xlu0 %1016
    %1018 = vrot.lane.b32.xlu0 %v409, 48
    %v1019 = vpop.permute.xlu0 %1018
    %1020 = vrot.lane.b32.xlu0 %v412, 48
    %v1021 = vpop.permute.xlu0 %1020
    %v1029 = vsel %vm63, %v1004, 0
    %v1032 = vsel %vm63, %v1005, 0
    %v1035 = vsel %vm63, %v1006, 0
    %v1038 = vsel %vm63, %v1007, 0
    %v1041 = vsel %vm63, %v1008, 0
    %v1044 = vsel %vm63, %v1009, 0
    %1046 = vmatpush.msra.mxu0 0.0
    %1047 = vmatpush.msra.mxu0 0.0
    %1048 = vmatpush.msra.mxu0 0.0
    %1049 = vmatpush.msra.mxu0 0.0
    %1050 = vmatpush.msra.mxu0 0.0
    %1051 = vmatpush.msra.mxu0 0.0
    %1052 = vmatpush.msra.mxu0 0.0
    %1053 = vmatpush.msra.mxu0 0.0
    %1054 = vmatpush.msra.mxu0 0.0
    %1055 = vmatpush.msra.mxu0 0.0
    %1056 = vmatpush.msra.mxu0 %v1021
    %1057 = vmatpush.msra.mxu0 %v1019
    %1058 = vmatpush.msra.mxu0 %v1017
    %1059 = vmatpush.msra.mxu0 %v1015
    %1060 = vmatpush.msra.mxu0 %v1013
    %1061 = vmatpush.msra.mxu0 %v1011
    %1062 = vmatmul.f32.gmra.mxu0 %v1029
    %v1063 = vpop.f32.mrf.mxu0
    %v1064 = vadd.f32 0.0, %v1063
    %1065 = vmatmul.f32.gmra.mxu0 %v1032
    %v1066 = vpop.f32.mrf.mxu0
    %v1067 = vadd.f32 0.0, %v1066
    %1068 = vmatmul.f32.gmra.mxu0 %v1035
    %v1069 = vpop.f32.mrf.mxu0
    %v1070 = vadd.f32 0.0, %v1069
    %1071 = vmatmul.f32.gmra.mxu0 %v1038
    %v1072 = vpop.f32.mrf.mxu0
    %v1073 = vadd.f32 0.0, %v1072
    %1074 = vmatmul.f32.gmra.mxu0 %v1041
    %v1075 = vpop.f32.mrf.mxu0
    %v1076 = vadd.f32 0.0, %v1075
    %1077 = vmatmul.f32.gmra.mxu0 %v1044
    %v1078 = vpop.f32.mrf.mxu0
    %v1079 = vadd.f32 0.0, %v1078
    %1080 = vdwg.mxu0
    %1081 = vrot.lane.b32.xlu0 %v414, 104
    %v1082 = vpop.permute.xlu0 %1081
    %1083 = vrot.lane.b32.xlu0 %v415, 104
    %v1084 = vpop.permute.xlu0 %1083
    %1085 = vrot.lane.b32.xlu0 %v416, 104
    %v1086 = vpop.permute.xlu0 %1085
    %1087 = vrot.lane.b32.xlu0 %v417, 104
    %v1088 = vpop.permute.xlu0 %1087
    %1089 = vrot.lane.b32.xlu0 %v418, 104
    %v1090 = vpop.permute.xlu0 %1089
    %1091 = vrot.lane.b32.xlu0 %v419, 104
    %v1092 = vpop.permute.xlu0 %1091
    %1093 = vrot.lane.b32.xlu0 %v397, 72
    %v1094 = vpop.permute.xlu0 %1093
    %1095 = vrot.lane.b32.xlu0 %v400, 72
    %v1096 = vpop.permute.xlu0 %1095
    %1097 = vrot.lane.b32.xlu0 %v403, 72
    %v1098 = vpop.permute.xlu0 %1097
    %1099 = vrot.lane.b32.xlu0 %v406, 72
    %v1100 = vpop.permute.xlu0 %1099
    %1101 = vrot.lane.b32.xlu0 %v409, 72
    %v1102 = vpop.permute.xlu0 %1101
    %1103 = vrot.lane.b32.xlu0 %v412, 72
    %v1104 = vpop.permute.xlu0 %1103
    %v1105 = vsel %vm438, %v1082, 0
    %v1107 = vsel %vm438, %v1084, 0
    %v1109 = vsel %vm438, %v1086, 0
    %v1111 = vsel %vm438, %v1088, 0
    %v1113 = vsel %vm438, %v1090, 0
    %v1115 = vsel %vm438, %v1092, 0
    %v1117 = vsel %vm438, %v1094, 0
    %v1119 = vsel %vm438, %v1096, 0
    %v1121 = vsel %vm438, %v1098, 0
    %v1123 = vsel %vm438, %v1100, 0
    %v1125 = vsel %vm438, %v1102, 0
    %v1127 = vsel %vm438, %v1104, 0
    %1129 = vmatpush.xpose.msra.mxu0 0.0
    %1130 = vmatpush.xpose.msra.mxu0 0.0
    %1131 = vmatpush.xpose.msra.mxu0 0.0
    %1132 = vmatpush.xpose.msra.mxu0 0.0
    %1133 = vmatpush.xpose.msra.mxu0 0.0
    %1134 = vmatpush.xpose.msra.mxu0 0.0
    %1135 = vmatpush.xpose.msra.mxu0 0.0
    %1136 = vmatpush.xpose.msra.mxu0 0.0
    %1137 = vmatpush.xpose.msra.mxu0 0.0
    %1138 = vmatpush.xpose.msra.mxu0 0.0
    %1139 = vmatpush.xpose.msra.mxu0 %v1127
    %1140 = vmatpush.xpose.msra.mxu0 %v1125
    %1141 = vmatpush.xpose.msra.mxu0 %v1123
    %1142 = vmatpush.xpose.msra.mxu0 %v1121
    %1143 = vmatpush.xpose.msra.mxu0 %v1119
    %1144 = vmatpush.xpose.msra.mxu0 %v1117
    %1145 = vmatmul.f32.gmra.mxu0 %v1105
    %v1146 = vpop.f32.mrf.mxu0
    %v1147 = vadd.f32 %v186, %v1146
    %1148 = vmatmul.f32.gmra.mxu0 %v1107
    %v1149 = vpop.f32.mrf.mxu0
    %v1150 = vadd.f32 %v187, %v1149
    %1151 = vmatmul.f32.gmra.mxu0 %v1109
    %v1152 = vpop.f32.mrf.mxu0
    %v1153 = vadd.f32 %v188, %v1152
    %1154 = vmatmul.f32.gmra.mxu0 %v1111
    %v1155 = vpop.f32.mrf.mxu0
    %v1156 = vadd.f32 %v189, %v1155
    %1157 = vmatmul.f32.gmra.mxu0 %v1113
    %v1158 = vpop.f32.mrf.mxu0
    %v1159 = vadd.f32 %v190, %v1158
    %1160 = vmatmul.f32.gmra.mxu0 %v1115
    %v1161 = vpop.f32.mrf.mxu0
    %v1162 = vadd.f32 %v191, %v1161
    %1163 = vdwg.mxu0
    %v1164 = vsel %vm63, %v1147, -inf
    %1165 = vmax.xlane.f32.xlu0 %v1164
    %v1166 = vpop.xlane.xlu0 %1165
    %v1167 = vsel %vm63, %v1150, -inf
    %1168 = vmax.xlane.f32.xlu0 %v1167
    %v1169 = vpop.xlane.xlu0 %1168
    %v1170 = vsel %vm63, %v1153, -inf
    %1171 = vmax.xlane.f32.xlu0 %v1170
    %v1172 = vpop.xlane.xlu0 %1171
    %v1173 = vsel %vm63, %v1156, -inf
    %1174 = vmax.xlane.f32.xlu0 %v1173
    %v1175 = vpop.xlane.xlu0 %1174
    %v1176 = vsel %vm63, %v1159, -inf
    %1177 = vmax.xlane.f32.xlu0 %v1176
    %v1178 = vpop.xlane.xlu0 %1177
    %v1179 = vsel %vm63, %v1162, -inf
    %1180 = vmax.xlane.f32.xlu0 %v1179
    %v1181 = vpop.xlane.xlu0 %1180
    %v1182 = vsub.f32 %v1147, %v1166
    %v1183 = vsub.f32 %v1150, %v1169
    %v1184 = vsub.f32 %v1153, %v1172
    %v1185 = vsub.f32 %v1156, %v1175
    %v1186 = vsub.f32 %v1159, %v1178
    %v1187 = vsub.f32 %v1162, %v1181
    %v1188 = vmul.f32 %v1182, 1.442695
    %v1189 = vpow.pop %v1188
    %v1190 = vmul.f32 %v1183, 1.442695
    %v1191 = vpow.pop %v1190
    %v1192 = vmul.f32 %v1184, 1.442695
    %v1193 = vpow.pop %v1192
    %v1194 = vmul.f32 %v1185, 1.442695
    %v1195 = vpow.pop %v1194
    %v1196 = vmul.f32 %v1186, 1.442695
    %v1197 = vpow.pop %v1196
    %v1198 = vmul.f32 %v1187, 1.442695
    %v1199 = vpow.pop %v1198
    %v1200 = vsel %vm63, %v1189, 0.0
    %1201 = vadd.xlane.f32.xlu0 %v1200
    %v1202 = vpop.xlane.xlu0 %1201
    %v1203 = vsel %vm63, %v1191, 0.0
    %1204 = vadd.xlane.f32.xlu0 %v1203
    %v1205 = vpop.xlane.xlu0 %1204
    %v1206 = vsel %vm63, %v1193, 0.0
    %1207 = vadd.xlane.f32.xlu0 %v1206
    %v1208 = vpop.xlane.xlu0 %1207
    %v1209 = vsel %vm63, %v1195, 0.0
    %1210 = vadd.xlane.f32.xlu0 %v1209
    %v1211 = vpop.xlane.xlu0 %1210
    %v1212 = vsel %vm63, %v1197, 0.0
    %1213 = vadd.xlane.f32.xlu0 %v1212
    %v1214 = vpop.xlane.xlu0 %1213
    %v1215 = vsel %vm63, %v1199, 0.0
    %1216 = vadd.xlane.f32.xlu0 %v1215
    %v1217 = vpop.xlane.xlu0 %1216
    %v1218 = vrcp.pop %v1202
    %v1219 = vrcp.pop %v1205
    %v1220 = vrcp.pop %v1208
    %v1221 = vrcp.pop %v1211
    %v1222 = vrcp.pop %v1214
    %v1223 = vrcp.pop %v1217
    %v1224 = vmul.f32 %v1189, %v1218
    %v1225 = vmul.f32 %v1191, %v1219
    %v1226 = vmul.f32 %v1193, %v1220
    %v1227 = vmul.f32 %v1195, %v1221
    %v1228 = vmul.f32 %v1197, %v1222
    %v1229 = vmul.f32 %v1199, %v1223
    %1230 = vrot.lane.b32.xlu0 %v397, 40
    %v1231 = vpop.permute.xlu0 %1230
    %1232 = vrot.lane.b32.xlu0 %v400, 40
    %v1233 = vpop.permute.xlu0 %1232
    %1234 = vrot.lane.b32.xlu0 %v403, 40
    %v1235 = vpop.permute.xlu0 %1234
    %1236 = vrot.lane.b32.xlu0 %v406, 40
    %v1237 = vpop.permute.xlu0 %1236
    %1238 = vrot.lane.b32.xlu0 %v409, 40
    %v1239 = vpop.permute.xlu0 %1238
    %1240 = vrot.lane.b32.xlu0 %v412, 40
    %v1241 = vpop.permute.xlu0 %1240
    %v1249 = vsel %vm63, %v1224, 0
    %v1252 = vsel %vm63, %v1225, 0
    %v1255 = vsel %vm63, %v1226, 0
    %v1258 = vsel %vm63, %v1227, 0
    %v1261 = vsel %vm63, %v1228, 0
    %v1264 = vsel %vm63, %v1229, 0
    %1266 = vmatpush.msra.mxu0 0.0
    %1267 = vmatpush.msra.mxu0 0.0
    %1268 = vmatpush.msra.mxu0 0.0
    %1269 = vmatpush.msra.mxu0 0.0
    %1270 = vmatpush.msra.mxu0 0.0
    %1271 = vmatpush.msra.mxu0 0.0
    %1272 = vmatpush.msra.mxu0 0.0
    %1273 = vmatpush.msra.mxu0 0.0
    %1274 = vmatpush.msra.mxu0 0.0
    %1275 = vmatpush.msra.mxu0 0.0
    %1276 = vmatpush.msra.mxu0 %v1241
    %1277 = vmatpush.msra.mxu0 %v1239
    %1278 = vmatpush.msra.mxu0 %v1237
    %1279 = vmatpush.msra.mxu0 %v1235
    %1280 = vmatpush.msra.mxu0 %v1233
    %1281 = vmatpush.msra.mxu0 %v1231
    %1282 = vmatmul.f32.gmra.mxu0 %v1249
    %v1283 = vpop.f32.mrf.mxu0
    %v1284 = vadd.f32 0.0, %v1283
    %1285 = vmatmul.f32.gmra.mxu0 %v1252
    %v1286 = vpop.f32.mrf.mxu0
    %v1287 = vadd.f32 0.0, %v1286
    %1288 = vmatmul.f32.gmra.mxu0 %v1255
    %v1289 = vpop.f32.mrf.mxu0
    %v1290 = vadd.f32 0.0, %v1289
    %1291 = vmatmul.f32.gmra.mxu0 %v1258
    %v1292 = vpop.f32.mrf.mxu0
    %v1293 = vadd.f32 0.0, %v1292
    %1294 = vmatmul.f32.gmra.mxu0 %v1261
    %v1295 = vpop.f32.mrf.mxu0
    %v1296 = vadd.f32 0.0, %v1295
    %1297 = vmatmul.f32.gmra.mxu0 %v1264
    %v1298 = vpop.f32.mrf.mxu0
    %v1299 = vadd.f32 0.0, %v1298
    %1300 = vdwg.mxu0
    %1307 = vrot.lane.b32.xlu0 %v844, 8
    %v1308 = vpop.permute.xlu0 %1307
    %1309 = vrot.lane.b32.xlu0 %v847, 8
    %v1310 = vpop.permute.xlu0 %1309
    %1311 = vrot.lane.b32.xlu0 %v850, 8
    %v1312 = vpop.permute.xlu0 %1311
    %1313 = vrot.lane.b32.xlu0 %v853, 8
    %v1314 = vpop.permute.xlu0 %1313
    %1315 = vrot.lane.b32.xlu0 %v856, 8
    %v1316 = vpop.permute.xlu0 %1315
    %1317 = vrot.lane.b32.xlu0 %v859, 8
    %v1318 = vpop.permute.xlu0 %1317
    %1331 = vrot.lane.b32.xlu0 %v1064, 16
    %v1332 = vpop.permute.xlu0 %1331
    %1333 = vrot.lane.b32.xlu0 %v1067, 16
    %v1334 = vpop.permute.xlu0 %1333
    %1335 = vrot.lane.b32.xlu0 %v1070, 16
    %v1336 = vpop.permute.xlu0 %1335
    %1337 = vrot.lane.b32.xlu0 %v1073, 16
    %v1338 = vpop.permute.xlu0 %1337
    %1339 = vrot.lane.b32.xlu0 %v1076, 16
    %v1340 = vpop.permute.xlu0 %1339
    %1341 = vrot.lane.b32.xlu0 %v1079, 16
    %v1342 = vpop.permute.xlu0 %1341
    %1355 = vrot.lane.b32.xlu0 %v1284, 24
    %v1356 = vpop.permute.xlu0 %1355
    %1357 = vrot.lane.b32.xlu0 %v1287, 24
    %v1358 = vpop.permute.xlu0 %1357
    %1359 = vrot.lane.b32.xlu0 %v1290, 24
    %v1360 = vpop.permute.xlu0 %1359
    %1361 = vrot.lane.b32.xlu0 %v1293, 24
    %v1362 = vpop.permute.xlu0 %1361
    %1363 = vrot.lane.b32.xlu0 %v1296, 24
    %v1364 = vpop.permute.xlu0 %1363
    %1365 = vrot.lane.b32.xlu0 %v1299, 24
    %v1366 = vpop.permute.xlu0 %1365
    %v1373 = vsel %vm438, %v624, %v1308
    %v1374 = vsel %vm438, %v627, %v1310
    %v1375 = vsel %vm438, %v630, %v1312
    %v1376 = vsel %vm438, %v633, %v1314
    %v1377 = vsel %vm438, %v636, %v1316
    %v1378 = vsel %vm438, %v639, %v1318
    %vm1379 = vcmask 130048
    %v1380 = vsel %vm1379, %v1373, %v1332
    %v1381 = vsel %vm1379, %v1374, %v1334
    %v1382 = vsel %vm1379, %v1375, %v1336
    %v1383 = vsel %vm1379, %v1376, %v1338
    %v1384 = vsel %vm1379, %v1377, %v1340
    %v1385 = vsel %vm1379, %v1378, %v1342
    %vm1386 = vcmask 195584
    %v1387 = vsel %vm1386, %v1380, %v1356
    %v1388 = vsel %vm1386, %v1381, %v1358
    %v1389 = vsel %vm1386, %v1382, %v1360
    %v1390 = vsel %vm1386, %v1383, %v1362
    %v1391 = vsel %vm1386, %v1384, %v1364
    %v1392 = vsel %vm1386, %v1385, %v1366
    %v1393 = vld [vmem:[%s6] sm:$0xff]
    %v1394 = vld [vmem:[%s6 + $0x8] sm:$0xff]
    %v1395 = vld [vmem:[%s6 + $0x10] sm:$0xff]
    %v1396 = vld [vmem:[%s6 + $0x18] sm:$0xff]
    %v1398 = vsel %vm195, %v1387, 0
    %v1401 = vsel %vm195, %v1388, 0
    %v1404 = vsel %vm195, %v1389, 0
    %v1407 = vsel %vm195, %v1390, 0
    %v1410 = vsel %vm195, %v1391, 0
    %v1413 = vsel %vm195, %v1392, 0
    %1415 = vmatpush.msra.mxu0 0.0
    %1416 = vmatpush.msra.mxu0 0.0
    %1417 = vmatpush.msra.mxu0 0.0
    %1418 = vmatpush.msra.mxu0 0.0
    %1419 = vmatpush.msra.mxu0 0.0
    %1420 = vmatpush.msra.mxu0 0.0
    %1421 = vmatpush.msra.mxu0 0.0
    %1422 = vmatpush.msra.mxu0 0.0
    %1423 = vmatpush.msra.mxu0 0.0
    %1424 = vmatpush.msra.mxu0 0.0
    %1425 = vmatpush.msra.mxu0 0.0
    %1426 = vmatpush.msra.mxu0 0.0
    %1427 = vmatpush.msra.mxu0 %v1396
    %1428 = vmatpush.msra.mxu0 %v1395
    %1429 = vmatpush.msra.mxu0 %v1394
    %1430 = vmatpush.msra.mxu0 %v1393
    %1431 = vmatmul.f32.gmra.mxu0 %v1398
    %v1432 = vpop.f32.mrf.mxu0
    %v1433 = vadd.f32 0.0, %v1432
    %1434 = vmatmul.f32.gmra.mxu0 %v1401
    %v1435 = vpop.f32.mrf.mxu0
    %v1436 = vadd.f32 0.0, %v1435
    %1437 = vmatmul.f32.gmra.mxu0 %v1404
    %v1438 = vpop.f32.mrf.mxu0
    %v1439 = vadd.f32 0.0, %v1438
    %1440 = vmatmul.f32.gmra.mxu0 %v1407
    %v1441 = vpop.f32.mrf.mxu0
    %v1442 = vadd.f32 0.0, %v1441
    %1443 = vmatmul.f32.gmra.mxu0 %v1410
    %v1444 = vpop.f32.mrf.mxu0
    %v1445 = vadd.f32 0.0, %v1444
    %1446 = vmatmul.f32.gmra.mxu0 %v1413
    %v1447 = vpop.f32.mrf.mxu0
    %v1448 = vadd.f32 0.0, %v1447
    %1449 = vdwg.mxu0
    %v1450 = vadd.f32 %v100, %v1433
    %v1451 = vadd.f32 %v103, %v1436
    %v1452 = vadd.f32 %v106, %v1439
    %v1453 = vadd.f32 %v109, %v1442
    %v1454 = vadd.f32 %v112, %v1445
    %v1455 = vadd.f32 %v115, %v1448
    %v1456 = vld [vmem:[%s8] sm:$0x1]
    %v1458 = vperm.slane %v1456, 0
    %v1460 = vadd.f32 %v1450, %v1458
    %v1461 = vadd.f32 %v1451, %v1458
    %v1462 = vadd.f32 %v1452, %v1458
    %v1463 = vadd.f32 %v1453, %v1458
    %v1464 = vadd.f32 %v1454, %v1458
    %v1465 = vadd.f32 %v1455, %v1458
    %s1466 = scalar_lea.vmem %s3, 2
    %v1467 = vld [vmem:[%s1466] sm:$0x1]
    %s1468 = scalar_lea.vmem %s3, 3
    %v1469 = vld [vmem:[%s1468] sm:$0x1]
    %v1470 = vsel %vm195, %v1460, 0.0
    %1471 = vadd.xlane.f32.xlu0 %v1470
    %v1472 = vpop.xlane.xlu0 %1471
    %v1473 = vsel %vm195, %v1461, 0.0
    %1474 = vadd.xlane.f32.xlu0 %v1473
    %v1475 = vpop.xlane.xlu0 %1474
    %v1476 = vsel %vm195, %v1462, 0.0
    %1477 = vadd.xlane.f32.xlu0 %v1476
    %v1478 = vpop.xlane.xlu0 %1477
    %v1479 = vsel %vm195, %v1463, 0.0
    %1480 = vadd.xlane.f32.xlu0 %v1479
    %v1481 = vpop.xlane.xlu0 %1480
    %v1482 = vsel %vm195, %v1464, 0.0
    %1483 = vadd.xlane.f32.xlu0 %v1482
    %v1484 = vpop.xlane.xlu0 %1483
    %v1485 = vsel %vm195, %v1465, 0.0
    %1486 = vadd.xlane.f32.xlu0 %v1485
    %v1487 = vpop.xlane.xlu0 %1486
    %v1488 = vmul.f32 %v1472, %v220
    %v1489 = vmul.f32 %v1475, %v220
    %v1490 = vmul.f32 %v1478, %v220
    %v1491 = vmul.f32 %v1481, %v220
    %v1492 = vmul.f32 %v1484, %v220
    %v1493 = vmul.f32 %v1487, %v220
    %v1494 = vsub.f32 %v1460, %v1488
    %v1495 = vsub.f32 %v1461, %v1489
    %v1496 = vsub.f32 %v1462, %v1490
    %v1497 = vsub.f32 %v1463, %v1491
    %v1498 = vsub.f32 %v1464, %v1492
    %v1499 = vsub.f32 %v1465, %v1493
    %v1500 = vmul.f32 %v1494, %v1494
    %v1501 = vmul.f32 %v1495, %v1495
    %v1502 = vmul.f32 %v1496, %v1496
    %v1503 = vmul.f32 %v1497, %v1497
    %v1504 = vmul.f32 %v1498, %v1498
    %v1505 = vmul.f32 %v1499, %v1499
    %v1506 = vsel %vm195, %v1500, 0.0
    %1507 = vadd.xlane.f32.xlu0 %v1506
    %v1508 = vpop.xlane.xlu0 %1507
    %v1509 = vsel %vm195, %v1501, 0.0
    %1510 = vadd.xlane.f32.xlu0 %v1509
    %v1511 = vpop.xlane.xlu0 %1510
    %v1512 = vsel %vm195, %v1502, 0.0
    %1513 = vadd.xlane.f32.xlu0 %v1512
    %v1514 = vpop.xlane.xlu0 %1513
    %v1515 = vsel %vm195, %v1503, 0.0
    %1516 = vadd.xlane.f32.xlu0 %v1515
    %v1517 = vpop.xlane.xlu0 %1516
    %v1518 = vsel %vm195, %v1504, 0.0
    %1519 = vadd.xlane.f32.xlu0 %v1518
    %v1520 = vpop.xlane.xlu0 %1519
    %v1521 = vsel %vm195, %v1505, 0.0
    %1522 = vadd.xlane.f32.xlu0 %v1521
    %v1523 = vpop.xlane.xlu0 %1522
    %v1524 = vmul.f32 %v1508, %v220
    %v1525 = vmul.f32 %v1511, %v220
    %v1526 = vmul.f32 %v1514, %v220
    %v1527 = vmul.f32 %v1517, %v220
    %v1528 = vmul.f32 %v1520, %v220
    %v1529 = vmul.f32 %v1523, %v220
    %v1530 = vadd.f32 %v1524, 1e-06
    %v1531 = vadd.f32 %v1525, 1e-06
    %v1532 = vadd.f32 %v1526, 1e-06
    %v1533 = vadd.f32 %v1527, 1e-06
    %v1534 = vadd.f32 %v1528, 1e-06
    %v1535 = vadd.f32 %v1529, 1e-06
    %v1536 = vrsqrt.pop %v1530
    %v1537 = vmul.f32 %v1536, %v1530
    %v1538 = vmul.f32 %v1537, %v1536
    %v1539 = vmul.f32 0.5, %v1538
    %v1540 = vsub.f32 1.5, %v1539
    %v1541 = vmul.f32 %v1536, %v1540
    %vm1542 = vweird.f32 %v1530
    %vm1543 = vweird.f32 %v1536
    %vm1544 = vmor %vm1542, %vm1543
    %v1545 = vsel %vm1544, %v1536, %v1541
    %v1546 = vrsqrt.pop %v1531
    %v1547 = vmul.f32 %v1546, %v1531
    %v1548 = vmul.f32 %v1547, %v1546
    %v1549 = vmul.f32 0.5, %v1548
    %v1550 = vsub.f32 1.5, %v1549
    %v1551 = vmul.f32 %v1546, %v1550
    %vm1552 = vweird.f32 %v1531
    %vm1553 = vweird.f32 %v1546
    %vm1554 = vmor %vm1552, %vm1553
    %v1555 = vsel %vm1554, %v1546, %v1551
    %v1556 = vrsqrt.pop %v1532
    %v1557 = vmul.f32 %v1556, %v1532
    %v1558 = vmul.f32 %v1557, %v1556
    %v1559 = vmul.f32 0.5, %v1558
    %v1560 = vsub.f32 1.5, %v1559
    %v1561 = vmul.f32 %v1556, %v1560
    %vm1562 = vweird.f32 %v1532
    %vm1563 = vweird.f32 %v1556
    %vm1564 = vmor %vm1562, %vm1563
    %v1565 = vsel %vm1564, %v1556, %v1561
    %v1566 = vrsqrt.pop %v1533
    %v1567 = vmul.f32 %v1566, %v1533
    %v1568 = vmul.f32 %v1567, %v1566
    %v1569 = vmul.f32 0.5, %v1568
    %v1570 = vsub.f32 1.5, %v1569
    %v1571 = vmul.f32 %v1566, %v1570
    %vm1572 = vweird.f32 %v1533
    %vm1573 = vweird.f32 %v1566
    %vm1574 = vmor %vm1572, %vm1573
    %v1575 = vsel %vm1574, %v1566, %v1571
    %v1576 = vrsqrt.pop %v1534
    %v1577 = vmul.f32 %v1576, %v1534
    %v1578 = vmul.f32 %v1577, %v1576
    %v1579 = vmul.f32 0.5, %v1578
    %v1580 = vsub.f32 1.5, %v1579
    %v1581 = vmul.f32 %v1576, %v1580
    %vm1582 = vweird.f32 %v1534
    %vm1583 = vweird.f32 %v1576
    %vm1584 = vmor %vm1582, %vm1583
    %v1585 = vsel %vm1584, %v1576, %v1581
    %v1586 = vrsqrt.pop %v1535
    %v1587 = vmul.f32 %v1586, %v1535
    %v1588 = vmul.f32 %v1587, %v1586
    %v1589 = vmul.f32 0.5, %v1588
    %v1590 = vsub.f32 1.5, %v1589
    %v1591 = vmul.f32 %v1586, %v1590
    %vm1592 = vweird.f32 %v1535
    %vm1593 = vweird.f32 %v1586
    %vm1594 = vmor %vm1592, %vm1593
    %v1595 = vsel %vm1594, %v1586, %v1591
    %v1596 = vmul.f32 %v1494, %v1545
    %v1597 = vmul.f32 %v1495, %v1555
    %v1598 = vmul.f32 %v1496, %v1565
    %v1599 = vmul.f32 %v1497, %v1575
    %v1600 = vmul.f32 %v1498, %v1585
    %v1601 = vmul.f32 %v1499, %v1595
    %v1603 = vperm.slane %v1467, 0
    %v1605 = vmul.f32 %v1596, %v1603
    %v1606 = vmul.f32 %v1597, %v1603
    %v1607 = vmul.f32 %v1598, %v1603
    %v1608 = vmul.f32 %v1599, %v1603
    %v1609 = vmul.f32 %v1600, %v1603
    %v1610 = vmul.f32 %v1601, %v1603
    %v1612 = vperm.slane %v1469, 0
    %v1614 = vadd.f32 %v1605, %v1612
    %v1615 = vadd.f32 %v1606, %v1612
    %v1616 = vadd.f32 %v1607, %v1612
    %v1617 = vadd.f32 %v1608, %v1612
    %v1618 = vadd.f32 %v1609, %v1612
    %v1619 = vadd.f32 %v1610, %v1612
    %s1620 = scalar_lea.vmem %s4, 32
    %v1621 = vld [vmem:[%s1620] sm:$0xff]
    %v1622 = vld [vmem:[%s1620 + $0x8] sm:$0xff]
    %v1623 = vld [vmem:[%s1620 + $0x10] sm:$0xff]
    %v1624 = vld [vmem:[%s1620 + $0x18] sm:$0xff]
    %s1625 = scalar_lea.vmem %s5, 1
    %v1626 = vld [vmem:[%s1625] sm:$0x1]
    %v1628 = vperm.slane %v1626, 0
    %v1631 = vsel %vm195, %v1614, 0
    %v1634 = vsel %vm195, %v1615, 0
    %v1637 = vsel %vm195, %v1616, 0
    %v1640 = vsel %vm195, %v1617, 0
    %v1643 = vsel %vm195, %v1618, 0
    %v1646 = vsel %vm195, %v1619, 0
    %1648 = vmatpush.msra.mxu0 0.0
    %1649 = vmatpush.msra.mxu0 0.0
    %1650 = vmatpush.msra.mxu0 0.0
    %1651 = vmatpush.msra.mxu0 0.0
    %1652 = vmatpush.msra.mxu0 0.0
    %1653 = vmatpush.msra.mxu0 0.0
    %1654 = vmatpush.msra.mxu0 0.0
    %1655 = vmatpush.msra.mxu0 0.0
    %1656 = vmatpush.msra.mxu0 0.0
    %1657 = vmatpush.msra.mxu0 0.0
    %1658 = vmatpush.msra.mxu0 0.0
    %1659 = vmatpush.msra.mxu0 0.0
    %1660 = vmatpush.msra.mxu0 %v1624
    %1661 = vmatpush.msra.mxu0 %v1623
    %1662 = vmatpush.msra.mxu0 %v1622
    %1663 = vmatpush.msra.mxu0 %v1621
    %1664 = vmatmul.f32.gmra.mxu0 %v1631
    %v1665 = vpop.f32.mrf.mxu0
    %v1666 = vadd.f32 %v1628, %v1665
    %1667 = vmatmul.f32.gmra.mxu0 %v1634
    %v1668 = vpop.f32.mrf.mxu0
    %v1669 = vadd.f32 %v1628, %v1668
    %1670 = vmatmul.f32.gmra.mxu0 %v1637
    %v1671 = vpop.f32.mrf.mxu0
    %v1672 = vadd.f32 %v1628, %v1671
    %1673 = vmatmul.f32.gmra.mxu0 %v1640
    %v1674 = vpop.f32.mrf.mxu0
    %v1675 = vadd.f32 %v1628, %v1674
    %1676 = vmatmul.f32.gmra.mxu0 %v1643
    %v1677 = vpop.f32.mrf.mxu0
    %v1678 = vadd.f32 %v1628, %v1677
    %1679 = vmatmul.f32.gmra.mxu0 %v1646
    %v1680 = vpop.f32.mrf.mxu0
    %v1681 = vadd.f32 %v1628, %v1680
    %1682 = vdwg.mxu0
    %v1683 = vmul.f32 %v1666, %v1666
    %v1684 = vmul.f32 %v1669, %v1669
    %v1685 = vmul.f32 %v1672, %v1672
    %v1686 = vmul.f32 %v1675, %v1675
    %v1687 = vmul.f32 %v1678, %v1678
    %v1688 = vmul.f32 %v1681, %v1681
    %v1689 = vmul.f32 %v1666, %v1683
    %v1690 = vmul.f32 %v1669, %v1684
    %v1691 = vmul.f32 %v1672, %v1685
    %v1692 = vmul.f32 %v1675, %v1686
    %v1693 = vmul.f32 %v1678, %v1687
    %v1694 = vmul.f32 %v1681, %v1688
    %v1695 = vmul.f32 %v1689, 0.044715
    %v1696 = vmul.f32 %v1690, 0.044715
    %v1697 = vmul.f32 %v1691, 0.044715
    %v1698 = vmul.f32 %v1692, 0.044715
    %v1699 = vmul.f32 %v1693, 0.044715
    %v1700 = vmul.f32 %v1694, 0.044715
    %v1701 = vadd.f32 %v1666, %v1695
    %v1702 = vadd.f32 %v1669, %v1696
    %v1703 = vadd.f32 %v1672, %v1697
    %v1704 = vadd.f32 %v1675, %v1698
    %v1705 = vadd.f32 %v1678, %v1699
    %v1706 = vadd.f32 %v1681, %v1700
    %v1707 = vmul.f32 %v1701, 0.7978846
    %v1708 = vmul.f32 %v1702, 0.7978846
    %v1709 = vmul.f32 %v1703, 0.7978846
    %v1710 = vmul.f32 %v1704, 0.7978846
    %v1711 = vmul.f32 %v1705, 0.7978846
    %v1712 = vmul.f32 %v1706, 0.7978846
    %v1713 = vtanh.pop %v1707
    %v1714 = vtanh.pop %v1708
    %v1715 = vtanh.pop %v1709
    %v1716 = vtanh.pop %v1710
    %v1717 = vtanh.pop %v1711
    %v1718 = vtanh.pop %v1712
    %v1719 = vadd.f32 %v1713, 1.0
    %v1720 = vadd.f32 %v1714, 1.0
    %v1721 = vadd.f32 %v1715, 1.0
    %v1722 = vadd.f32 %v1716, 1.0
    %v1723 = vadd.f32 %v1717, 1.0
    %v1724 = vadd.f32 %v1718, 1.0
    %v1725 = vmul.f32 %v1719, 0.5
    %v1726 = vmul.f32 %v1720, 0.5
    %v1727 = vmul.f32 %v1721, 0.5
    %v1728 = vmul.f32 %v1722, 0.5
    %v1729 = vmul.f32 %v1723, 0.5
    %v1730 = vmul.f32 %v1724, 0.5
    %v1731 = vmul.f32 %v1666, %v1725
    %v1732 = vmul.f32 %v1669, %v1726
    %v1733 = vmul.f32 %v1672, %v1727
    %v1734 = vmul.f32 %v1675, %v1728
    %v1735 = vmul.f32 %v1678, %v1729
    %v1736 = vmul.f32 %v1681, %v1730
    %v1737 = vld [vmem:[%s7] sm:$0xff]
    %v1738 = vld [vmem:[%s7 + $0x8] sm:$0xff]
    %v1739 = vld [vmem:[%s7 + $0x10] sm:$0xff]
    %v1740 = vld [vmem:[%s7 + $0x18] sm:$0xff]
    %v1741 = vld [vmem:[%s7 + $0x20] sm:$0xff]
    %v1742 = vld [vmem:[%s7 + $0x28] sm:$0xff]
    %v1743 = vld [vmem:[%s7 + $0x30] sm:$0xff]
    %v1744 = vld [vmem:[%s7 + $0x38] sm:$0xff]
    %v1745 = vld [vmem:[%s7 + $0x40] sm:$0xff]
    %v1746 = vld [vmem:[%s7 + $0x48] sm:$0xff]
    %v1747 = vld [vmem:[%s7 + $0x50] sm:$0xff]
    %v1748 = vld [vmem:[%s7 + $0x58] sm:$0xff]
    %v1749 = vld [vmem:[%s7 + $0x60] sm:$0xff]
    %v1750 = vld [vmem:[%s7 + $0x68] sm:$0xff]
    %v1751 = vld [vmem:[%s7 + $0x70] sm:$0xff]
    %v1752 = vld [vmem:[%s7 + $0x78] sm:$0xff]
    %1753 = vmatpush.msra.mxu0 %v1752
    %1754 = vmatpush.msra.mxu0 %v1751
    %1755 = vmatpush.msra.mxu0 %v1750
    %1756 = vmatpush.msra.mxu0 %v1749
    %1757 = vmatpush.msra.mxu0 %v1748
    %1758 = vmatpush.msra.mxu0 %v1747
    %1759 = vmatpush.msra.mxu0 %v1746
    %1760 = vmatpush.msra.mxu0 %v1745
    %1761 = vmatpush.msra.mxu0 %v1744
    %1762 = vmatpush.msra.mxu0 %v1743
    %1763 = vmatpush.msra.mxu0 %v1742
    %1764 = vmatpush.msra.mxu0 %v1741
    %1765 = vmatpush.msra.mxu0 %v1740
    %1766 = vmatpush.msra.mxu0 %v1739
    %1767 = vmatpush.msra.mxu0 %v1738
    %1768 = vmatpush.msra.mxu0 %v1737
    %1769 = vmatmul.f32.gmra.mxu0 %v1731
    %v1770 = vpop.f32.mrf.mxu0
    %v1771 = vadd.f32 0.0, %v1770
    %1772 = vmatmul.f32.gmra.mxu0 %v1732
    %v1773 = vpop.f32.mrf.mxu0
    %v1774 = vadd.f32 0.0, %v1773
    %1775 = vmatmul.f32.gmra.mxu0 %v1733
    %v1776 = vpop.f32.mrf.mxu0
    %v1777 = vadd.f32 0.0, %v1776
    %1778 = vmatmul.f32.gmra.mxu0 %v1734
    %v1779 = vpop.f32.mrf.mxu0
    %v1780 = vadd.f32 0.0, %v1779
    %1781 = vmatmul.f32.gmra.mxu0 %v1735
    %v1782 = vpop.f32.mrf.mxu0
    %v1783 = vadd.f32 0.0, %v1782
    %1784 = vmatmul.f32.gmra.mxu0 %v1736
    %v1785 = vpop.f32.mrf.mxu0
    %v1786 = vadd.f32 0.0, %v1785
    %1787 = vdwg.mxu0
    %v1788 = vadd.f32 %v1460, %v1771
    %v1789 = vadd.f32 %v1461, %v1774
    %v1790 = vadd.f32 %v1462, %v1777
    %v1791 = vadd.f32 %v1463, %v1780
    %v1792 = vadd.f32 %v1464, %v1783
    %v1793 = vadd.f32 %v1465, %v1786
    %s1794 = scalar_lea.vmem %s8, 1
    %v1795 = vld [vmem:[%s1794] sm:$0x1]
    %v1797 = vperm.slane %v1795, 0
    %v1799 = vadd.f32 %v1788, %v1797
    %v1800 = vadd.f32 %v1789, %v1797
    %v1801 = vadd.f32 %v1790, %v1797
    %v1802 = vadd.f32 %v1791, %v1797
    %v1803 = vadd.f32 %v1792, %v1797
    %v1804 = vadd.f32 %v1793, %v1797
    %s1805 = scalar_lea.vmem %s3, 4
    %v1806 = vld [vmem:[%s1805] sm:$0x1]
    %s1807 = scalar_lea.vmem %s3, 5
    %v1808 = vld [vmem:[%s1807] sm:$0x1]
    %v1809 = vsel %vm195, %v1799, 0.0
    %1810 = vadd.xlane.f32.xlu0 %v1809
    %v1811 = vpop.xlane.xlu0 %1810
    %v1812 = vsel %vm195, %v1800, 0.0
    %1813 = vadd.xlane.f32.xlu0 %v1812
    %v1814 = vpop.xlane.xlu0 %1813
    %v1815 = vsel %vm195, %v1801, 0.0
    %1816 = vadd.xlane.f32.xlu0 %v1815
    %v1817 = vpop.xlane.xlu0 %1816
    %v1818 = vsel %vm195, %v1802, 0.0
    %1819 = vadd.xlane.f32.xlu0 %v1818
    %v1820 = vpop.xlane.xlu0 %1819
    %v1821 = vsel %vm195, %v1803, 0.0
    %1822 = vadd.xlane.f32.xlu0 %v1821
    %v1823 = vpop.xlane.xlu0 %1822
    %v1824 = vsel %vm195, %v1804, 0.0
    %1825 = vadd.xlane.f32.xlu0 %v1824
    %v1826 = vpop.xlane.xlu0 %1825
    %v1827 = vmul.f32 %v1811, %v220
    %v1828 = vmul.f32 %v1814, %v220
    %v1829 = vmul.f32 %v1817, %v220
    %v1830 = vmul.f32 %v1820, %v220
    %v1831 = vmul.f32 %v1823, %v220
    %v1832 = vmul.f32 %v1826, %v220
    %v1833 = vsub.f32 %v1799, %v1827
    %v1834 = vsub.f32 %v1800, %v1828
    %v1835 = vsub.f32 %v1801, %v1829
    %v1836 = vsub.f32 %v1802, %v1830
    %v1837 = vsub.f32 %v1803, %v1831
    %v1838 = vsub.f32 %v1804, %v1832
    %v1839 = vmul.f32 %v1833, %v1833
    %v1840 = vmul.f32 %v1834, %v1834
    %v1841 = vmul.f32 %v1835, %v1835
    %v1842 = vmul.f32 %v1836, %v1836
    %v1843 = vmul.f32 %v1837, %v1837
    %v1844 = vmul.f32 %v1838, %v1838
    %v1845 = vsel %vm195, %v1839, 0.0
    %1846 = vadd.xlane.f32.xlu0 %v1845
    %v1847 = vpop.xlane.xlu0 %1846
    %v1848 = vsel %vm195, %v1840, 0.0
    %1849 = vadd.xlane.f32.xlu0 %v1848
    %v1850 = vpop.xlane.xlu0 %1849
    %v1851 = vsel %vm195, %v1841, 0.0
    %1852 = vadd.xlane.f32.xlu0 %v1851
    %v1853 = vpop.xlane.xlu0 %1852
    %v1854 = vsel %vm195, %v1842, 0.0
    %1855 = vadd.xlane.f32.xlu0 %v1854
    %v1856 = vpop.xlane.xlu0 %1855
    %v1857 = vsel %vm195, %v1843, 0.0
    %1858 = vadd.xlane.f32.xlu0 %v1857
    %v1859 = vpop.xlane.xlu0 %1858
    %v1860 = vsel %vm195, %v1844, 0.0
    %1861 = vadd.xlane.f32.xlu0 %v1860
    %v1862 = vpop.xlane.xlu0 %1861
    %v1863 = vmul.f32 %v1847, %v220
    %v1864 = vmul.f32 %v1850, %v220
    %v1865 = vmul.f32 %v1853, %v220
    %v1866 = vmul.f32 %v1856, %v220
    %v1867 = vmul.f32 %v1859, %v220
    %v1868 = vmul.f32 %v1862, %v220
    %v1869 = vadd.f32 %v1863, 1e-06
    %v1870 = vadd.f32 %v1864, 1e-06
    %v1871 = vadd.f32 %v1865, 1e-06
    %v1872 = vadd.f32 %v1866, 1e-06
    %v1873 = vadd.f32 %v1867, 1e-06
    %v1874 = vadd.f32 %v1868, 1e-06
    %v1875 = vrsqrt.pop %v1869
    %v1876 = vmul.f32 %v1875, %v1869
    %v1877 = vmul.f32 %v1876, %v1875
    %v1878 = vmul.f32 0.5, %v1877
    %v1879 = vsub.f32 1.5, %v1878
    %v1880 = vmul.f32 %v1875, %v1879
    %vm1881 = vweird.f32 %v1869
    %vm1882 = vweird.f32 %v1875
    %vm1883 = vmor %vm1881, %vm1882
    %v1884 = vsel %vm1883, %v1875, %v1880
    %v1885 = vrsqrt.pop %v1870
    %v1886 = vmul.f32 %v1885, %v1870
    %v1887 = vmul.f32 %v1886, %v1885
    %v1888 = vmul.f32 0.5, %v1887
    %v1889 = vsub.f32 1.5, %v1888
    %v1890 = vmul.f32 %v1885, %v1889
    %vm1891 = vweird.f32 %v1870
    %vm1892 = vweird.f32 %v1885
    %vm1893 = vmor %vm1891, %vm1892
    %v1894 = vsel %vm1893, %v1885, %v1890
    %v1895 = vrsqrt.pop %v1871
    %v1896 = vmul.f32 %v1895, %v1871
    %v1897 = vmul.f32 %v1896, %v1895
    %v1898 = vmul.f32 0.5, %v1897
    %v1899 = vsub.f32 1.5, %v1898
    %v1900 = vmul.f32 %v1895, %v1899
    %vm1901 = vweird.f32 %v1871
    %vm1902 = vweird.f32 %v1895
    %vm1903 = vmor %vm1901, %vm1902
    %v1904 = vsel %vm1903, %v1895, %v1900
    %v1905 = vrsqrt.pop %v1872
    %v1906 = vmul.f32 %v1905, %v1872
    %v1907 = vmul.f32 %v1906, %v1905
    %v1908 = vmul.f32 0.5, %v1907
    %v1909 = vsub.f32 1.5, %v1908
    %v1910 = vmul.f32 %v1905, %v1909
    %vm1911 = vweird.f32 %v1872
    %vm1912 = vweird.f32 %v1905
    %vm1913 = vmor %vm1911, %vm1912
    %v1914 = vsel %vm1913, %v1905, %v1910
    %v1915 = vrsqrt.pop %v1873
    %v1916 = vmul.f32 %v1915, %v1873
    %v1917 = vmul.f32 %v1916, %v1915
    %v1918 = vmul.f32 0.5, %v1917
    %v1919 = vsub.f32 1.5, %v1918
    %v1920 = vmul.f32 %v1915, %v1919
    %vm1921 = vweird.f32 %v1873
    %vm1922 = vweird.f32 %v1915
    %vm1923 = vmor %vm1921, %vm1922
    %v1924 = vsel %vm1923, %v1915, %v1920
    %v1925 = vrsqrt.pop %v1874
    %v1926 = vmul.f32 %v1925, %v1874
    %v1927 = vmul.f32 %v1926, %v1925
    %v1928 = vmul.f32 0.5, %v1927
    %v1929 = vsub.f32 1.5, %v1928
    %v1930 = vmul.f32 %v1925, %v1929
    %vm1931 = vweird.f32 %v1874
    %vm1932 = vweird.f32 %v1925
    %vm1933 = vmor %vm1931, %vm1932
    %v1934 = vsel %vm1933, %v1925, %v1930
    %v1935 = vmul.f32 %v1833, %v1884
    %v1936 = vmul.f32 %v1834, %v1894
    %v1937 = vmul.f32 %v1835, %v1904
    %v1938 = vmul.f32 %v1836, %v1914
    %v1939 = vmul.f32 %v1837, %v1924
    %v1940 = vmul.f32 %v1838, %v1934
    %v1942 = vperm.slane %v1806, 0
    %v1944 = vmul.f32 %v1935, %v1942
    %v1945 = vmul.f32 %v1936, %v1942
    %v1946 = vmul.f32 %v1937, %v1942
    %v1947 = vmul.f32 %v1938, %v1942
    %v1948 = vmul.f32 %v1939, %v1942
    %v1949 = vmul.f32 %v1940, %v1942
    %v1951 = vperm.slane %v1808, 0
    %v1953 = vadd.f32 %v1944, %v1951
    %v1954 = vadd.f32 %v1945, %v1951
    %v1955 = vadd.f32 %v1946, %v1951
    %v1956 = vadd.f32 %v1947, %v1951
    %v1957 = vadd.f32 %v1948, %v1951
    %v1958 = vadd.f32 %v1949, %v1951
    %s1959 = scalar_lea.vmem %s4, 64
    %v1960 = vld [vmem:[%s1959] sm:$0xff]
    %v1961 = vld [vmem:[%s1959 + $0x8] sm:$0xff]
    %v1962 = vld [vmem:[%s1959 + $0x10] sm:$0xff]
    %v1963 = vld [vmem:[%s1959 + $0x18] sm:$0xff]
    %s1964 = scalar_lea.vmem %s5, 2
    %v1965 = vld [vmem:[%s1964] sm:$0x1]
    %v1967 = vperm.slane %v1965, 0
    %v1970 = vsel %vm195, %v1953, 0
    %v1973 = vsel %vm195, %v1954, 0
    %v1976 = vsel %vm195, %v1955, 0
    %v1979 = vsel %vm195, %v1956, 0
    %v1982 = vsel %vm195, %v1957, 0
    %v1985 = vsel %vm195, %v1958, 0
    %1987 = vmatpush.msra.mxu0 0.0
    %1988 = vmatpush.msra.mxu0 0.0
    %1989 = vmatpush.msra.mxu0 0.0
    %1990 = vmatpush.msra.mxu0 0.0
    %1991 = vmatpush.msra.mxu0 0.0
    %1992 = vmatpush.msra.mxu0 0.0
    %1993 = vmatpush.msra.mxu0 0.0
    %1994 = vmatpush.msra.mxu0 0.0
    %1995 = vmatpush.msra.mxu0 0.0
    %1996 = vmatpush.msra.mxu0 0.0
    %1997 = vmatpush.msra.mxu0 0.0
    %1998 = vmatpush.msra.mxu0 0.0
    %1999 = vmatpush.msra.mxu0 %v1963
    %2000 = vmatpush.msra.mxu0 %v1962
    %2001 = vmatpush.msra.mxu0 %v1961
    %2002 = vmatpush.msra.mxu0 %v1960
    %2003 = vmatmul.f32.gmra.mxu0 %v1970
    %v2004 = vpop.f32.mrf.mxu0
    %v2005 = vadd.f32 %v1967, %v2004
    %2006 = vmatmul.f32.gmra.mxu0 %v1973
    %v2007 = vpop.f32.mrf.mxu0
    %v2008 = vadd.f32 %v1967, %v2007
    %2009 = vmatmul.f32.gmra.mxu0 %v1976
    %v2010 = vpop.f32.mrf.mxu0
    %v2011 = vadd.f32 %v1967, %v2010
    %2012 = vmatmul.f32.gmra.mxu0 %v1979
    %v2013 = vpop.f32.mrf.mxu0
    %v2014 = vadd.f32 %v1967, %v2013
    %2015 = vmatmul.f32.gmra.mxu0 %v1982
    %v2016 = vpop.f32.mrf.mxu0
    %v2017 = vadd.f32 %v1967, %v2016
    %2018 = vmatmul.f32.gmra.mxu0 %v1985
    %v2019 = vpop.f32.mrf.mxu0
    %v2020 = vadd.f32 %v1967, %v2019
    %2021 = vdwg.mxu0
    %v2022 = vmul.f32 %v2005, 0.35355338
    %v2023 = vmul.f32 %v2008, 0.35355338
    %v2024 = vmul.f32 %v2011, 0.35355338
    %v2025 = vmul.f32 %v2014, 0.35355338
    %v2026 = vmul.f32 %v2017, 0.35355338
    %v2027 = vmul.f32 %v2020, 0.35355338
    %2034 = vrot.lane.b32.xlu0 %v2005, 96
    %v2035 = vpop.permute.xlu0 %2034
    %2036 = vrot.lane.b32.xlu0 %v2008, 96
    %v2037 = vpop.permute.xlu0 %2036
    %2038 = vrot.lane.b32.xlu0 %v2011, 96
    %v2039 = vpop.permute.xlu0 %2038
    %2040 = vrot.lane.b32.xlu0 %v2014, 96
    %v2041 = vpop.permute.xlu0 %2040
    %2042 = vrot.lane.b32.xlu0 %v2017, 96
    %v2043 = vpop.permute.xlu0 %2042
    %2044 = vrot.lane.b32.xlu0 %v2020, 96
    %v2045 = vpop.permute.xlu0 %2044
    %v2047 = vsel %vm438, %v2022, 0
    %v2050 = vsel %vm438, %v2023, 0
    %v2053 = vsel %vm438, %v2024, 0
    %v2056 = vsel %vm438, %v2025, 0
    %v2059 = vsel %vm438, %v2026, 0
    %v2062 = vsel %vm438, %v2027, 0
    %v2064 = vsel %vm438, %v2035, 0
    %v2066 = vsel %vm438, %v2037, 0
    %v2068 = vsel %vm438, %v2039, 0
    %v2070 = vsel %vm438, %v2041, 0
    %v2072 = vsel %vm438, %v2043, 0
    %v2074 = vsel %vm438, %v2045, 0
    %2076 = vmatpush.xpose.msra.mxu0 0.0
    %2077 = vmatpush.xpose.msra.mxu0 0.0
    %2078 = vmatpush.xpose.msra.mxu0 0.0
    %2079 = vmatpush.xpose.msra.mxu0 0.0
    %2080 = vmatpush.xpose.msra.mxu0 0.0
    %2081 = vmatpush.xpose.msra.mxu0 0.0
    %2082 = vmatpush.xpose.msra.mxu0 0.0
    %2083 = vmatpush.xpose.msra.mxu0 0.0
    %2084 = vmatpush.xpose.msra.mxu0 0.0
    %2085 = vmatpush.xpose.msra.mxu0 0.0
    %2086 = vmatpush.xpose.msra.mxu0 %v2074
    %2087 = vmatpush.xpose.msra.mxu0 %v2072
    %2088 = vmatpush.xpose.msra.mxu0 %v2070
    %2089 = vmatpush.xpose.msra.mxu0 %v2068
    %2090 = vmatpush.xpose.msra.mxu0 %v2066
    %2091 = vmatpush.xpose.msra.mxu0 %v2064
    %2092 = vmatmul.f32.gmra.mxu0 %v2047
    %v2093 = vpop.f32.mrf.mxu0
    %v2094 = vadd.f32 %v186, %v2093
    %2095 = vmatmul.f32.gmra.mxu0 %v2050
    %v2096 = vpop.f32.mrf.mxu0
    %v2097 = vadd.f32 %v187, %v2096
    %2098 = vmatmul.f32.gmra.mxu0 %v2053
    %v2099 = vpop.f32.mrf.mxu0
    %v2100 = vadd.f32 %v188, %v2099
    %2101 = vmatmul.f32.gmra.mxu0 %v2056
    %v2102 = vpop.f32.mrf.mxu0
    %v2103 = vadd.f32 %v189, %v2102
    %2104 = vmatmul.f32.gmra.mxu0 %v2059
    %v2105 = vpop.f32.mrf.mxu0
    %v2106 = vadd.f32 %v190, %v2105
    %2107 = vmatmul.f32.gmra.mxu0 %v2062
    %v2108 = vpop.f32.mrf.mxu0
    %v2109 = vadd.f32 %v191, %v2108
    %2110 = vdwg.mxu0
    %v2111 = vsel %vm63, %v2094, -inf
    %2112 = vmax.xlane.f32.xlu0 %v2111
    %v2113 = vpop.xlane.xlu0 %2112
    %v2114 = vsel %vm63, %v2097, -inf
    %2115 = vmax.xlane.f32.xlu0 %v2114
    %v2116 = vpop.xlane.xlu0 %2115
    %v2117 = vsel %vm63, %v2100, -inf
    %2118 = vmax.xlane.f32.xlu0 %v2117
    %v2119 = vpop.xlane.xlu0 %2118
    %v2120 = vsel %vm63, %v2103, -inf
    %2121 = vmax.xlane.f32.xlu0 %v2120
    %v2122 = vpop.xlane.xlu0 %2121
    %v2123 = vsel %vm63, %v2106, -inf
    %2124 = vmax.xlane.f32.xlu0 %v2123
    %v2125 = vpop.xlane.xlu0 %2124
    %v2126 = vsel %vm63, %v2109, -inf
    %2127 = vmax.xlane.f32.xlu0 %v2126
    %v2128 = vpop.xlane.xlu0 %2127
    %v2129 = vsub.f32 %v2094, %v2113
    %v2130 = vsub.f32 %v2097, %v2116
    %v2131 = vsub.f32 %v2100, %v2119
    %v2132 = vsub.f32 %v2103, %v2122
    %v2133 = vsub.f32 %v2106, %v2125
    %v2134 = vsub.f32 %v2109, %v2128
    %v2135 = vmul.f32 %v2129, 1.442695
    %v2136 = vpow.pop %v2135
    %v2137 = vmul.f32 %v2130, 1.442695
    %v2138 = vpow.pop %v2137
    %v2139 = vmul.f32 %v2131, 1.442695
    %v2140 = vpow.pop %v2139
    %v2141 = vmul.f32 %v2132, 1.442695
    %v2142 = vpow.pop %v2141
    %v2143 = vmul.f32 %v2133, 1.442695
    %v2144 = vpow.pop %v2143
    %v2145 = vmul.f32 %v2134, 1.442695
    %v2146 = vpow.pop %v2145
    %v2147 = vsel %vm63, %v2136, 0.0
    %2148 = vadd.xlane.f32.xlu0 %v2147
    %v2149 = vpop.xlane.xlu0 %2148
    %v2150 = vsel %vm63, %v2138, 0.0
    %2151 = vadd.xlane.f32.xlu0 %v2150
    %v2152 = vpop.xlane.xlu0 %2151
    %v2153 = vsel %vm63, %v2140, 0.0
    %2154 = vadd.xlane.f32.xlu0 %v2153
    %v2155 = vpop.xlane.xlu0 %2154
    %v2156 = vsel %vm63, %v2142, 0.0
    %2157 = vadd.xlane.f32.xlu0 %v2156
    %v2158 = vpop.xlane.xlu0 %2157
    %v2159 = vsel %vm63, %v2144, 0.0
    %2160 = vadd.xlane.f32.xlu0 %v2159
    %v2161 = vpop.xlane.xlu0 %2160
    %v2162 = vsel %vm63, %v2146, 0.0
    %2163 = vadd.xlane.f32.xlu0 %v2162
    %v2164 = vpop.xlane.xlu0 %2163
    %v2165 = vrcp.pop %v2149
    %v2166 = vrcp.pop %v2152
    %v2167 = vrcp.pop %v2155
    %v2168 = vrcp.pop %v2158
    %v2169 = vrcp.pop %v2161
    %v2170 = vrcp.pop %v2164
    %v2171 = vmul.f32 %v2136, %v2165
    %v2172 = vmul.f32 %v2138, %v2166
    %v2173 = vmul.f32 %v2140, %v2167
    %v2174 = vmul.f32 %v2142, %v2168
    %v2175 = vmul.f32 %v2144, %v2169
    %v2176 = vmul.f32 %v2146, %v2170
    %2177 = vrot.lane.b32.xlu0 %v2005, 64
    %v2178 = vpop.permute.xlu0 %2177
    %2179 = vrot.lane.b32.xlu0 %v2008, 64
    %v2180 = vpop.permute.xlu0 %2179
    %2181 = vrot.lane.b32.xlu0 %v2011, 64
    %v2182 = vpop.permute.xlu0 %2181
    %2183 = vrot.lane.b32.xlu0 %v2014, 64
    %v2184 = vpop.permute.xlu0 %2183
    %2185 = vrot.lane.b32.xlu0 %v2017, 64
    %v2186 = vpop.permute.xlu0 %2185
    %2187 = vrot.lane.b32.xlu0 %v2020, 64
    %v2188 = vpop.permute.xlu0 %2187
    %v2196 = vsel %vm63, %v2171, 0
    %v2199 = vsel %vm63, %v2172, 0
    %v2202 = vsel %vm63, %v2173, 0
    %v2205 = vsel %vm63, %v2174, 0
    %v2208 = vsel %vm63, %v2175, 0
    %v2211 = vsel %vm63, %v2176, 0
    %2213 = vmatpush.msra.mxu0 0.0
    %2214 = vmatpush.msra.mxu0 0.0
    %2215 = vmatpush.msra.mxu0 0.0
    %2216 = vmatpush.msra.mxu0 0.0
    %2217 = vmatpush.msra.mxu0 0.0
    %2218 = vmatpush.msra.mxu0 0.0
    %2219 = vmatpush.msra.mxu0 0.0
    %2220 = vmatpush.msra.mxu0 0.0
    %2221 = vmatpush.msra.mxu0 0.0
    %2222 = vmatpush.msra.mxu0 0.0
    %2223 = vmatpush.msra.mxu0 %v2188
    %2224 = vmatpush.msra.mxu0 %v2186
    %2225 = vmatpush.msra.mxu0 %v2184
    %2226 = vmatpush.msra.mxu0 %v2182
    %2227 = vmatpush.msra.mxu0 %v2180
    %2228 = vmatpush.msra.mxu0 %v2178
    %2229 = vmatmul.f32.gmra.mxu0 %v2196
    %v2230 = vpop.f32.mrf.mxu0
    %v2231 = vadd.f32 0.0, %v2230
    %2232 = vmatmul.f32.gmra.mxu0 %v2199
    %v2233 = vpop.f32.mrf.mxu0
    %v2234 = vadd.f32 0.0, %v2233
    %2235 = vmatmul.f32.gmra.mxu0 %v2202
    %v2236 = vpop.f32.mrf.mxu0
    %v2237 = vadd.f32 0.0, %v2236
    %2238 = vmatmul.f32.gmra.mxu0 %v2205
    %v2239 = vpop.f32.mrf.mxu0
    %v2240 = vadd.f32 0.0, %v2239
    %2241 = vmatmul.f32.gmra.mxu0 %v2208
    %v2242 = vpop.f32.mrf.mxu0
    %v2243 = vadd.f32 0.0, %v2242
    %2244 = vmatmul.f32.gmra.mxu0 %v2211
    %v2245 = vpop.f32.mrf.mxu0
    %v2246 = vadd.f32 0.0, %v2245
    %2247 = vdwg.mxu0
    %2248 = vrot.lane.b32.xlu0 %v2022, 120
    %v2249 = vpop.permute.xlu0 %2248
    %2250 = vrot.lane.b32.xlu0 %v2023, 120
    %v2251 = vpop.permute.xlu0 %2250
    %2252 = vrot.lane.b32.xlu0 %v2024, 120
    %v2253 = vpop.permute.xlu0 %2252
    %2254 = vrot.lane.b32.xlu0 %v2025, 120
    %v2255 = vpop.permute.xlu0 %2254
    %2256 = vrot.lane.b32.xlu0 %v2026, 120
    %v2257 = vpop.permute.xlu0 %2256
    %2258 = vrot.lane.b32.xlu0 %v2027, 120
    %v2259 = vpop.permute.xlu0 %2258
    %2260 = vrot.lane.b32.xlu0 %v2005, 88
    %v2261 = vpop.permute.xlu0 %2260
    %2262 = vrot.lane.b32.xlu0 %v2008, 88
    %v2263 = vpop.permute.xlu0 %2262
    %2264 = vrot.lane.b32.xlu0 %v2011, 88
    %v2265 = vpop.permute.xlu0 %2264
    %2266 = vrot.lane.b32.xlu0 %v2014, 88
    %v2267 = vpop.permute.xlu0 %2266
    %2268 = vrot.lane.b32.xlu0 %v2017, 88
    %v2269 = vpop.permute.xlu0 %2268
    %2270 = vrot.lane.b32.xlu0 %v2020, 88
    %v2271 = vpop.permute.xlu0 %2270
    %v2272 = vsel %vm438, %v2249, 0
    %v2274 = vsel %vm438, %v2251, 0
    %v2276 = vsel %vm438, %v2253, 0
    %v2278 = vsel %vm438, %v2255, 0
    %v2280 = vsel %vm438, %v2257, 0
    %v2282 = vsel %vm438, %v2259, 0
    %v2284 = vsel %vm438, %v2261, 0
    %v2286 = vsel %vm438, %v2263, 0
    %v2288 = vsel %vm438, %v2265, 0
    %v2290 = vsel %vm438, %v2267, 0
    %v2292 = vsel %vm438, %v2269, 0
    %v2294 = vsel %vm438, %v2271, 0
    %2296 = vmatpush.xpose.msra.mxu0 0.0
    %2297 = vmatpush.xpose.msra.mxu0 0.0
    %2298 = vmatpush.xpose.msra.mxu0 0.0
    %2299 = vmatpush.xpose.msra.mxu0 0.0
    %2300 = vmatpush.xpose.msra.mxu0 0.0
    %2301 = vmatpush.xpose.msra.mxu0 0.0
    %2302 = vmatpush.xpose.msra.mxu0 0.0
    %2303 = vmatpush.xpose.msra.mxu0 0.0
    %2304 = vmatpush.xpose.msra.mxu0 0.0
    %2305 = vmatpush.xpose.msra.mxu0 0.0
    %2306 = vmatpush.xpose.msra.mxu0 %v2294
    %2307 = vmatpush.xpose.msra.mxu0 %v2292
    %2308 = vmatpush.xpose.msra.mxu0 %v2290
    %2309 = vmatpush.xpose.msra.mxu0 %v2288
    %2310 = vmatpush.xpose.msra.mxu0 %v2286
    %2311 = vmatpush.xpose.msra.mxu0 %v2284
    %2312 = vmatmul.f32.gmra.mxu0 %v2272
    %v2313 = vpop.f32.mrf.mxu0
    %v2314 = vadd.f32 %v186, %v2313
    %2315 = vmatmul.f32.gmra.mxu0 %v2274
    %v2316 = vpop.f32.mrf.mxu0
    %v2317 = vadd.f32 %v187, %v2316
    %2318 = vmatmul.f32.gmra.mxu0 %v2276
    %v2319 = vpop.f32.mrf.mxu0
    %v2320 = vadd.f32 %v188, %v2319
    %2321 = vmatmul.f32.gmra.mxu0 %v2278
    %v2322 = vpop.f32.mrf.mxu0
    %v2323 = vadd.f32 %v189, %v2322
    %2324 = vmatmul.f32.gmra.mxu0 %v2280
    %v2325 = vpop.f32.mrf.mxu0
    %v2326 = vadd.f32 %v190, %v2325
    %2327 = vmatmul.f32.gmra.mxu0 %v2282
    %v2328 = vpop.f32.mrf.mxu0
    %v2329 = vadd.f32 %v191, %v2328
    %2330 = vdwg.mxu0
    %v2331 = vsel %vm63, %v2314, -inf
    %2332 = vmax.xlane.f32.xlu0 %v2331
    %v2333 = vpop.xlane.xlu0 %2332
    %v2334 = vsel %vm63, %v2317, -inf
    %2335 = vmax.xlane.f32.xlu0 %v2334
    %v2336 = vpop.xlane.xlu0 %2335
    %v2337 = vsel %vm63, %v2320, -inf
    %2338 = vmax.xlane.f32.xlu0 %v2337
    %v2339 = vpop.xlane.xlu0 %2338
    %v2340 = vsel %vm63, %v2323, -inf
    %2341 = vmax.xlane.f32.xlu0 %v2340
    %v2342 = vpop.xlane.xlu0 %2341
    %v2343 = vsel %vm63, %v2326, -inf
    %2344 = vmax.xlane.f32.xlu0 %v2343
    %v2345 = vpop.xlane.xlu0 %2344
    %v2346 = vsel %vm63, %v2329, -inf
    %2347 = vmax.xlane.f32.xlu0 %v2346
    %v2348 = vpop.xlane.xlu0 %2347
    %v2349 = vsub.f32 %v2314, %v2333
    %v2350 = vsub.f32 %v2317, %v2336
    %v2351 = vsub.f32 %v2320, %v2339
    %v2352 = vsub.f32 %v2323, %v2342
    %v2353 = vsub.f32 %v2326, %v2345
    %v2354 = vsub.f32 %v2329, %v2348
    %v2355 = vmul.f32 %v2349, 1.442695
    %v2356 = vpow.pop %v2355
    %v2357 = vmul.f32 %v2350, 1.442695
    %v2358 = vpow.pop %v2357
    %v2359 = vmul.f32 %v2351, 1.442695
    %v2360 = vpow.pop %v2359
    %v2361 = vmul.f32 %v2352, 1.442695
    %v2362 = vpow.pop %v2361
    %v2363 = vmul.f32 %v2353, 1.442695
    %v2364 = vpow.pop %v2363
    %v2365 = vmul.f32 %v2354, 1.442695
    %v2366 = vpow.pop %v2365
    %v2367 = vsel %vm63, %v2356, 0.0
    %2368 = vadd.xlane.f32.xlu0 %v2367
    %v2369 = vpop.xlane.xlu0 %2368
    %v2370 = vsel %vm63, %v2358, 0.0
    %2371 = vadd.xlane.f32.xlu0 %v2370
    %v2372 = vpop.xlane.xlu0 %2371
    %v2373 = vsel %vm63, %v2360, 0.0
    %2374 = vadd.xlane.f32.xlu0 %v2373
    %v2375 = vpop.xlane.xlu0 %2374
    %v2376 = vsel %vm63, %v2362, 0.0
    %2377 = vadd.xlane.f32.xlu0 %v2376
    %v2378 = vpop.xlane.xlu0 %2377
    %v2379 = vsel %vm63, %v2364, 0.0
    %2380 = vadd.xlane.f32.xlu0 %v2379
    %v2381 = vpop.xlane.xlu0 %2380
    %v2382 = vsel %vm63, %v2366, 0.0
    %2383 = vadd.xlane.f32.xlu0 %v2382
    %v2384 = vpop.xlane.xlu0 %2383
    %v2385 = vrcp.pop %v2369
    %v2386 = vrcp.pop %v2372
    %v2387 = vrcp.pop %v2375
    %v2388 = vrcp.pop %v2378
    %v2389 = vrcp.pop %v2381
    %v2390 = vrcp.pop %v2384
    %v2391 = vmul.f32 %v2356, %v2385
    %v2392 = vmul.f32 %v2358, %v2386
    %v2393 = vmul.f32 %v2360, %v2387
    %v2394 = vmul.f32 %v2362, %v2388
    %v2395 = vmul.f32 %v2364, %v2389
    %v2396 = vmul.f32 %v2366, %v2390
    %2397 = vrot.lane.b32.xlu0 %v2005, 56
    %v2398 = vpop.permute.xlu0 %2397
    %2399 = vrot.lane.b32.xlu0 %v2008, 56
    %v2400 = vpop.permute.xlu0 %2399
    %2401 = vrot.lane.b32.xlu0 %v2011, 56
    %v2402 = vpop.permute.xlu0 %2401
    %2403 = vrot.lane.b32.xlu0 %v2014, 56
    %v2404 = vpop.permute.xlu0 %2403
    %2405 = vrot.lane.b32.xlu0 %v2017, 56
    %v2406 = vpop.permute.xlu0 %2405
    %2407 = vrot.lane.b32.xlu0 %v2020, 56
    %v2408 = vpop.permute.xlu0 %2407
    %v2416 = vsel %vm63, %v2391, 0
    %v2419 = vsel %vm63, %v2392, 0
    %v2422 = vsel %vm63, %v2393, 0
    %v2425 = vsel %vm63, %v2394, 0
    %v2428 = vsel %vm63, %v2395, 0
    %v2431 = vsel %vm63, %v2396, 0
    %2433 = vmatpush.msra.mxu0 0.0
    %2434 = vmatpush.msra.mxu0 0.0
    %2435 = vmatpush.msra.mxu0 0.0
    %2436 = vmatpush.msra.mxu0 0.0
    %2437 = vmatpush.msra.mxu0 0.0
    %2438 = vmatpush.msra.mxu0 0.0
    %2439 = vmatpush.msra.mxu0 0.0
    %2440 = vmatpush.msra.mxu0 0.0
    %2441 = vmatpush.msra.mxu0 0.0
    %2442 = vmatpush.msra.mxu0 0.0
    %2443 = vmatpush.msra.mxu0 %v2408
    %2444 = vmatpush.msra.mxu0 %v2406
    %2445 = vmatpush.msra.mxu0 %v2404
    %2446 = vmatpush.msra.mxu0 %v2402
    %2447 = vmatpush.msra.mxu0 %v2400
    %2448 = vmatpush.msra.mxu0 %v2398
    %2449 = vmatmul.f32.gmra.mxu0 %v2416
    %v2450 = vpop.f32.mrf.mxu0
    %v2451 = vadd.f32 0.0, %v2450
    %2452 = vmatmul.f32.gmra.mxu0 %v2419
    %v2453 = vpop.f32.mrf.mxu0
    %v2454 = vadd.f32 0.0, %v2453
    %2455 = vmatmul.f32.gmra.mxu0 %v2422
    %v2456 = vpop.f32.mrf.mxu0
    %v2457 = vadd.f32 0.0, %v2456
    %2458 = vmatmul.f32.gmra.mxu0 %v2425
    %v2459 = vpop.f32.mrf.mxu0
    %v2460 = vadd.f32 0.0, %v2459
    %2461 = vmatmul.f32.gmra.mxu0 %v2428
    %v2462 = vpop.f32.mrf.mxu0
    %v2463 = vadd.f32 0.0, %v2462
    %2464 = vmatmul.f32.gmra.mxu0 %v2431
    %v2465 = vpop.f32.mrf.mxu0
    %v2466 = vadd.f32 0.0, %v2465
    %2467 = vdwg.mxu0
    %2468 = vrot.lane.b32.xlu0 %v2022, 112
    %v2469 = vpop.permute.xlu0 %2468
    %2470 = vrot.lane.b32.xlu0 %v2023, 112
    %v2471 = vpop.permute.xlu0 %2470
    %2472 = vrot.lane.b32.xlu0 %v2024, 112
    %v2473 = vpop.permute.xlu0 %2472
    %2474 = vrot.lane.b32.xlu0 %v2025, 112
    %v2475 = vpop.permute.xlu0 %2474
    %2476 = vrot.lane.b32.xlu0 %v2026, 112
    %v2477 = vpop.permute.xlu0 %2476
    %2478 = vrot.lane.b32.xlu0 %v2027, 112
    %v2479 = vpop.permute.xlu0 %2478
    %2480 = vrot.lane.b32.xlu0 %v2005, 80
    %v2481 = vpop.permute.xlu0 %2480
    %2482 = vrot.lane.b32.xlu0 %v2008, 80
    %v2483 = vpop.permute.xlu0 %2482
    %2484 = vrot.lane.b32.xlu0 %v2011, 80
    %v2485 = vpop.permute.xlu0 %2484
    %2486 = vrot.lane.b32.xlu0 %v2014, 80
    %v2487 = vpop.permute.xlu0 %2486
    %2488 = vrot.lane.b32.xlu0 %v2017, 80
    %v2489 = vpop.permute.xlu0 %2488
    %2490 = vrot.lane.b32.xlu0 %v2020, 80
    %v2491 = vpop.permute.xlu0 %2490
    %v2492 = vsel %vm438, %v2469, 0
    %v2494 = vsel %vm438, %v2471, 0
    %v2496 = vsel %vm438, %v2473, 0
    %v2498 = vsel %vm438, %v2475, 0
    %v2500 = vsel %vm438, %v2477, 0
    %v2502 = vsel %vm438, %v2479, 0
    %v2504 = vsel %vm438, %v2481, 0
    %v2506 = vsel %vm438, %v2483, 0
    %v2508 = vsel %vm438, %v2485, 0
    %v2510 = vsel %vm438, %v2487, 0
    %v2512 = vsel %vm438, %v2489, 0
    %v2514 = vsel %vm438, %v2491, 0
    %2516 = vmatpush.xpose.msra.mxu0 0.0
    %2517 = vmatpush.xpose.msra.mxu0 0.0
    %2518 = vmatpush.xpose.msra.mxu0 0.0
    %2519 = vmatpush.xpose.msra.mxu0 0.0
    %2520 = vmatpush.xpose.msra.mxu0 0.0
    %2521 = vmatpush.xpose.msra.mxu0 0.0
    %2522 = vmatpush.xpose.msra.mxu0 0.0
    %2523 = vmatpush.xpose.msra.mxu0 0.0
    %2524 = vmatpush.xpose.msra.mxu0 0.0
    %2525 = vmatpush.xpose.msra.mxu0 0.0
    %2526 = vmatpush.xpose.msra.mxu0 %v2514
    %2527 = vmatpush.xpose.msra.mxu0 %v2512
    %2528 = vmatpush.xpose.msra.mxu0 %v2510
    %2529 = vmatpush.xpose.msra.mxu0 %v2508
    %2530 = vmatpush.xpose.msra.mxu0 %v2506
    %2531 = vmatpush.xpose.msra.mxu0 %v2504
    %2532 = vmatmul.f32.gmra.mxu0 %v2492
    %v2533 = vpop.f32.mrf.mxu0
    %v2534 = vadd.f32 %v186, %v2533
    %2535 = vmatmul.f32.gmra.mxu0 %v2494
    %v2536 = vpop.f32.mrf.mxu0
    %v2537 = vadd.f32 %v187, %v2536
    %2538 = vmatmul.f32.gmra.mxu0 %v2496
    %v2539 = vpop.f32.mrf.mxu0
    %v2540 = vadd.f32 %v188, %v2539
    %2541 = vmatmul.f32.gmra.mxu0 %v2498
    %v2542 = vpop.f32.mrf.mxu0
    %v2543 = vadd.f32 %v189, %v2542
    %2544 = vmatmul.f32.gmra.mxu0 %v2500
    %v2545 = vpop.f32.mrf.mxu0
    %v2546 = vadd.f32 %v190, %v2545
    %2547 = vmatmul.f32.gmra.mxu0 %v2502
    %v2548 = vpop.f32.mrf.mxu0
    %v2549 = vadd.f32 %v191, %v2548
    %2550 = vdwg.mxu0
    %v2551 = vsel %vm63, %v2534, -inf
    %2552 = vmax.xlane.f32.xlu0 %v2551
    %v2553 = vpop.xlane.xlu0 %2552
    %v2554 = vsel %vm63, %v2537, -inf
    %2555 = vmax.xlane.f32.xlu0 %v2554
    %v2556 = vpop.xlane.xlu0 %2555
    %v2557 = vsel %vm63, %v2540, -inf
    %2558 = vmax.xlane.f32.xlu0 %v2557
    %v2559 = vpop.xlane.xlu0 %2558
    %v2560 = vsel %vm63, %v2543, -inf
    %2561 = vmax.xlane.f32.xlu0 %v2560
    %v2562 = vpop.xlane.xlu0 %2561
    %v2563 = vsel %vm63, %v2546, -inf
    %2564 = vmax.xlane.f32.xlu0 %v2563
    %v2565 = vpop.xlane.xlu0 %2564
    %v2566 = vsel %vm63, %v2549, -inf
    %2567 = vmax.xlane.f32.xlu0 %v2566
    %v2568 = vpop.xlane.xlu0 %2567
    %v2569 = vsub.f32 %v2534, %v2553
    %v2570 = vsub.f32 %v2537, %v2556
    %v2571 = vsub.f32 %v2540, %v2559
    %v2572 = vsub.f32 %v2543, %v2562
    %v2573 = vsub.f32 %v2546, %v2565
    %v2574 = vsub.f32 %v2549, %v2568
    %v2575 = vmul.f32 %v2569, 1.442695
    %v2576 = vpow.pop %v2575
    %v2577 = vmul.f32 %v2570, 1.442695
    %v2578 = vpow.pop %v2577
    %v2579 = vmul.f32 %v2571, 1.442695
    %v2580 = vpow.pop %v2579
    %v2581 = vmul.f32 %v2572, 1.442695
    %v2582 = vpow.pop %v2581
    %v2583 = vmul.f32 %v2573, 1.442695
    %v2584 = vpow.pop %v2583
    %v2585 = vmul.f32 %v2574, 1.442695
    %v2586 = vpow.pop %v2585
    %v2587 = vsel %vm63, %v2576, 0.0
    %2588 = vadd.xlane.f32.xlu0 %v2587
    %v2589 = vpop.xlane.xlu0 %2588
    %v2590 = vsel %vm63, %v2578, 0.0
    %2591 = vadd.xlane.f32.xlu0 %v2590
    %v2592 = vpop.xlane.xlu0 %2591
    %v2593 = vsel %vm63, %v2580, 0.0
    %2594 = vadd.xlane.f32.xlu0 %v2593
    %v2595 = vpop.xlane.xlu0 %2594
    %v2596 = vsel %vm63, %v2582, 0.0
    %2597 = vadd.xlane.f32.xlu0 %v2596
    %v2598 = vpop.xlane.xlu0 %2597
    %v2599 = vsel %vm63, %v2584, 0.0
    %2600 = vadd.xlane.f32.xlu0 %v2599
    %v2601 = vpop.xlane.xlu0 %2600
    %v2602 = vsel %vm63, %v2586, 0.0
    %2603 = vadd.xlane.f32.xlu0 %v2602
    %v2604 = vpop.xlane.xlu0 %2603
    %v2605 = vrcp.pop %v2589
    %v2606 = vrcp.pop %v2592
    %v2607 = vrcp.pop %v2595
    %v2608 = vrcp.pop %v2598
    %v2609 = vrcp.pop %v2601
    %v2610 = vrcp.pop %v2604
    %v2611 = vmul.f32 %v2576, %v2605
    %v2612 = vmul.f32 %v2578, %v2606
    %v2613 = vmul.f32 %v2580, %v2607
    %v2614 = vmul.f32 %v2582, %v2608
    %v2615 = vmul.f32 %v2584, %v2609
    %v2616 = vmul.f32 %v2586, %v2610
    %2617 = vrot.lane.b32.xlu0 %v2005, 48
    %v2618 = vpop.permute.xlu0 %2617
    %2619 = vrot.lane.b32.xlu0 %v2008, 48
    %v2620 = vpop.permute.xlu0 %2619
    %2621 = vrot.lane.b32.xlu0 %v2011, 48
    %v2622 = vpop.permute.xlu0 %2621
    %2623 = vrot.lane.b32.xlu0 %v2014, 48
    %v2624 = vpop.permute.xlu0 %2623
    %2625 = vrot.lane.b32.xlu0 %v2017, 48
    %v2626 = vpop.permute.xlu0 %2625
    %2627 = vrot.lane.b32.xlu0 %v2020, 48
    %v2628 = vpop.permute.xlu0 %2627
    %v2636 = vsel %vm63, %v2611, 0
    %v2639 = vsel %vm63, %v2612, 0
    %v2642 = vsel %vm63, %v2613, 0
    %v2645 = vsel %vm63, %v2614, 0
    %v2648 = vsel %vm63, %v2615, 0
    %v2651 = vsel %vm63, %v2616, 0
    %2653 = vmatpush.msra.mxu0 0.0
    %2654 = vmatpush.msra.mxu0 0.0
    %2655 = vmatpush.msra.mxu0 0.0
    %2656 = vmatpush.msra.mxu0 0.0
    %2657 = vmatpush.msra.mxu0 0.0
    %2658 = vmatpush.msra.mxu0 0.0
    %2659 = vmatpush.msra.mxu0 0.0
    %2660 = vmatpush.msra.mxu0 0.0
    %2661 = vmatpush.msra.mxu0 0.0
    %2662 = vmatpush.msra.mxu0 0.0
    %2663 = vmatpush.msra.mxu0 %v2628
    %2664 = vmatpush.msra.mxu0 %v2626
    %2665 = vmatpush.msra.mxu0 %v2624
    %2666 = vmatpush.msra.mxu0 %v2622
    %2667 = vmatpush.msra.mxu0 %v2620
    %2668 = vmatpush.msra.mxu0 %v2618
    %2669 = vmatmul.f32.gmra.mxu0 %v2636
    %v2670 = vpop.f32.mrf.mxu0
    %v2671 = vadd.f32 0.0, %v2670
    %2672 = vmatmul.f32.gmra.mxu0 %v2639
    %v2673 = vpop.f32.mrf.mxu0
    %v2674 = vadd.f32 0.0, %v2673
    %2675 = vmatmul.f32.gmra.mxu0 %v2642
    %v2676 = vpop.f32.mrf.mxu0
    %v2677 = vadd.f32 0.0, %v2676
    %2678 = vmatmul.f32.gmra.mxu0 %v2645
    %v2679 = vpop.f32.mrf.mxu0
    %v2680 = vadd.f32 0.0, %v2679
    %2681 = vmatmul.f32.gmra.mxu0 %v2648
    %v2682 = vpop.f32.mrf.mxu0
    %v2683 = vadd.f32 0.0, %v2682
    %2684 = vmatmul.f32.gmra.mxu0 %v2651
    %v2685 = vpop.f32.mrf.mxu0
    %v2686 = vadd.f32 0.0, %v2685
    %2687 = vdwg.mxu0
    %2688 = vrot.lane.b32.xlu0 %v2022, 104
    %v2689 = vpop.permute.xlu0 %2688
    %2690 = vrot.lane.b32.xlu0 %v2023, 104
    %v2691 = vpop.permute.xlu0 %2690
    %2692 = vrot.lane.b32.xlu0 %v2024, 104
    %v2693 = vpop.permute.xlu0 %2692
    %2694 = vrot.lane.b32.xlu0 %v2025, 104
    %v2695 = vpop.permute.xlu0 %2694
    %2696 = vrot.lane.b32.xlu0 %v2026, 104
    %v2697 = vpop.permute.xlu0 %2696
    %2698 = vrot.lane.b32.xlu0 %v2027, 104
    %v2699 = vpop.permute.xlu0 %2698
    %2700 = vrot.lane.b32.xlu0 %v2005, 72
    %v2701 = vpop.permute.xlu0 %2700
    %2702 = vrot.lane.b32.xlu0 %v2008, 72
    %v2703 = vpop.permute.xlu0 %2702
    %2704 = vrot.lane.b32.xlu0 %v2011, 72
    %v2705 = vpop.permute.xlu0 %2704
    %2706 = vrot.lane.b32.xlu0 %v2014, 72
    %v2707 = vpop.permute.xlu0 %2706
    %2708 = vrot.lane.b32.xlu0 %v2017, 72
    %v2709 = vpop.permute.xlu0 %2708
    %2710 = vrot.lane.b32.xlu0 %v2020, 72
    %v2711 = vpop.permute.xlu0 %2710
    %v2712 = vsel %vm438, %v2689, 0
    %v2714 = vsel %vm438, %v2691, 0
    %v2716 = vsel %vm438, %v2693, 0
    %v2718 = vsel %vm438, %v2695, 0
    %v2720 = vsel %vm438, %v2697, 0
    %v2722 = vsel %vm438, %v2699, 0
    %v2724 = vsel %vm438, %v2701, 0
    %v2726 = vsel %vm438, %v2703, 0
    %v2728 = vsel %vm438, %v2705, 0
    %v2730 = vsel %vm438, %v2707, 0
    %v2732 = vsel %vm438, %v2709, 0
    %v2734 = vsel %vm438, %v2711, 0
    %2736 = vmatpush.xpose.msra.mxu0 0.0
    %2737 = vmatpush.xpose.msra.mxu0 0.0
    %2738 = vmatpush.xpose.msra.mxu0 0.0
    %2739 = vmatpush.xpose.msra.mxu0 0.0
    %2740 = vmatpush.xpose.msra.mxu0 0.0
    %2741 = vmatpush.xpose.msra.mxu0 0.0
    %2742 = vmatpush.xpose.msra.mxu0 0.0
    %2743 = vmatpush.xpose.msra.mxu0 0.0
    %2744 = vmatpush.xpose.msra.mxu0 0.0
    %2745 = vmatpush.xpose.msra.mxu0 0.0
    %2746 = vmatpush.xpose.msra.mxu0 %v2734
    %2747 = vmatpush.xpose.msra.mxu0 %v2732
    %2748 = vmatpush.xpose.msra.mxu0 %v2730
    %2749 = vmatpush.xpose.msra.mxu0 %v2728
    %2750 = vmatpush.xpose.msra.mxu0 %v2726
    %2751 = vmatpush.xpose.msra.mxu0 %v2724
    %2752 = vmatmul.f32.gmra.mxu0 %v2712
    %v2753 = vpop.f32.mrf.mxu0
    %v2754 = vadd.f32 %v186, %v2753
    %2755 = vmatmul.f32.gmra.mxu0 %v2714
    %v2756 = vpop.f32.mrf.mxu0
    %v2757 = vadd.f32 %v187, %v2756
    %2758 = vmatmul.f32.gmra.mxu0 %v2716
    %v2759 = vpop.f32.mrf.mxu0
    %v2760 = vadd.f32 %v188, %v2759
    %2761 = vmatmul.f32.gmra.mxu0 %v2718
    %v2762 = vpop.f32.mrf.mxu0
    %v2763 = vadd.f32 %v189, %v2762
    %2764 = vmatmul.f32.gmra.mxu0 %v2720
    %v2765 = vpop.f32.mrf.mxu0
    %v2766 = vadd.f32 %v190, %v2765
    %2767 = vmatmul.f32.gmra.mxu0 %v2722
    %v2768 = vpop.f32.mrf.mxu0
    %v2769 = vadd.f32 %v191, %v2768
    %2770 = vdwg.mxu0
    %v2771 = vsel %vm63, %v2754, -inf
    %2772 = vmax.xlane.f32.xlu0 %v2771
    %v2773 = vpop.xlane.xlu0 %2772
    %v2774 = vsel %vm63, %v2757, -inf
    %2775 = vmax.xlane.f32.xlu0 %v2774
    %v2776 = vpop.xlane.xlu0 %2775
    %v2777 = vsel %vm63, %v2760, -inf
    %2778 = vmax.xlane.f32.xlu0 %v2777
    %v2779 = vpop.xlane.xlu0 %2778
    %v2780 = vsel %vm63, %v2763, -inf
    %2781 = vmax.xlane.f32.xlu0 %v2780
    %v2782 = vpop.xlane.xlu0 %2781
    %v2783 = vsel %vm63, %v2766, -inf
    %2784 = vmax.xlane.f32.xlu0 %v2783
    %v2785 = vpop.xlane.xlu0 %2784
    %v2786 = vsel %vm63, %v2769, -inf
    %2787 = vmax.xlane.f32.xlu0 %v2786
    %v2788 = vpop.xlane.xlu0 %2787
    %v2789 = vsub.f32 %v2754, %v2773
    %v2790 = vsub.f32 %v2757, %v2776
    %v2791 = vsub.f32 %v2760, %v2779
    %v2792 = vsub.f32 %v2763, %v2782
    %v2793 = vsub.f32 %v2766, %v2785
    %v2794 = vsub.f32 %v2769, %v2788
    %v2795 = vmul.f32 %v2789, 1.442695
    %v2796 = vpow.pop %v2795
    %v2797 = vmul.f32 %v2790, 1.442695
    %v2798 = vpow.pop %v2797
    %v2799 = vmul.f32 %v2791, 1.442695
    %v2800 = vpow.pop %v2799
    %v2801 = vmul.f32 %v2792, 1.442695
    %v2802 = vpow.pop %v2801
    %v2803 = vmul.f32 %v2793, 1.442695
    %v2804 = vpow.pop %v2803
    %v2805 = vmul.f32 %v2794, 1.442695
    %v2806 = vpow.pop %v2805
    %v2807 = vsel %vm63, %v2796, 0.0
    %2808 = vadd.xlane.f32.xlu0 %v2807
    %v2809 = vpop.xlane.xlu0 %2808
    %v2810 = vsel %vm63, %v2798, 0.0
    %2811 = vadd.xlane.f32.xlu0 %v2810
    %v2812 = vpop.xlane.xlu0 %2811
    %v2813 = vsel %vm63, %v2800, 0.0
    %2814 = vadd.xlane.f32.xlu0 %v2813
    %v2815 = vpop.xlane.xlu0 %2814
    %v2816 = vsel %vm63, %v2802, 0.0
    %2817 = vadd.xlane.f32.xlu0 %v2816
    %v2818 = vpop.xlane.xlu0 %2817
    %v2819 = vsel %vm63, %v2804, 0.0
    %2820 = vadd.xlane.f32.xlu0 %v2819
    %v2821 = vpop.xlane.xlu0 %2820
    %v2822 = vsel %vm63, %v2806, 0.0
    %2823 = vadd.xlane.f32.xlu0 %v2822
    %v2824 = vpop.xlane.xlu0 %2823
    %v2825 = vrcp.pop %v2809
    %v2826 = vrcp.pop %v2812
    %v2827 = vrcp.pop %v2815
    %v2828 = vrcp.pop %v2818
    %v2829 = vrcp.pop %v2821
    %v2830 = vrcp.pop %v2824
    %v2831 = vmul.f32 %v2796, %v2825
    %v2832 = vmul.f32 %v2798, %v2826
    %v2833 = vmul.f32 %v2800, %v2827
    %v2834 = vmul.f32 %v2802, %v2828
    %v2835 = vmul.f32 %v2804, %v2829
    %v2836 = vmul.f32 %v2806, %v2830
    %2837 = vrot.lane.b32.xlu0 %v2005, 40
    %v2838 = vpop.permute.xlu0 %2837
    %2839 = vrot.lane.b32.xlu0 %v2008, 40
    %v2840 = vpop.permute.xlu0 %2839
    %2841 = vrot.lane.b32.xlu0 %v2011, 40
    %v2842 = vpop.permute.xlu0 %2841
    %2843 = vrot.lane.b32.xlu0 %v2014, 40
    %v2844 = vpop.permute.xlu0 %2843
    %2845 = vrot.lane.b32.xlu0 %v2017, 40
    %v2846 = vpop.permute.xlu0 %2845
    %2847 = vrot.lane.b32.xlu0 %v2020, 40
    %v2848 = vpop.permute.xlu0 %2847
    %v2856 = vsel %vm63, %v2831, 0
    %v2859 = vsel %vm63, %v2832, 0
    %v2862 = vsel %vm63, %v2833, 0
    %v2865 = vsel %vm63, %v2834, 0
    %v2868 = vsel %vm63, %v2835, 0
    %v2871 = vsel %vm63, %v2836, 0
    %2873 = vmatpush.msra.mxu0 0.0
    %2874 = vmatpush.msra.mxu0 0.0
    %2875 = vmatpush.msra.mxu0 0.0
    %2876 = vmatpush.msra.mxu0 0.0
    %2877 = vmatpush.msra.mxu0 0.0
    %2878 = vmatpush.msra.mxu0 0.0
    %2879 = vmatpush.msra.mxu0 0.0
    %2880 = vmatpush.msra.mxu0 0.0
    %2881 = vmatpush.msra.mxu0 0.0
    %2882 = vmatpush.msra.mxu0 0.0
    %2883 = vmatpush.msra.mxu0 %v2848
    %2884 = vmatpush.msra.mxu0 %v2846
    %2885 = vmatpush.msra.mxu0 %v2844
    %2886 = vmatpush.msra.mxu0 %v2842
    %2887 = vmatpush.msra.mxu0 %v2840
    %2888 = vmatpush.msra.mxu0 %v2838
    %2889 = vmatmul.f32.gmra.mxu0 %v2856
    %v2890 = vpop.f32.mrf.mxu0
    %v2891 = vadd.f32 0.0, %v2890
    %2892 = vmatmul.f32.gmra.mxu0 %v2859
    %v2893 = vpop.f32.mrf.mxu0
    %v2894 = vadd.f32 0.0, %v2893
    %2895 = vmatmul.f32.gmra.mxu0 %v2862
    %v2896 = vpop.f32.mrf.mxu0
    %v2897 = vadd.f32 0.0, %v2896
    %2898 = vmatmul.f32.gmra.mxu0 %v2865
    %v2899 = vpop.f32.mrf.mxu0
    %v2900 = vadd.f32 0.0, %v2899
    %2901 = vmatmul.f32.gmra.mxu0 %v2868
    %v2902 = vpop.f32.mrf.mxu0
    %v2903 = vadd.f32 0.0, %v2902
    %2904 = vmatmul.f32.gmra.mxu0 %v2871
    %v2905 = vpop.f32.mrf.mxu0
    %v2906 = vadd.f32 0.0, %v2905
    %2907 = vdwg.mxu0
    %2914 = vrot.lane.b32.xlu0 %v2451, 8
    %v2915 = vpop.permute.xlu0 %2914
    %2916 = vrot.lane.b32.xlu0 %v2454, 8
    %v2917 = vpop.permute.xlu0 %2916
    %2918 = vrot.lane.b32.xlu0 %v2457, 8
    %v2919 = vpop.permute.xlu0 %2918
    %2920 = vrot.lane.b32.xlu0 %v2460, 8
    %v2921 = vpop.permute.xlu0 %2920
    %2922 = vrot.lane.b32.xlu0 %v2463, 8
    %v2923 = vpop.permute.xlu0 %2922
    %2924 = vrot.lane.b32.xlu0 %v2466, 8
    %v2925 = vpop.permute.xlu0 %2924
    %2938 = vrot.lane.b32.xlu0 %v2671, 16
    %v2939 = vpop.permute.xlu0 %2938
    %2940 = vrot.lane.b32.xlu0 %v2674, 16
    %v2941 = vpop.permute.xlu0 %2940
    %2942 = vrot.lane.b32.xlu0 %v2677, 16
    %v2943 = vpop.permute.xlu0 %2942
    %2944 = vrot.lane.b32.xlu0 %v2680, 16
    %v2945 = vpop.permute.xlu0 %2944
    %2946 = vrot.lane.b32.xlu0 %v2683, 16
    %v2947 = vpop.permute.xlu0 %2946
    %2948 = vrot.lane.b32.xlu0 %v2686, 16
    %v2949 = vpop.permute.xlu0 %2948
    %2962 = vrot.lane.b32.xlu0 %v2891, 24
    %v2963 = vpop.permute.xlu0 %2962
    %2964 = vrot.lane.b32.xlu0 %v2894, 24
    %v2965 = vpop.permute.xlu0 %2964
    %2966 = vrot.lane.b32.xlu0 %v2897, 24
    %v2967 = vpop.permute.xlu0 %2966
    %2968 = vrot.lane.b32.xlu0 %v2900, 24
    %v2969 = vpop.permute.xlu0 %2968
    %2970 = vrot.lane.b32.xlu0 %v2903, 24
    %v2971 = vpop.permute.xlu0 %2970
    %2972 = vrot.lane.b32.xlu0 %v2906, 24
    %v2973 = vpop.permute.xlu0 %2972
    %v2980 = vsel %vm438, %v2231, %v2915
    %v2981 = vsel %vm438, %v2234, %v2917
    %v2982 = vsel %vm438, %v2237, %v2919
    %v2983 = vsel %vm438, %v2240, %v2921
    %v2984 = vsel %vm438, %v2243, %v2923
    %v2985 = vsel %vm438, %v2246, %v2925
    %v2986 = vsel %vm1379, %v2980, %v2939
    %v2987 = vsel %vm1379, %v2981, %v2941
    %v2988 = vsel %vm1379, %v2982, %v2943
    %v2989 = vsel %vm1379, %v2983, %v2945
    %v2990 = vsel %vm1379, %v2984, %v2947
    %v2991 = vsel %vm1379, %v2985, %v2949
    %v2992 = vsel %vm1386, %v2986, %v2963
    %v2993 = vsel %vm1386, %v2987, %v2965
    %v2994 = vsel %vm1386, %v2988, %v2967
    %v2995 = vsel %vm1386, %v2989, %v2969
    %v2996 = vsel %vm1386, %v2990, %v2971
    %v2997 = vsel %vm1386, %v2991, %v2973
    %s2998 = scalar_lea.vmem %s6, 32
    %v2999 = vld [vmem:[%s2998] sm:$0xff]
    %v3000 = vld [vmem:[%s2998 + $0x8] sm:$0xff]
    %v3001 = vld [vmem:[%s2998 + $0x10] sm:$0xff]
    %v3002 = vld [vmem:[%s2998 + $0x18] sm:$0xff]
    %v3004 = vsel %vm195, %v2992, 0
    %v3007 = vsel %vm195, %v2993, 0
    %v3010 = vsel %vm195, %v2994, 0
    %v3013 = vsel %vm195, %v2995, 0
    %v3016 = vsel %vm195, %v2996, 0
    %v3019 = vsel %vm195, %v2997, 0
    %3021 = vmatpush.msra.mxu0 0.0
    %3022 = vmatpush.msra.mxu0 0.0
    %3023 = vmatpush.msra.mxu0 0.0
    %3024 = vmatpush.msra.mxu0 0.0
    %3025 = vmatpush.msra.mxu0 0.0
    %3026 = vmatpush.msra.mxu0 0.0
    %3027 = vmatpush.msra.mxu0 0.0
    %3028 = vmatpush.msra.mxu0 0.0
    %3029 = vmatpush.msra.mxu0 0.0
    %3030 = vmatpush.msra.mxu0 0.0
    %3031 = vmatpush.msra.mxu0 0.0
    %3032 = vmatpush.msra.mxu0 0.0
    %3033 = vmatpush.msra.mxu0 %v3002
    %3034 = vmatpush.msra.mxu0 %v3001
    %3035 = vmatpush.msra.mxu0 %v3000
    %3036 = vmatpush.msra.mxu0 %v2999
    %3037 = vmatmul.f32.gmra.mxu0 %v3004
    %v3038 = vpop.f32.mrf.mxu0
    %v3039 = vadd.f32 0.0, %v3038
    %3040 = vmatmul.f32.gmra.mxu0 %v3007
    %v3041 = vpop.f32.mrf.mxu0
    %v3042 = vadd.f32 0.0, %v3041
    %3043 = vmatmul.f32.gmra.mxu0 %v3010
    %v3044 = vpop.f32.mrf.mxu0
    %v3045 = vadd.f32 0.0, %v3044
    %3046 = vmatmul.f32.gmra.mxu0 %v3013
    %v3047 = vpop.f32.mrf.mxu0
    %v3048 = vadd.f32 0.0, %v3047
    %3049 = vmatmul.f32.gmra.mxu0 %v3016
    %v3050 = vpop.f32.mrf.mxu0
    %v3051 = vadd.f32 0.0, %v3050
    %3052 = vmatmul.f32.gmra.mxu0 %v3019
    %v3053 = vpop.f32.mrf.mxu0
    %v3054 = vadd.f32 0.0, %v3053
    %3055 = vdwg.mxu0
    %v3056 = vadd.f32 %v1799, %v3039
    %v3057 = vadd.f32 %v1800, %v3042
    %v3058 = vadd.f32 %v1801, %v3045
    %v3059 = vadd.f32 %v1802, %v3048
    %v3060 = vadd.f32 %v1803, %v3051
    %v3061 = vadd.f32 %v1804, %v3054
    %s3062 = scalar_lea.vmem %s8, 2
    %v3063 = vld [vmem:[%s3062] sm:$0x1]
    %v3065 = vperm.slane %v3063, 0
    %v3067 = vadd.f32 %v3056, %v3065
    %v3068 = vadd.f32 %v3057, %v3065
    %v3069 = vadd.f32 %v3058, %v3065
    %v3070 = vadd.f32 %v3059, %v3065
    %v3071 = vadd.f32 %v3060, %v3065
    %v3072 = vadd.f32 %v3061, %v3065
    %s3073 = scalar_lea.vmem %s3, 6
    %v3074 = vld [vmem:[%s3073] sm:$0x1]
    %s3075 = scalar_lea.vmem %s3, 7
    %v3076 = vld [vmem:[%s3075] sm:$0x1]
    %v3077 = vsel %vm195, %v3067, 0.0
    %3078 = vadd.xlane.f32.xlu0 %v3077
    %v3079 = vpop.xlane.xlu0 %3078
    %v3080 = vsel %vm195, %v3068, 0.0
    %3081 = vadd.xlane.f32.xlu0 %v3080
    %v3082 = vpop.xlane.xlu0 %3081
    %v3083 = vsel %vm195, %v3069, 0.0
    %3084 = vadd.xlane.f32.xlu0 %v3083
    %v3085 = vpop.xlane.xlu0 %3084
    %v3086 = vsel %vm195, %v3070, 0.0
    %3087 = vadd.xlane.f32.xlu0 %v3086
    %v3088 = vpop.xlane.xlu0 %3087
    %v3089 = vsel %vm195, %v3071, 0.0
    %3090 = vadd.xlane.f32.xlu0 %v3089
    %v3091 = vpop.xlane.xlu0 %3090
    %v3092 = vsel %vm195, %v3072, 0.0
    %3093 = vadd.xlane.f32.xlu0 %v3092
    %v3094 = vpop.xlane.xlu0 %3093
    %v3095 = vmul.f32 %v3079, %v220
    %v3096 = vmul.f32 %v3082, %v220
    %v3097 = vmul.f32 %v3085, %v220
    %v3098 = vmul.f32 %v3088, %v220
    %v3099 = vmul.f32 %v3091, %v220
    %v3100 = vmul.f32 %v3094, %v220
    %v3101 = vsub.f32 %v3067, %v3095
    %v3102 = vsub.f32 %v3068, %v3096
    %v3103 = vsub.f32 %v3069, %v3097
    %v3104 = vsub.f32 %v3070, %v3098
    %v3105 = vsub.f32 %v3071, %v3099
    %v3106 = vsub.f32 %v3072, %v3100
    %v3107 = vmul.f32 %v3101, %v3101
    %v3108 = vmul.f32 %v3102, %v3102
    %v3109 = vmul.f32 %v3103, %v3103
    %v3110 = vmul.f32 %v3104, %v3104
    %v3111 = vmul.f32 %v3105, %v3105
    %v3112 = vmul.f32 %v3106, %v3106
    %v3113 = vsel %vm195, %v3107, 0.0
    %3114 = vadd.xlane.f32.xlu0 %v3113
    %v3115 = vpop.xlane.xlu0 %3114
    %v3116 = vsel %vm195, %v3108, 0.0
    %3117 = vadd.xlane.f32.xlu0 %v3116
    %v3118 = vpop.xlane.xlu0 %3117
    %v3119 = vsel %vm195, %v3109, 0.0
    %3120 = vadd.xlane.f32.xlu0 %v3119
    %v3121 = vpop.xlane.xlu0 %3120
    %v3122 = vsel %vm195, %v3110, 0.0
    %3123 = vadd.xlane.f32.xlu0 %v3122
    %v3124 = vpop.xlane.xlu0 %3123
    %v3125 = vsel %vm195, %v3111, 0.0
    %3126 = vadd.xlane.f32.xlu0 %v3125
    %v3127 = vpop.xlane.xlu0 %3126
    %v3128 = vsel %vm195, %v3112, 0.0
    %3129 = vadd.xlane.f32.xlu0 %v3128
    %v3130 = vpop.xlane.xlu0 %3129
    %v3131 = vmul.f32 %v3115, %v220
    %v3132 = vmul.f32 %v3118, %v220
    %v3133 = vmul.f32 %v3121, %v220
    %v3134 = vmul.f32 %v3124, %v220
    %v3135 = vmul.f32 %v3127, %v220
    %v3136 = vmul.f32 %v3130, %v220
    %v3137 = vadd.f32 %v3131, 1e-06
    %v3138 = vadd.f32 %v3132, 1e-06
    %v3139 = vadd.f32 %v3133, 1e-06
    %v3140 = vadd.f32 %v3134, 1e-06
    %v3141 = vadd.f32 %v3135, 1e-06
    %v3142 = vadd.f32 %v3136, 1e-06
    %v3143 = vrsqrt.pop %v3137
    %v3144 = vmul.f32 %v3143, %v3137
    %v3145 = vmul.f32 %v3144, %v3143
    %v3146 = vmul.f32 0.5, %v3145
    %v3147 = vsub.f32 1.5, %v3146
    %v3148 = vmul.f32 %v3143, %v3147
    %vm3149 = vweird.f32 %v3137
    %vm3150 = vweird.f32 %v3143
    %vm3151 = vmor %vm3149, %vm3150
    %v3152 = vsel %vm3151, %v3143, %v3148
    %v3153 = vrsqrt.pop %v3138
    %v3154 = vmul.f32 %v3153, %v3138
    %v3155 = vmul.f32 %v3154, %v3153
    %v3156 = vmul.f32 0.5, %v3155
    %v3157 = vsub.f32 1.5, %v3156
    %v3158 = vmul.f32 %v3153, %v3157
    %vm3159 = vweird.f32 %v3138
    %vm3160 = vweird.f32 %v3153
    %vm3161 = vmor %vm3159, %vm3160
    %v3162 = vsel %vm3161, %v3153, %v3158
    %v3163 = vrsqrt.pop %v3139
    %v3164 = vmul.f32 %v3163, %v3139
    %v3165 = vmul.f32 %v3164, %v3163
    %v3166 = vmul.f32 0.5, %v3165
    %v3167 = vsub.f32 1.5, %v3166
    %v3168 = vmul.f32 %v3163, %v3167
    %vm3169 = vweird.f32 %v3139
    %vm3170 = vweird.f32 %v3163
    %vm3171 = vmor %vm3169, %vm3170
    %v3172 = vsel %vm3171, %v3163, %v3168
    %v3173 = vrsqrt.pop %v3140
    %v3174 = vmul.f32 %v3173, %v3140
    %v3175 = vmul.f32 %v3174, %v3173
    %v3176 = vmul.f32 0.5, %v3175
    %v3177 = vsub.f32 1.5, %v3176
    %v3178 = vmul.f32 %v3173, %v3177
    %vm3179 = vweird.f32 %v3140
    %vm3180 = vweird.f32 %v3173
    %vm3181 = vmor %vm3179, %vm3180
    %v3182 = vsel %vm3181, %v3173, %v3178
    %v3183 = vrsqrt.pop %v3141
    %v3184 = vmul.f32 %v3183, %v3141
    %v3185 = vmul.f32 %v3184, %v3183
    %v3186 = vmul.f32 0.5, %v3185
    %v3187 = vsub.f32 1.5, %v3186
    %v3188 = vmul.f32 %v3183, %v3187
    %vm3189 = vweird.f32 %v3141
    %vm3190 = vweird.f32 %v3183
    %vm3191 = vmor %vm3189, %vm3190
    %v3192 = vsel %vm3191, %v3183, %v3188
    %v3193 = vrsqrt.pop %v3142
    %v3194 = vmul.f32 %v3193, %v3142
    %v3195 = vmul.f32 %v3194, %v3193
    %v3196 = vmul.f32 0.5, %v3195
    %v3197 = vsub.f32 1.5, %v3196
    %v3198 = vmul.f32 %v3193, %v3197
    %vm3199 = vweird.f32 %v3142
    %vm3200 = vweird.f32 %v3193
    %vm3201 = vmor %vm3199, %vm3200
    %v3202 = vsel %vm3201, %v3193, %v3198
    %v3203 = vmul.f32 %v3101, %v3152
    %v3204 = vmul.f32 %v3102, %v3162
    %v3205 = vmul.f32 %v3103, %v3172
    %v3206 = vmul.f32 %v3104, %v3182
    %v3207 = vmul.f32 %v3105, %v3192
    %v3208 = vmul.f32 %v3106, %v3202
    %v3210 = vperm.slane %v3074, 0
    %v3212 = vmul.f32 %v3203, %v3210
    %v3213 = vmul.f32 %v3204, %v3210
    %v3214 = vmul.f32 %v3205, %v3210
    %v3215 = vmul.f32 %v3206, %v3210
    %v3216 = vmul.f32 %v3207, %v3210
    %v3217 = vmul.f32 %v3208, %v3210
    %v3219 = vperm.slane %v3076, 0
    %v3221 = vadd.f32 %v3212, %v3219
    %v3222 = vadd.f32 %v3213, %v3219
    %v3223 = vadd.f32 %v3214, %v3219
    %v3224 = vadd.f32 %v3215, %v3219
    %v3225 = vadd.f32 %v3216, %v3219
    %v3226 = vadd.f32 %v3217, %v3219
    %s3227 = scalar_lea.vmem %s4, 96
    %v3228 = vld [vmem:[%s3227] sm:$0xff]
    %v3229 = vld [vmem:[%s3227 + $0x8] sm:$0xff]
    %v3230 = vld [vmem:[%s3227 + $0x10] sm:$0xff]
    %v3231 = vld [vmem:[%s3227 + $0x18] sm:$0xff]
    %s3232 = scalar_lea.vmem %s5, 3
    %v3233 = vld [vmem:[%s3232] sm:$0x1]
    %v3235 = vperm.slane %v3233, 0
    %v3238 = vsel %vm195, %v3221, 0
    %v3241 = vsel %vm195, %v3222, 0
    %v3244 = vsel %vm195, %v3223, 0
    %v3247 = vsel %vm195, %v3224, 0
    %v3250 = vsel %vm195, %v3225, 0
    %v3253 = vsel %vm195, %v3226, 0
    %3255 = vmatpush.msra.mxu0 0.0
    %3256 = vmatpush.msra.mxu0 0.0
    %3257 = vmatpush.msra.mxu0 0.0
    %3258 = vmatpush.msra.mxu0 0.0
    %3259 = vmatpush.msra.mxu0 0.0
    %3260 = vmatpush.msra.mxu0 0.0
    %3261 = vmatpush.msra.mxu0 0.0
    %3262 = vmatpush.msra.mxu0 0.0
    %3263 = vmatpush.msra.mxu0 0.0
    %3264 = vmatpush.msra.mxu0 0.0
    %3265 = vmatpush.msra.mxu0 0.0
    %3266 = vmatpush.msra.mxu0 0.0
    %3267 = vmatpush.msra.mxu0 %v3231
    %3268 = vmatpush.msra.mxu0 %v3230
    %3269 = vmatpush.msra.mxu0 %v3229
    %3270 = vmatpush.msra.mxu0 %v3228
    %3271 = vmatmul.f32.gmra.mxu0 %v3238
    %v3272 = vpop.f32.mrf.mxu0
    %v3273 = vadd.f32 %v3235, %v3272
    %3274 = vmatmul.f32.gmra.mxu0 %v3241
    %v3275 = vpop.f32.mrf.mxu0
    %v3276 = vadd.f32 %v3235, %v3275
    %3277 = vmatmul.f32.gmra.mxu0 %v3244
    %v3278 = vpop.f32.mrf.mxu0
    %v3279 = vadd.f32 %v3235, %v3278
    %3280 = vmatmul.f32.gmra.mxu0 %v3247
    %v3281 = vpop.f32.mrf.mxu0
    %v3282 = vadd.f32 %v3235, %v3281
    %3283 = vmatmul.f32.gmra.mxu0 %v3250
    %v3284 = vpop.f32.mrf.mxu0
    %v3285 = vadd.f32 %v3235, %v3284
    %3286 = vmatmul.f32.gmra.mxu0 %v3253
    %v3287 = vpop.f32.mrf.mxu0
    %v3288 = vadd.f32 %v3235, %v3287
    %3289 = vdwg.mxu0
    %v3290 = vmul.f32 %v3273, %v3273
    %v3291 = vmul.f32 %v3276, %v3276
    %v3292 = vmul.f32 %v3279, %v3279
    %v3293 = vmul.f32 %v3282, %v3282
    %v3294 = vmul.f32 %v3285, %v3285
    %v3295 = vmul.f32 %v3288, %v3288
    %v3296 = vmul.f32 %v3273, %v3290
    %v3297 = vmul.f32 %v3276, %v3291
    %v3298 = vmul.f32 %v3279, %v3292
    %v3299 = vmul.f32 %v3282, %v3293
    %v3300 = vmul.f32 %v3285, %v3294
    %v3301 = vmul.f32 %v3288, %v3295
    %v3302 = vmul.f32 %v3296, 0.044715
    %v3303 = vmul.f32 %v3297, 0.044715
    %v3304 = vmul.f32 %v3298, 0.044715
    %v3305 = vmul.f32 %v3299, 0.044715
    %v3306 = vmul.f32 %v3300, 0.044715
    %v3307 = vmul.f32 %v3301, 0.044715
    %v3308 = vadd.f32 %v3273, %v3302
    %v3309 = vadd.f32 %v3276, %v3303
    %v3310 = vadd.f32 %v3279, %v3304
    %v3311 = vadd.f32 %v3282, %v3305
    %v3312 = vadd.f32 %v3285, %v3306
    %v3313 = vadd.f32 %v3288, %v3307
    %v3314 = vmul.f32 %v3308, 0.7978846
    %v3315 = vmul.f32 %v3309, 0.7978846
    %v3316 = vmul.f32 %v3310, 0.7978846
    %v3317 = vmul.f32 %v3311, 0.7978846
    %v3318 = vmul.f32 %v3312, 0.7978846
    %v3319 = vmul.f32 %v3313, 0.7978846
    %v3320 = vtanh.pop %v3314
    %v3321 = vtanh.pop %v3315
    %v3322 = vtanh.pop %v3316
    %v3323 = vtanh.pop %v3317
    %v3324 = vtanh.pop %v3318
    %v3325 = vtanh.pop %v3319
    %v3326 = vadd.f32 %v3320, 1.0
    %v3327 = vadd.f32 %v3321, 1.0
    %v3328 = vadd.f32 %v3322, 1.0
    %v3329 = vadd.f32 %v3323, 1.0
    %v3330 = vadd.f32 %v3324, 1.0
    %v3331 = vadd.f32 %v3325, 1.0
    %v3332 = vmul.f32 %v3326, 0.5
    %v3333 = vmul.f32 %v3327, 0.5
    %v3334 = vmul.f32 %v3328, 0.5
    %v3335 = vmul.f32 %v3329, 0.5
    %v3336 = vmul.f32 %v3330, 0.5
    %v3337 = vmul.f32 %v3331, 0.5
    %v3338 = vmul.f32 %v3273, %v3332
    %v3339 = vmul.f32 %v3276, %v3333
    %v3340 = vmul.f32 %v3279, %v3334
    %v3341 = vmul.f32 %v3282, %v3335
    %v3342 = vmul.f32 %v3285, %v3336
    %v3343 = vmul.f32 %v3288, %v3337
    %s3344 = scalar_lea.vmem %s7, 128
    %v3345 = vld [vmem:[%s3344] sm:$0xff]
    %v3346 = vld [vmem:[%s3344 + $0x8] sm:$0xff]
    %v3347 = vld [vmem:[%s3344 + $0x10] sm:$0xff]
    %v3348 = vld [vmem:[%s3344 + $0x18] sm:$0xff]
    %v3349 = vld [vmem:[%s3344 + $0x20] sm:$0xff]
    %v3350 = vld [vmem:[%s3344 + $0x28] sm:$0xff]
    %v3351 = vld [vmem:[%s3344 + $0x30] sm:$0xff]
    %v3352 = vld [vmem:[%s3344 + $0x38] sm:$0xff]
    %v3353 = vld [vmem:[%s3344 + $0x40] sm:$0xff]
    %v3354 = vld [vmem:[%s3344 + $0x48] sm:$0xff]
    %v3355 = vld [vmem:[%s3344 + $0x50] sm:$0xff]
    %v3356 = vld [vmem:[%s3344 + $0x58] sm:$0xff]
    %v3357 = vld [vmem:[%s3344 + $0x60] sm:$0xff]
    %v3358 = vld [vmem:[%s3344 + $0x68] sm:$0xff]
    %v3359 = vld [vmem:[%s3344 + $0x70] sm:$0xff]
    %v3360 = vld [vmem:[%s3344 + $0x78] sm:$0xff]
    %3361 = vmatpush.msra.mxu0 %v3360
    %3362 = vmatpush.msra.mxu0 %v3359
    %3363 = vmatpush.msra.mxu0 %v3358
    %3364 = vmatpush.msra.mxu0 %v3357
    %3365 = vmatpush.msra.mxu0 %v3356
    %3366 = vmatpush.msra.mxu0 %v3355
    %3367 = vmatpush.msra.mxu0 %v3354
    %3368 = vmatpush.msra.mxu0 %v3353
    %3369 = vmatpush.msra.mxu0 %v3352
    %3370 = vmatpush.msra.mxu0 %v3351
    %3371 = vmatpush.msra.mxu0 %v3350
    %3372 = vmatpush.msra.mxu0 %v3349
    %3373 = vmatpush.msra.mxu0 %v3348
    %3374 = vmatpush.msra.mxu0 %v3347
    %3375 = vmatpush.msra.mxu0 %v3346
    %3376 = vmatpush.msra.mxu0 %v3345
    %3377 = vmatmul.f32.gmra.mxu0 %v3338
    %v3378 = vpop.f32.mrf.mxu0
    %3379 = vmatmul.f32.gmra.mxu0 %v3339
    %v3380 = vpop.f32.mrf.mxu0
    %3381 = vmatmul.f32.gmra.mxu0 %v3340
    %v3382 = vpop.f32.mrf.mxu0
    %v3383 = vadd.f32 0.0, %v3382
    %3384 = vmatmul.f32.gmra.mxu0 %v3341
    %v3385 = vpop.f32.mrf.mxu0
    %3386 = vmatmul.f32.gmra.mxu0 %v3342
    %v3387 = vpop.f32.mrf.mxu0
    %3388 = vmatmul.f32.gmra.mxu0 %v3343
    %v3389 = vpop.f32.mrf.mxu0
    %v3390 = vadd.f32 0.0, %v3389
    %3391 = vdwg.mxu0
    %v3392 = vadd.f32 %v3069, %v3383
    %v3393 = vadd.f32 %v3072, %v3390
    %s3394 = scalar_lea.vmem %s8, 3
    %v3395 = vld [vmem:[%s3394] sm:$0x1]
    %v3397 = vperm.slane %v3395, 0
    %v3399 = vadd.f32 %v3392, %v3397
    %v3400 = vadd.f32 %v3393, %v3397
    %v3402 = vrot.slane %v3400, 7
    %vm3404 = vcmask 1040384
    %v3405 = vsel %vm3404, %v3399, %v3402
    %v3406 = vld [vmem:[%s9] sm:$0x1]
    %s3407 = scalar_lea.vmem %s9, 1
    %v3408 = vld [vmem:[%s3407] sm:$0x1]
    %vm3409 = vcmask 254976
    %v3410 = vsel %vm3409, %v3405, 0.0
    %3411 = vadd.xlane.f32.xlu0 %v3410
    %v3412 = vpop.xlane.xlu0 %3411
    %v3413 = vmul.f32 %v3412, %v220
    %v3414 = vsub.f32 %v3405, %v3413
    %v3415 = vmul.f32 %v3414, %v3414
    %v3416 = vsel %vm3409, %v3415, 0.0
    %3417 = vadd.xlane.f32.xlu0 %v3416
    %v3418 = vpop.xlane.xlu0 %3417
    %v3419 = vmul.f32 %v3418, %v220
    %v3420 = vadd.f32 %v3419, 1e-06
    %v3421 = vrsqrt.pop %v3420
    %v3422 = vmul.f32 %v3421, %v3420
    %v3423 = vmul.f32 %v3422, %v3421
    %v3424 = vmul.f32 0.5, %v3423
    %v3425 = vsub.f32 1.5, %v3424
    %v3426 = vmul.f32 %v3421, %v3425
    %vm3427 = vweird.f32 %v3420
    %vm3428 = vweird.f32 %v3421
    %vm3429 = vmor %vm3427, %vm3428
    %v3430 = vsel %vm3429, %v3421, %v3426
    %v3431 = vmul.f32 %v3414, %v3430
    %v3433 = vperm.slane %v3406, 0
    %v3435 = vmul.f32 %v3431, %v3433
    %v3437 = vperm.slane %v3408, 0
    %v3439 = vadd.f32 %v3435, %v3437
    %s3440 = scalar_lea.vmem %s9, 2
    %v3441 = vld [vmem:[%s3440] sm:$0x1]
    %s3442 = scalar_lea.vmem %s9, 3
    %v3443 = vld [vmem:[%s3442] sm:$0x1]
    %v3444 = vsel %vm3409, %v3439, 0.0
    %3445 = vadd.xlane.f32.xlu0 %v3444
    %v3446 = vpop.xlane.xlu0 %3445
    %v3447 = vmul.f32 %v3446, %v220
    %v3448 = vsub.f32 %v3439, %v3447
    %v3449 = vmul.f32 %v3448, %v3448
    %v3450 = vsel %vm3409, %v3449, 0.0
    %3451 = vadd.xlane.f32.xlu0 %v3450
    %v3452 = vpop.xlane.xlu0 %3451
    %v3453 = vmul.f32 %v3452, %v220
    %v3454 = vadd.f32 %v3453, 1e-05
    %v3455 = vrsqrt.pop %v3454
    %v3456 = vmul.f32 %v3455, %v3454
    %v3457 = vmul.f32 %v3456, %v3455
    %v3458 = vmul.f32 0.5, %v3457
    %v3459 = vsub.f32 1.5, %v3458
    %v3460 = vmul.f32 %v3455, %v3459
    %vm3461 = vweird.f32 %v3454
    %vm3462 = vweird.f32 %v3455
    %vm3463 = vmor %vm3461, %vm3462
    %v3464 = vsel %vm3463, %v3455, %v3460
    %v3465 = vmul.f32 %v3448, %v3464
    %v3467 = vperm.slane %v3441, 0
    %v3469 = vmul.f32 %v3465, %v3467
    %v3471 = vperm.slane %v3443, 0
    %v3473 = vadd.f32 %v3469, %v3471
    %v3474 = vld [vmem:[%s10] sm:$0xff]
    %v3475 = vld [vmem:[%s10 + $0x8] sm:$0xff]
    %v3476 = vld [vmem:[%s10 + $0x10] sm:$0xff]
    %v3477 = vld [vmem:[%s10 + $0x18] sm:$0xff]
    %v3478 = vld [vmem:[%s11] sm:$0x1]
    %v3480 = vperm.slane %v3478, 0
    %v3483 = vsel %vm195, %v3473, 0
    %3485 = vmatpush.msra.mxu0 0.0
    %3486 = vmatpush.msra.mxu0 0.0
    %3487 = vmatpush.msra.mxu0 0.0
    %3488 = vmatpush.msra.mxu0 0.0
    %3489 = vmatpush.msra.mxu0 0.0
    %3490 = vmatpush.msra.mxu0 0.0
    %3491 = vmatpush.msra.mxu0 0.0
    %3492 = vmatpush.msra.mxu0 0.0
    %3493 = vmatpush.msra.mxu0 0.0
    %3494 = vmatpush.msra.mxu0 0.0
    %3495 = vmatpush.msra.mxu0 0.0
    %3496 = vmatpush.msra.mxu0 0.0
    %3497 = vmatpush.msra.mxu0 %v3477
    %3498 = vmatpush.msra.mxu0 %v3476
    %3499 = vmatpush.msra.mxu0 %v3475
    %3500 = vmatpush.msra.mxu0 %v3474
    %3501 = vmatmul.f32.gmra.mxu0 %v3483
    %v3502 = vpop.f32.mrf.mxu0
    %v3503 = vadd.f32 %v3480, %v3502
    %3504 = vdwg.mxu0
    %3505 = vst.msk [vmem:[#allocation4] sm:$0x3] %vm3409, %v3439
    %vm3506 = vcmask 74752
    %3507 = vst.msk [vmem:[#allocation2] sm:$0x3] %vm3506, %v3503
    // Predicated region
    $region50: #{encoder_forward.1} parent=1 // pred_check
      _
    $region51: #{encoder_forward.1} parent=1 // pred_check_branch
      %3509 = sbr.rel (0) target = $region53
    $region52: #{encoder_forward.1} parent=1 // pred_region
      %3511 = vsyncadd [#allocation3], 0
      %s3513 = sshll.u32 [#allocation2], 4
      %s3514 = int_to_ptr.vmem [resolvable:$true] %s3513
      %s3515 = sshll.u32 %s12, 4
      %s3516 = int_to_ptr.hbm [resolvable:$true] %s3515
      %3518 = dma.vmem_to_hbm [thread:$0]  %s3514, 32, %s3516, [#allocation3]
    $region53: #{encoder_forward.1} parent=1 // pred_fallthru
      _
    // Predicated region
    $region54: #{encoder_forward.1} parent=1 // pred_check
      _
    $region55: #{encoder_forward.1} parent=1 // pred_check_branch
      %3520 = sbr.rel (0) target = $region57
    $region56: #{encoder_forward.1} parent=1 // pred_region
      %3522 = vsyncadd [#allocation5], 0
      %s3524 = sshll.u32 [#allocation4], 4
      %s3525 = int_to_ptr.vmem [resolvable:$true] %s3524
      %s3526 = sshll.u32 %s13, 4
      %s3527 = int_to_ptr.hbm [resolvable:$true] %s3526
      %3529 = dma.vmem_to_hbm [thread:$0]  %s3525, 32, %s3527, [#allocation5]
    $region57: #{encoder_forward.1} parent=1 // pred_fallthru
      _
    // Predicated region
    $region58: #{encoder_forward.1} parent=1 // pred_check
      _
    $region59: #{encoder_forward.1} parent=1 // pred_check_branch
      %3531 = sbr.rel (0) target = $region61
    $region60: #{encoder_forward.1} parent=1 // pred_region
      %3533 = dma.done [#allocation3], 32
    $region61: #{encoder_forward.1} parent=1 // pred_fallthru
      _
    // Predicated region
    $region62: #{encoder_forward.1} parent=1 // pred_check
      _
    $region63: #{encoder_forward.1} parent=1 // pred_check_branch
      %3535 = sbr.rel (0) target = $region65
    $region64: #{encoder_forward.1} parent=1 // pred_region
      %3537 = dma.done [#allocation5], 32
    $region65: #{encoder_forward.1} parent=1 // pred_fallthru
      _
    %3538 = vsyncpa [#allocation3], 1
    %3539 = vsyncpa [#allocation5], 1

</llo_original>
